<compile_context>
chip_gen: v5e
topology: v5e:2x2
jax: 0.10.0
libtpu: 0.0.40
codegen_flags: <defaults>
</compile_context>

<pallas_src>
import math

import jax
import jax.numpy as jnp
from jax.experimental import pallas as pl
from jax.experimental.pallas import tpu as pltpu

# ---- globals mirroring the original script (deterministic, synthetic) -------
NUM_NEURON = 256          # num_neuron (multiple of 128 -> lane-dense layout)
NUM_S1 = NUM_NEURON       # num_S1 (spike vector size == neuron count)
N_CONN = 4                # number of connection layers / rows of FR
SIMULATION_TIME = 20      # Simulation_time
I_MAX = 30.0              # I_max
FIRE_THRESHOLD = 0.5      # fire_threshold (global in original script; synthetic value)
TRICK_ID = 0

# IzhNodeMU parameters (param_* in the original script)
PARAM_THRESHOLD = 30.0
PARAM_A = 0.02
PARAM_B = 0.2
PARAM_C = -65.0
PARAM_D = 8.0
PARAM_MEM = -70.0
PARAM_U = -14.0
PARAM_DT = 0.5


def ebanet_kernel(c_ref, fired_ref, fr_ref, w_ref, inp_ref, wli_ref,
                  frn_ref, inpn_ref, fired_out_ref, wli_out_ref):
    spb, n = inp_ref.shape                      # samples-per-block, neurons
    n_conn = fr_ref.shape[1] // n

    # FR_W = sum_i FR[i] * connection[i].weight
    # one full-tile elementwise multiply, then aligned lane-chunk VPU adds
    # (no MXU contraction, no XLU axis reduce).
    prod = fr_ref[...] * w_ref[...]             # (spb, n_conn*n) * (1, n_conn*n)
    fr_w = prod[:, 0:n]
    for i in range(1, n_conn):
        fr_w = fr_w + prod[:, i * n:(i + 1) * n]

    sf = jnp.tanh(fr_w)                          # EUP
    sf = jnp.where(sf < 0.0, 0.0, sf)            # torch.where(sf < 0, 0, sf)

    x = inp_ref[...]                             # (spb, n)
    c = c_ref[...]                               # (spb, 1) per-sample C
    input_n = x + c * (sf - x)                   # == -C*(x - sf) + x
    input_n = jnp.where(input_n < 0.0, 0.0, input_n)
    inpn_ref[...] = input_n                      # store now; re-read after the loop

    input_r = jnp.round(input_n * I_MAX)         # torch.round (half-to-even)

    # ---- Izhikevich simulation: constants folded, loop fully unrolled -------
    drive = (PARAM_DT * 140.0) + PARAM_DT * input_r      # loop-invariant
    c_sq = 0.04 * PARAM_DT
    c_lin = 1.0 + 5.0 * PARAM_DT
    c_u = PARAM_DT
    u_keep = 1.0 - PARAM_DT * PARAM_A
    u_mem = PARAM_DT * PARAM_A * PARAM_B

    mem = jnp.full_like(x, PARAM_MEM)            # node[0].n_reset()
    u = jnp.full_like(x, PARAM_U)
    acc = jnp.zeros_like(x)
    for _ in range(SIMULATION_TIME):             # static trip count -> unrolled
        # mem += dt*(0.04*mem^2 + 5*mem + 140 - u + I)   (refactored: 3 mul + 3 add)
        mem = mem * (c_sq * mem + c_lin) + (drive - c_u * u)
        # u += dt*a*(b*mem - u)     (uses the updated mem, like IzhNode.integral)
        u = u_keep * u + u_mem * mem
        spiked = mem > PARAM_THRESHOLD
        acc = acc + jnp.where(spiked, 1.0, 0.0)
        u = u + jnp.where(spiked, PARAM_D, 0.0)  # select-based reset (no inf*0 NaN)
        mem = jnp.where(spiked, PARAM_C, mem)
    frn_ref[...] = acc * (1.0 / SIMULATION_TIME)

    # ---- lateral-inhibition bookkeeping (Fired / W_LatInh), per sample row --
    input_n = inpn_ref[...]                      # re-read (kept loop live-set small)
    s = jnp.where(input_n >= FIRE_THRESHOLD, 1.0, 0.0)       # S in {0, 1}
    fire_any = jnp.sum(s, axis=1, keepdims=True)              # (spb, 1) lane reduce (XLU)
    gate = jnp.where(fire_any > 0.0, 1.0, 0.0)                 # (spb, 1) in {0, 1}
    fired_new = fired_ref[...] + gate                          # Fired += 1 iff fired
    fired_out_ref[...] = fired_new

    w = wli_ref[...]
    # acos(S) with S in {0,1}:  acos(1)=0, acos(0)=pi/2  ->  (1-S)*pi/2 (exact)
    acos_s = (1.0 - s) * (math.pi / 2.0)
    exp_fired = jnp.exp(fired_new)                             # (spb, 1) EUP, then broadcast
    w_upd = jnp.tanh(w - 2.0 * acos_s * exp_fired - 1.0) + 1.0
    gate_full = jnp.broadcast_to(gate, w.shape)
    wli_out_ref[...] = jnp.where(gate_full > 0.5, w_upd, w)


def _round_up(x, m):
    return (x + m - 1) // m * m


def ebanet_forward(inp, fr, c, fired, w_latinh, weights, *, samples_per_block=32):
    """Pallas wrapper mirroring EBANet.forward(input, FR, C, Fired, W_LatInh).

    Single-sample (original signature):
        inp: (N,), fr: (N,) or (n_conn, N), c / fired: scalars, w_latinh: (N,)
    Batched (B independent samples in one pallas_call):
        inp: (B, N), fr: (B, N) or (B, n_conn, N), c / fired: (B,), w_latinh: (B, N)
    weights: (n_conn, N), shared across the batch.  N must be a multiple of 128.
    Returns (FR_n, input_n, Fired, W_LatInh) with matching leading dims."""
    inp = jnp.asarray(inp, jnp.float32)
    fr = jnp.asarray(fr, jnp.float32)
    weights = jnp.asarray(weights, jnp.float32)
    w_latinh = jnp.asarray(w_latinh, jnp.float32)
    c = jnp.asarray(c, jnp.float32)
    fired = jnp.asarray(fired, jnp.float32)

    single = inp.ndim == 1
    if single:
        if fr.ndim == 1:                 # len(FR.shape) == 1 branch: connection[0] only
            fr = fr[None, None, :]
            weights = weights[:1]
        else:
            fr = fr[None]
        inp = inp[None]
        w_latinh = w_latinh[None]
        c = c.reshape(1)
        fired = fired.reshape(1)
    else:
        if fr.ndim == 2:                 # per-sample 1-D FR: connection[0] only
            fr = fr[:, None, :]
            weights = weights[:1]
        c = c.reshape(-1)
        fired = fired.reshape(-1)

    B, n_conn, n = fr.shape
    assert inp.shape == (B, n) and w_latinh.shape == (B, n)
    assert weights.shape == (n_conn, n)
    assert c.shape == (B,) and fired.shape == (B,)
    assert n % 128 == 0, "neuron count must be a multiple of 128 (lane width)"

    # block of samples per grid step; 32 samples x (N/128)=2 lane-rows keeps the
    # Izhikevich live set (~40 vregs) well under 64 vregs -> no spills.
    spb = min(_round_up(samples_per_block, 8), _round_up(B, 8))
    bp = _round_up(B, spb)
    pad = bp - B
    if pad:
        inp = jnp.pad(inp, ((0, pad), (0, 0)))
        fr = jnp.pad(fr, ((0, pad), (0, 0), (0, 0)))
        w_latinh = jnp.pad(w_latinh, ((0, pad), (0, 0)))
        c = jnp.pad(c, (0, pad))
        fired = jnp.pad(fired, (0, pad))

    fr_flat = fr.reshape(bp, n_conn * n)          # full (8,128) tiles, lane-dense
    w_flat = weights.reshape(1, n_conn * n)       # shared, stays resident in VMEM
    c2 = c.reshape(bp, 1)
    fired2 = fired.reshape(bp, 1)

    grid = (bp // spb,)
    frn, inpn, fired_out, wli_out = pl.pallas_call(
        ebanet_kernel,
        out_shape=(jax.ShapeDtypeStruct((bp, n), jnp.float32),   # FR_n
                   jax.ShapeDtypeStruct((bp, n), jnp.float32),   # input_n
                   jax.ShapeDtypeStruct((bp, 1), jnp.float32),   # Fired
                   jax.ShapeDtypeStruct((bp, n), jnp.float32)),  # W_LatInh
        grid=grid,
        in_specs=[
            pl.BlockSpec((spb, 1), lambda b: (b, 0)),            # C (per sample)
            pl.BlockSpec((spb, 1), lambda b: (b, 0)),            # Fired (per sample)
            pl.BlockSpec((spb, n_conn * n), lambda b: (b, 0)),   # FR
            pl.BlockSpec((1, n_conn * n), lambda b: (0, 0)),     # weights: same block
                                                                 # every step -> resident
            pl.BlockSpec((spb, n), lambda b: (b, 0)),            # input
            pl.BlockSpec((spb, n), lambda b: (b, 0)),            # W_LatInh
        ],
        out_specs=(
            pl.BlockSpec((spb, n), lambda b: (b, 0)),
            pl.BlockSpec((spb, n), lambda b: (b, 0)),
            pl.BlockSpec((spb, 1), lambda b: (b, 0)),
            pl.BlockSpec((spb, n), lambda b: (b, 0)),
        ),
        compiler_params=pltpu.CompilerParams(
            dimension_semantics=("parallel",)),                  # 2 TCs on v7x
    )(c2, fired2, fr_flat, w_flat, inp, w_latinh)

    frn = frn[:B]
    inpn = inpn[:B]
    wli_out = wli_out[:B]
    fired_out = fired_out[:B, 0]
    if single:
        return frn[0], inpn[0], fired_out[0], wli_out[0]
    return frn, inpn, fired_out, wli_out


if __name__ == "__main__":
    key = jax.random.PRNGKey(0)
    k_fr, k_w, k_in, k_wl = jax.random.split(key, 4)

    B = 64  # small batch of independent samples (one pallas_call, grid over batch)

    # deterministic synthetic "connection weights" (one weight vector of length
    # NUM_NEURON per connection, as implied by the forward pass); shared across batch
    weights = 0.1 * jax.random.normal(k_w, (N_CONN, NUM_NEURON), dtype=jnp.float32)

    # example inputs (per sample)
    FR = jax.random.uniform(k_fr, (B, N_CONN, NUM_NEURON), dtype=jnp.float32)  # firing rates
    inp = jax.random.uniform(k_in, (B, NUM_NEURON), dtype=jnp.float32)         # current input
    W_LatInh = jax.random.uniform(k_wl, (B, NUM_NEURON), dtype=jnp.float32)    # lateral inh. weights
    C = jnp.full((B,), 0.3, dtype=jnp.float32)                                  # mixing coefficient
    Fired = jnp.zeros((B,), dtype=jnp.float32)                                  # fired counter

    # batched forward (one pallas_call, grid over the batch)
    FR_n, input_n, Fired_out, W_out = ebanet_forward(inp, FR, C, Fired, W_LatInh, weights)
    jax.block_until_ready((FR_n, input_n, Fired_out, W_out))

    assert FR_n.shape == (B, NUM_S1) and input_n.shape == (B, NUM_NEURON)
    assert W_out.shape == (B, NUM_NEURON) and Fired_out.shape == (B,)
    assert bool(jnp.all(jnp.isfinite(FR_n))) and bool(jnp.all(jnp.isfinite(input_n)))
    assert bool(jnp.all(jnp.isfinite(W_out))) and bool(jnp.all(jnp.isfinite(Fired_out)))

    # single-sample path (original forward signature) and consistency with batch row 0
    fr1, in1, f1, w1 = ebanet_forward(inp[0], FR[0], jnp.float32(0.3), jnp.float32(0.0),
                                      W_LatInh[0], weights)
    jax.block_until_ready((fr1, in1, f1, w1))
    assert fr1.shape == (NUM_S1,) and in1.shape == (NUM_NEURON,)
    assert w1.shape == (NUM_NEURON,) and f1.shape == ()
    assert bool(jnp.allclose(fr1, FR_n[0], atol=1e-5))
    assert bool(jnp.allclose(in1, input_n[0], atol=1e-5))
    assert bool(jnp.allclose(w1, W_out[0], atol=1e-5))
    assert bool(jnp.allclose(f1, Fired_out[0], atol=1e-5))

    print("KERNEL_OK")
</pallas_src>

<mosaic_0001>
module attributes {stable_mosaic.version = 11 : i64} {
  func.func @ebanet_kernel(%arg0: i32, %arg1: memref<32x1xf32, #tpu.memory_space<vmem>>, %arg2: memref<32x1xf32, #tpu.memory_space<vmem>>, %arg3: memref<32x1024xf32, #tpu.memory_space<vmem>>, %arg4: memref<1x1024xf32, #tpu.memory_space<vmem>>, %arg5: memref<32x256xf32, #tpu.memory_space<vmem>>, %arg6: memref<32x256xf32, #tpu.memory_space<vmem>>, %arg7: memref<32x256xf32, #tpu.memory_space<vmem>>, %arg8: memref<32x256xf32, #tpu.memory_space<vmem>>, %arg9: memref<32x1xf32, #tpu.memory_space<vmem>>, %arg10: memref<32x256xf32, #tpu.memory_space<vmem>>) attributes {dimension_semantics = [#tpu.dimension_semantics<parallel>], iteration_bounds = array<i64: 2>, scalar_prefetch = 0 : i64, scratch_operands = 0 : i64, tpu.core_type = #tpu.core_type<tc>, window_params = [{transform_indices = @transform_0, window_bounds = array<i64: 32, 1>}, {transform_indices = @transform_1, window_bounds = array<i64: 32, 1>}, {transform_indices = @transform_2, window_bounds = array<i64: 32, 1024>}, {pipeline_mode = #tpu.pipeline_mode<synchronous>, transform_indices = @transform_3, window_bounds = array<i64: 1, 1024>}, {transform_indices = @transform_4, window_bounds = array<i64: 32, 256>}, {transform_indices = @transform_5, window_bounds = array<i64: 32, 256>}, {transform_indices = @transform_6, window_bounds = array<i64: 32, 256>}, {transform_indices = @transform_7, window_bounds = array<i64: 32, 256>}, {transform_indices = @transform_8, window_bounds = array<i64: 32, 1>}, {transform_indices = @transform_9, window_bounds = array<i64: 32, 256>}]} {
    %c0 = arith.constant 0 : index
    %c0_0 = arith.constant 0 : index
    %0 = vector.load %arg3[%c0, %c0_0] : memref<32x1024xf32, #tpu.memory_space<vmem>>, vector<32x1024xf32>
    %c0_1 = arith.constant 0 : index
    %c0_2 = arith.constant 0 : index
    %1 = vector.load %arg4[%c0_1, %c0_2] : memref<1x1024xf32, #tpu.memory_space<vmem>>, vector<1x1024xf32>
    %2 = vector.broadcast %1 : vector<1x1024xf32> to vector<32x1024xf32>
    %3 = arith.mulf %0, %2 : vector<32x1024xf32>
    %4 = vector.extract_strided_slice %3 {offsets = [0, 0], sizes = [32, 256], strides = [1, 1]} : vector<32x1024xf32> to vector<32x256xf32>
    %5 = vector.extract_strided_slice %3 {offsets = [0, 256], sizes = [32, 256], strides = [1, 1]} : vector<32x1024xf32> to vector<32x256xf32>
    %6 = arith.addf %4, %5 : vector<32x256xf32>
    %7 = vector.extract_strided_slice %3 {offsets = [0, 512], sizes = [32, 256], strides = [1, 1]} : vector<32x1024xf32> to vector<32x256xf32>
    %8 = arith.addf %6, %7 : vector<32x256xf32>
    %9 = vector.extract_strided_slice %3 {offsets = [0, 768], sizes = [32, 256], strides = [1, 1]} : vector<32x1024xf32> to vector<32x256xf32>
    %10 = arith.addf %8, %9 : vector<32x256xf32>
    %11 = math.tanh %10 : vector<32x256xf32>
    %cst = arith.constant 0.000000e+00 : f32
    %12 = vector.broadcast %cst : f32 to vector<32x256xf32>
    %13 = arith.cmpf olt, %11, %12 : vector<32x256xf32>
    %cst_3 = arith.constant 0.000000e+00 : f32
    %14 = vector.broadcast %cst_3 : f32 to vector<32x256xf32>
    %15 = arith.select %13, %14, %11 : vector<32x256xi1>, vector<32x256xf32>
    %c0_4 = arith.constant 0 : index
    %c0_5 = arith.constant 0 : index
    %16 = vector.load %arg5[%c0_4, %c0_5] : memref<32x256xf32, #tpu.memory_space<vmem>>, vector<32x256xf32>
    %c0_6 = arith.constant 0 : index
    %c0_7 = arith.constant 0 : index
    %17 = vector.load %arg1[%c0_6, %c0_7] : memref<32x1xf32, #tpu.memory_space<vmem>>, vector<32x1xf32>
    %18 = arith.subf %15, %16 : vector<32x256xf32>
    %19 = vector.broadcast %17 : vector<32x1xf32> to vector<32x256xf32>
    %20 = arith.mulf %19, %18 : vector<32x256xf32>
    %21 = arith.addf %16, %20 : vector<32x256xf32>
    %cst_8 = arith.constant 0.000000e+00 : f32
    %22 = vector.broadcast %cst_8 : f32 to vector<32x256xf32>
    %23 = arith.cmpf olt, %21, %22 : vector<32x256xf32>
    %cst_9 = arith.constant 0.000000e+00 : f32
    %24 = vector.broadcast %cst_9 : f32 to vector<32x256xf32>
    %25 = arith.select %23, %24, %21 : vector<32x256xi1>, vector<32x256xf32>
    %c0_10 = arith.constant 0 : index
    %c0_11 = arith.constant 0 : index
    %26 = vector.load %arg8[%c0_10, %c0_11] : memref<32x256xf32, #tpu.memory_space<vmem>>, vector<32x256xf32>
    tpu.vector_store %arg8[%c0_10, %c0_11], %25 {strides = array<i32>} : memref<32x256xf32, #tpu.memory_space<vmem>>, vector<32x256xf32>,
    %cst_12 = arith.constant 3.000000e+01 : f32
    %27 = vector.broadcast %cst_12 : f32 to vector<32x256xf32>
    %28 = arith.mulf %25, %27 : vector<32x256xf32>
    %29 = math.roundeven %28 : vector<32x256xf32>
    %cst_13 = arith.constant 5.000000e-01 : f32
    %30 = vector.broadcast %cst_13 : f32 to vector<32x256xf32>
    %31 = arith.mulf %30, %29 : vector<32x256xf32>
    %cst_14 = arith.constant 7.000000e+01 : f32
    %32 = vector.broadcast %cst_14 : f32 to vector<32x256xf32>
    %33 = arith.addf %32, %31 : vector<32x256xf32>
    %cst_15 = arith.constant -7.000000e+01 : f32
    %34 = vector.broadcast %cst_15 : f32 to vector<32x256xf32>
    %cst_16 = arith.constant -1.400000e+01 : f32
    %35 = vector.broadcast %cst_16 : f32 to vector<32x256xf32>
    %cst_17 = arith.constant 0.000000e+00 : f32
    %36 = vector.broadcast %cst_17 : f32 to vector<32x256xf32>
    %cst_18 = arith.constant 2.000000e-02 : f32
    %37 = vector.broadcast %cst_18 : f32 to vector<32x256xf32>
    %38 = arith.mulf %37, %34 : vector<32x256xf32>
    %cst_19 = arith.constant 3.500000e+00 : f32
    %39 = vector.broadcast %cst_19 : f32 to vector<32x256xf32>
    %40 = arith.addf %38, %39 : vector<32x256xf32>
    %41 = arith.mulf %34, %40 : vector<32x256xf32>
    %cst_20 = arith.constant 5.000000e-01 : f32
    %42 = vector.broadcast %cst_20 : f32 to vector<32x256xf32>
    %43 = arith.mulf %42, %35 : vector<32x256xf32>
    %44 = arith.subf %33, %43 : vector<32x256xf32>
    %45 = arith.addf %41, %44 : vector<32x256xf32>
    %cst_21 = arith.constant 9.900000e-01 : f32
    %46 = vector.broadcast %cst_21 : f32 to vector<32x256xf32>
    %47 = arith.mulf %46, %35 : vector<32x256xf32>
    %cst_22 = arith.constant 2.000000e-03 : f32
    %48 = vector.broadcast %cst_22 : f32 to vector<32x256xf32>
    %49 = arith.mulf %48, %45 : vector<32x256xf32>
    %50 = arith.addf %47, %49 : vector<32x256xf32>
    %cst_23 = arith.constant 3.000000e+01 : f32
    %51 = vector.broadcast %cst_23 : f32 to vector<32x256xf32>
    %52 = arith.cmpf ogt, %45, %51 : vector<32x256xf32>
    %cst_24 = arith.constant 1.000000e+00 : f32
    %cst_25 = arith.constant 0.000000e+00 : f32
    %53 = vector.broadcast %cst_24 : f32 to vector<32x256xf32>
    %54 = vector.broadcast %cst_25 : f32 to vector<32x256xf32>
    %55 = arith.select %52, %53, %54 : vector<32x256xi1>, vector<32x256xf32>
    %56 = arith.addf %36, %55 : vector<32x256xf32>
    %cst_26 = arith.constant 8.000000e+00 : f32
    %cst_27 = arith.constant 0.000000e+00 : f32
    %57 = vector.broadcast %cst_26 : f32 to vector<32x256xf32>
    %58 = vector.broadcast %cst_27 : f32 to vector<32x256xf32>
    %59 = arith.select %52, %57, %58 : vector<32x256xi1>, vector<32x256xf32>
    %60 = arith.addf %50, %59 : vector<32x256xf32>
    %cst_28 = arith.constant -6.500000e+01 : f32
    %61 = vector.broadcast %cst_28 : f32 to vector<32x256xf32>
    %62 = arith.select %52, %61, %45 : vector<32x256xi1>, vector<32x256xf32>
    %cst_29 = arith.constant 2.000000e-02 : f32
    %63 = vector.broadcast %cst_29 : f32 to vector<32x256xf32>
    %64 = arith.mulf %63, %62 : vector<32x256xf32>
    %cst_30 = arith.constant 3.500000e+00 : f32
    %65 = vector.broadcast %cst_30 : f32 to vector<32x256xf32>
    %66 = arith.addf %64, %65 : vector<32x256xf32>
    %67 = arith.mulf %62, %66 : vector<32x256xf32>
    %cst_31 = arith.constant 5.000000e-01 : f32
    %68 = vector.broadcast %cst_31 : f32 to vector<32x256xf32>
    %69 = arith.mulf %68, %60 : vector<32x256xf32>
    %70 = arith.subf %33, %69 : vector<32x256xf32>
    %71 = arith.addf %67, %70 : vector<32x256xf32>
    %cst_32 = arith.constant 9.900000e-01 : f32
    %72 = vector.broadcast %cst_32 : f32 to vector<32x256xf32>
    %73 = arith.mulf %72, %60 : vector<32x256xf32>
    %cst_33 = arith.constant 2.000000e-03 : f32
    %74 = vector.broadcast %cst_33 : f32 to vector<32x256xf32>
    %75 = arith.mulf %74, %71 : vector<32x256xf32>
    %76 = arith.addf %73, %75 : vector<32x256xf32>
    %cst_34 = arith.constant 3.000000e+01 : f32
    %77 = vector.broadcast %cst_34 : f32 to vector<32x256xf32>
    %78 = arith.cmpf ogt, %71, %77 : vector<32x256xf32>
    %cst_35 = arith.constant 1.000000e+00 : f32
    %cst_36 = arith.constant 0.000000e+00 : f32
    %79 = vector.broadcast %cst_35 : f32 to vector<32x256xf32>
    %80 = vector.broadcast %cst_36 : f32 to vector<32x256xf32>
    %81 = arith.select %78, %79, %80 : vector<32x256xi1>, vector<32x256xf32>
    %82 = arith.addf %56, %81 : vector<32x256xf32>
    %cst_37 = arith.constant 8.000000e+00 : f32
    %cst_38 = arith.constant 0.000000e+00 : f32
    %83 = vector.broadcast %cst_37 : f32 to vector<32x256xf32>
    %84 = vector.broadcast %cst_38 : f32 to vector<32x256xf32>
    %85 = arith.select %78, %83, %84 : vector<32x256xi1>, vector<32x256xf32>
    %86 = arith.addf %76, %85 : vector<32x256xf32>
    %cst_39 = arith.constant -6.500000e+01 : f32
    %87 = vector.broadcast %cst_39 : f32 to vector<32x256xf32>
    %88 = arith.select %78, %87, %71 : vector<32x256xi1>, vector<32x256xf32>
    %cst_40 = arith.constant 2.000000e-02 : f32
    %89 = vector.broadcast %cst_40 : f32 to vector<32x256xf32>
    %90 = arith.mulf %89, %88 : vector<32x256xf32>
    %cst_41 = arith.constant 3.500000e+00 : f32
    %91 = vector.broadcast %cst_41 : f32 to vector<32x256xf32>
    %92 = arith.addf %90, %91 : vector<32x256xf32>
    %93 = arith.mulf %88, %92 : vector<32x256xf32>
    %cst_42 = arith.constant 5.000000e-01 : f32
    %94 = vector.broadcast %cst_42 : f32 to vector<32x256xf32>
    %95 = arith.mulf %94, %86 : vector<32x256xf32>
    %96 = arith.subf %33, %95 : vector<32x256xf32>
    %97 = arith.addf %93, %96 : vector<32x256xf32>
    %cst_43 = arith.constant 9.900000e-01 : f32
    %98 = vector.broadcast %cst_43 : f32 to vector<32x256xf32>
    %99 = arith.mulf %98, %86 : vector<32x256xf32>
    %cst_44 = arith.constant 2.000000e-03 : f32
    %100 = vector.broadcast %cst_44 : f32 to vector<32x256xf32>
    %101 = arith.mulf %100, %97 : vector<32x256xf32>
    %102 = arith.addf %99, %101 : vector<32x256xf32>
    %cst_45 = arith.constant 3.000000e+01 : f32
    %103 = vector.broadcast %cst_45 : f32 to vector<32x256xf32>
    %104 = arith.cmpf ogt, %97, %103 : vector<32x256xf32>
    %cst_46 = arith.constant 1.000000e+00 : f32
    %cst_47 = arith.constant 0.000000e+00 : f32
    %105 = vector.broadcast %cst_46 : f32 to vector<32x256xf32>
    %106 = vector.broadcast %cst_47 : f32 to vector<32x256xf32>
    %107 = arith.select %104, %105, %106 : vector<32x256xi1>, vector<32x256xf32>
    %108 = arith.addf %82, %107 : vector<32x256xf32>
    %cst_48 = arith.constant 8.000000e+00 : f32
    %cst_49 = arith.constant 0.000000e+00 : f32
    %109 = vector.broadcast %cst_48 : f32 to vector<32x256xf32>
    %110 = vector.broadcast %cst_49 : f32 to vector<32x256xf32>
    %111 = arith.select %104, %109, %110 : vector<32x256xi1>, vector<32x256xf32>
    %112 = arith.addf %102, %111 : vector<32x256xf32>
    %cst_50 = arith.constant -6.500000e+01 : f32
    %113 = vector.broadcast %cst_50 : f32 to vector<32x256xf32>
    %114 = arith.select %104, %113, %97 : vector<32x256xi1>, vector<32x256xf32>
    %cst_51 = arith.constant 2.000000e-02 : f32
    %115 = vector.broadcast %cst_51 : f32 to vector<32x256xf32>
    %116 = arith.mulf %115, %114 : vector<32x256xf32>
    %cst_52 = arith.constant 3.500000e+00 : f32
    %117 = vector.broadcast %cst_52 : f32 to vector<32x256xf32>
    %118 = arith.addf %116, %117 : vector<32x256xf32>
    %119 = arith.mulf %114, %118 : vector<32x256xf32>
    %cst_53 = arith.constant 5.000000e-01 : f32
    %120 = vector.broadcast %cst_53 : f32 to vector<32x256xf32>
    %121 = arith.mulf %120, %112 : vector<32x256xf32>
    %122 = arith.subf %33, %121 : vector<32x256xf32>
    %123 = arith.addf %119, %122 : vector<32x256xf32>
    %cst_54 = arith.constant 9.900000e-01 : f32
    %124 = vector.broadcast %cst_54 : f32 to vector<32x256xf32>
    %125 = arith.mulf %124, %112 : vector<32x256xf32>
    %cst_55 = arith.constant 2.000000e-03 : f32
    %126 = vector.broadcast %cst_55 : f32 to vector<32x256xf32>
    %127 = arith.mulf %126, %123 : vector<32x256xf32>
    %128 = arith.addf %125, %127 : vector<32x256xf32>
    %cst_56 = arith.constant 3.000000e+01 : f32
    %129 = vector.broadcast %cst_56 : f32 to vector<32x256xf32>
    %130 = arith.cmpf ogt, %123, %129 : vector<32x256xf32>
    %cst_57 = arith.constant 1.000000e+00 : f32
    %cst_58 = arith.constant 0.000000e+00 : f32
    %131 = vector.broadcast %cst_57 : f32 to vector<32x256xf32>
    %132 = vector.broadcast %cst_58 : f32 to vector<32x256xf32>
    %133 = arith.select %130, %131, %132 : vector<32x256xi1>, vector<32x256xf32>
    %134 = arith.addf %108, %133 : vector<32x256xf32>
    %cst_59 = arith.constant 8.000000e+00 : f32
    %cst_60 = arith.constant 0.000000e+00 : f32
    %135 = vector.broadcast %cst_59 : f32 to vector<32x256xf32>
    %136 = vector.broadcast %cst_60 : f32 to vector<32x256xf32>
    %137 = arith.select %130, %135, %136 : vector<32x256xi1>, vector<32x256xf32>
    %138 = arith.addf %128, %137 : vector<32x256xf32>
    %cst_61 = arith.constant -6.500000e+01 : f32
    %139 = vector.broadcast %cst_61 : f32 to vector<32x256xf32>
    %140 = arith.select %130, %139, %123 : vector<32x256xi1>, vector<32x256xf32>
    %cst_62 = arith.constant 2.000000e-02 : f32
    %141 = vector.broadcast %cst_62 : f32 to vector<32x256xf32>
    %142 = arith.mulf %141, %140 : vector<32x256xf32>
    %cst_63 = arith.constant 3.500000e+00 : f32
    %143 = vector.broadcast %cst_63 : f32 to vector<32x256xf32>
    %144 = arith.addf %142, %143 : vector<32x256xf32>
    %145 = arith.mulf %140, %144 : vector<32x256xf32>
    %cst_64 = arith.constant 5.000000e-01 : f32
    %146 = vector.broadcast %cst_64 : f32 to vector<32x256xf32>
    %147 = arith.mulf %146, %138 : vector<32x256xf32>
    %148 = arith.subf %33, %147 : vector<32x256xf32>
    %149 = arith.addf %145, %148 : vector<32x256xf32>
    %cst_65 = arith.constant 9.900000e-01 : f32
    %150 = vector.broadcast %cst_65 : f32 to vector<32x256xf32>
    %151 = arith.mulf %150, %138 : vector<32x256xf32>
    %cst_66 = arith.constant 2.000000e-03 : f32
    %152 = vector.broadcast %cst_66 : f32 to vector<32x256xf32>
    %153 = arith.mulf %152, %149 : vector<32x256xf32>
    %154 = arith.addf %151, %153 : vector<32x256xf32>
    %cst_67 = arith.constant 3.000000e+01 : f32
    %155 = vector.broadcast %cst_67 : f32 to vector<32x256xf32>
    %156 = arith.cmpf ogt, %149, %155 : vector<32x256xf32>
    %cst_68 = arith.constant 1.000000e+00 : f32
    %cst_69 = arith.constant 0.000000e+00 : f32
    %157 = vector.broadcast %cst_68 : f32 to vector<32x256xf32>
    %158 = vector.broadcast %cst_69 : f32 to vector<32x256xf32>
    %159 = arith.select %156, %157, %158 : vector<32x256xi1>, vector<32x256xf32>
    %160 = arith.addf %134, %159 : vector<32x256xf32>
    %cst_70 = arith.constant 8.000000e+00 : f32
    %cst_71 = arith.constant 0.000000e+00 : f32
    %161 = vector.broadcast %cst_70 : f32 to vector<32x256xf32>
    %162 = vector.broadcast %cst_71 : f32 to vector<32x256xf32>
    %163 = arith.select %156, %161, %162 : vector<32x256xi1>, vector<32x256xf32>
    %164 = arith.addf %154, %163 : vector<32x256xf32>
    %cst_72 = arith.constant -6.500000e+01 : f32
    %165 = vector.broadcast %cst_72 : f32 to vector<32x256xf32>
    %166 = arith.select %156, %165, %149 : vector<32x256xi1>, vector<32x256xf32>
    %cst_73 = arith.constant 2.000000e-02 : f32
    %167 = vector.broadcast %cst_73 : f32 to vector<32x256xf32>
    %168 = arith.mulf %167, %166 : vector<32x256xf32>
    %cst_74 = arith.constant 3.500000e+00 : f32
    %169 = vector.broadcast %cst_74 : f32 to vector<32x256xf32>
    %170 = arith.addf %168, %169 : vector<32x256xf32>
    %171 = arith.mulf %166, %170 : vector<32x256xf32>
    %cst_75 = arith.constant 5.000000e-01 : f32
    %172 = vector.broadcast %cst_75 : f32 to vector<32x256xf32>
    %173 = arith.mulf %172, %164 : vector<32x256xf32>
    %174 = arith.subf %33, %173 : vector<32x256xf32>
    %175 = arith.addf %171, %174 : vector<32x256xf32>
    %cst_76 = arith.constant 9.900000e-01 : f32
    %176 = vector.broadcast %cst_76 : f32 to vector<32x256xf32>
    %177 = arith.mulf %176, %164 : vector<32x256xf32>
    %cst_77 = arith.constant 2.000000e-03 : f32
    %178 = vector.broadcast %cst_77 : f32 to vector<32x256xf32>
    %179 = arith.mulf %178, %175 : vector<32x256xf32>
    %180 = arith.addf %177, %179 : vector<32x256xf32>
    %cst_78 = arith.constant 3.000000e+01 : f32
    %181 = vector.broadcast %cst_78 : f32 to vector<32x256xf32>
    %182 = arith.cmpf ogt, %175, %181 : vector<32x256xf32>
    %cst_79 = arith.constant 1.000000e+00 : f32
    %cst_80 = arith.constant 0.000000e+00 : f32
    %183 = vector.broadcast %cst_79 : f32 to vector<32x256xf32>
    %184 = vector.broadcast %cst_80 : f32 to vector<32x256xf32>
    %185 = arith.select %182, %183, %184 : vector<32x256xi1>, vector<32x256xf32>
    %186 = arith.addf %160, %185 : vector<32x256xf32>
    %cst_81 = arith.constant 8.000000e+00 : f32
    %cst_82 = arith.constant 0.000000e+00 : f32
    %187 = vector.broadcast %cst_81 : f32 to vector<32x256xf32>
    %188 = vector.broadcast %cst_82 : f32 to vector<32x256xf32>
    %189 = arith.select %182, %187, %188 : vector<32x256xi1>, vector<32x256xf32>
    %190 = arith.addf %180, %189 : vector<32x256xf32>
    %cst_83 = arith.constant -6.500000e+01 : f32
    %191 = vector.broadcast %cst_83 : f32 to vector<32x256xf32>
    %192 = arith.select %182, %191, %175 : vector<32x256xi1>, vector<32x256xf32>
    %cst_84 = arith.constant 2.000000e-02 : f32
    %193 = vector.broadcast %cst_84 : f32 to vector<32x256xf32>
    %194 = arith.mulf %193, %192 : vector<32x256xf32>
    %cst_85 = arith.constant 3.500000e+00 : f32
    %195 = vector.broadcast %cst_85 : f32 to vector<32x256xf32>
    %196 = arith.addf %194, %195 : vector<32x256xf32>
    %197 = arith.mulf %192, %196 : vector<32x256xf32>
    %cst_86 = arith.constant 5.000000e-01 : f32
    %198 = vector.broadcast %cst_86 : f32 to vector<32x256xf32>
    %199 = arith.mulf %198, %190 : vector<32x256xf32>
    %200 = arith.subf %33, %199 : vector<32x256xf32>
    %201 = arith.addf %197, %200 : vector<32x256xf32>
    %cst_87 = arith.constant 9.900000e-01 : f32
    %202 = vector.broadcast %cst_87 : f32 to vector<32x256xf32>
    %203 = arith.mulf %202, %190 : vector<32x256xf32>
    %cst_88 = arith.constant 2.000000e-03 : f32
    %204 = vector.broadcast %cst_88 : f32 to vector<32x256xf32>
    %205 = arith.mulf %204, %201 : vector<32x256xf32>
    %206 = arith.addf %203, %205 : vector<32x256xf32>
    %cst_89 = arith.constant 3.000000e+01 : f32
    %207 = vector.broadcast %cst_89 : f32 to vector<32x256xf32>
    %208 = arith.cmpf ogt, %201, %207 : vector<32x256xf32>
    %cst_90 = arith.constant 1.000000e+00 : f32
    %cst_91 = arith.constant 0.000000e+00 : f32
    %209 = vector.broadcast %cst_90 : f32 to vector<32x256xf32>
    %210 = vector.broadcast %cst_91 : f32 to vector<32x256xf32>
    %211 = arith.select %208, %209, %210 : vector<32x256xi1>, vector<32x256xf32>
    %212 = arith.addf %186, %211 : vector<32x256xf32>
    %cst_92 = arith.constant 8.000000e+00 : f32
    %cst_93 = arith.constant 0.000000e+00 : f32
    %213 = vector.broadcast %cst_92 : f32 to vector<32x256xf32>
    %214 = vector.broadcast %cst_93 : f32 to vector<32x256xf32>
    %215 = arith.select %208, %213, %214 : vector<32x256xi1>, vector<32x256xf32>
    %216 = arith.addf %206, %215 : vector<32x256xf32>
    %cst_94 = arith.constant -6.500000e+01 : f32
    %217 = vector.broadcast %cst_94 : f32 to vector<32x256xf32>
    %218 = arith.select %208, %217, %201 : vector<32x256xi1>, vector<32x256xf32>
    %cst_95 = arith.constant 2.000000e-02 : f32
    %219 = vector.broadcast %cst_95 : f32 to vector<32x256xf32>
    %220 = arith.mulf %219, %218 : vector<32x256xf32>
    %cst_96 = arith.constant 3.500000e+00 : f32
    %221 = vector.broadcast %cst_96 : f32 to vector<32x256xf32>
    %222 = arith.addf %220, %221 : vector<32x256xf32>
    %223 = arith.mulf %218, %222 : vector<32x256xf32>
    %cst_97 = arith.constant 5.000000e-01 : f32
    %224 = vector.broadcast %cst_97 : f32 to vector<32x256xf32>
    %225 = arith.mulf %224, %216 : vector<32x256xf32>
    %226 = arith.subf %33, %225 : vector<32x256xf32>
    %227 = arith.addf %223, %226 : vector<32x256xf32>
    %cst_98 = arith.constant 9.900000e-01 : f32
    %228 = vector.broadcast %cst_98 : f32 to vector<32x256xf32>
    %229 = arith.mulf %228, %216 : vector<32x256xf32>
    %cst_99 = arith.constant 2.000000e-03 : f32
    %230 = vector.broadcast %cst_99 : f32 to vector<32x256xf32>
    %231 = arith.mulf %230, %227 : vector<32x256xf32>
    %232 = arith.addf %229, %231 : vector<32x256xf32>
    %cst_100 = arith.constant 3.000000e+01 : f32
    %233 = vector.broadcast %cst_100 : f32 to vector<32x256xf32>
    %234 = arith.cmpf ogt, %227, %233 : vector<32x256xf32>
    %cst_101 = arith.constant 1.000000e+00 : f32
    %cst_102 = arith.constant 0.000000e+00 : f32
    %235 = vector.broadcast %cst_101 : f32 to vector<32x256xf32>
    %236 = vector.broadcast %cst_102 : f32 to vector<32x256xf32>
    %237 = arith.select %234, %235, %236 : vector<32x256xi1>, vector<32x256xf32>
    %238 = arith.addf %212, %237 : vector<32x256xf32>
    %cst_103 = arith.constant 8.000000e+00 : f32
    %cst_104 = arith.constant 0.000000e+00 : f32
    %239 = vector.broadcast %cst_103 : f32 to vector<32x256xf32>
    %240 = vector.broadcast %cst_104 : f32 to vector<32x256xf32>
    %241 = arith.select %234, %239, %240 : vector<32x256xi1>, vector<32x256xf32>
    %242 = arith.addf %232, %241 : vector<32x256xf32>
    %cst_105 = arith.constant -6.500000e+01 : f32
    %243 = vector.broadcast %cst_105 : f32 to vector<32x256xf32>
    %244 = arith.select %234, %243, %227 : vector<32x256xi1>, vector<32x256xf32>
    %cst_106 = arith.constant 2.000000e-02 : f32
    %245 = vector.broadcast %cst_106 : f32 to vector<32x256xf32>
    %246 = arith.mulf %245, %244 : vector<32x256xf32>
    %cst_107 = arith.constant 3.500000e+00 : f32
    %247 = vector.broadcast %cst_107 : f32 to vector<32x256xf32>
    %248 = arith.addf %246, %247 : vector<32x256xf32>
    %249 = arith.mulf %244, %248 : vector<32x256xf32>
    %cst_108 = arith.constant 5.000000e-01 : f32
    %250 = vector.broadcast %cst_108 : f32 to vector<32x256xf32>
    %251 = arith.mulf %250, %242 : vector<32x256xf32>
    %252 = arith.subf %33, %251 : vector<32x256xf32>
    %253 = arith.addf %249, %252 : vector<32x256xf32>
    %cst_109 = arith.constant 9.900000e-01 : f32
    %254 = vector.broadcast %cst_109 : f32 to vector<32x256xf32>
    %255 = arith.mulf %254, %242 : vector<32x256xf32>
    %cst_110 = arith.constant 2.000000e-03 : f32
    %256 = vector.broadcast %cst_110 : f32 to vector<32x256xf32>
    %257 = arith.mulf %256, %253 : vector<32x256xf32>
    %258 = arith.addf %255, %257 : vector<32x256xf32>
    %cst_111 = arith.constant 3.000000e+01 : f32
    %259 = vector.broadcast %cst_111 : f32 to vector<32x256xf32>
    %260 = arith.cmpf ogt, %253, %259 : vector<32x256xf32>
    %cst_112 = arith.constant 1.000000e+00 : f32
    %cst_113 = arith.constant 0.000000e+00 : f32
    %261 = vector.broadcast %cst_112 : f32 to vector<32x256xf32>
    %262 = vector.broadcast %cst_113 : f32 to vector<32x256xf32>
    %263 = arith.select %260, %261, %262 : vector<32x256xi1>, vector<32x256xf32>
    %264 = arith.addf %238, %263 : vector<32x256xf32>
    %cst_114 = arith.constant 8.000000e+00 : f32
    %cst_115 = arith.constant 0.000000e+00 : f32
    %265 = vector.broadcast %cst_114 : f32 to vector<32x256xf32>
    %266 = vector.broadcast %cst_115 : f32 to vector<32x256xf32>
    %267 = arith.select %260, %265, %266 : vector<32x256xi1>, vector<32x256xf32>
    %268 = arith.addf %258, %267 : vector<32x256xf32>
    %cst_116 = arith.constant -6.500000e+01 : f32
    %269 = vector.broadcast %cst_116 : f32 to vector<32x256xf32>
    %270 = arith.select %260, %269, %253 : vector<32x256xi1>, vector<32x256xf32>
    %cst_117 = arith.constant 2.000000e-02 : f32
    %271 = vector.broadcast %cst_117 : f32 to vector<32x256xf32>
    %272 = arith.mulf %271, %270 : vector<32x256xf32>
    %cst_118 = arith.constant 3.500000e+00 : f32
    %273 = vector.broadcast %cst_118 : f32 to vector<32x256xf32>
    %274 = arith.addf %272, %273 : vector<32x256xf32>
    %275 = arith.mulf %270, %274 : vector<32x256xf32>
    %cst_119 = arith.constant 5.000000e-01 : f32
    %276 = vector.broadcast %cst_119 : f32 to vector<32x256xf32>
    %277 = arith.mulf %276, %268 : vector<32x256xf32>
    %278 = arith.subf %33, %277 : vector<32x256xf32>
    %279 = arith.addf %275, %278 : vector<32x256xf32>
    %cst_120 = arith.constant 9.900000e-01 : f32
    %280 = vector.broadcast %cst_120 : f32 to vector<32x256xf32>
    %281 = arith.mulf %280, %268 : vector<32x256xf32>
    %cst_121 = arith.constant 2.000000e-03 : f32
    %282 = vector.broadcast %cst_121 : f32 to vector<32x256xf32>
    %283 = arith.mulf %282, %279 : vector<32x256xf32>
    %284 = arith.addf %281, %283 : vector<32x256xf32>
    %cst_122 = arith.constant 3.000000e+01 : f32
    %285 = vector.broadcast %cst_122 : f32 to vector<32x256xf32>
    %286 = arith.cmpf ogt, %279, %285 : vector<32x256xf32>
    %cst_123 = arith.constant 1.000000e+00 : f32
    %cst_124 = arith.constant 0.000000e+00 : f32
    %287 = vector.broadcast %cst_123 : f32 to vector<32x256xf32>
    %288 = vector.broadcast %cst_124 : f32 to vector<32x256xf32>
    %289 = arith.select %286, %287, %288 : vector<32x256xi1>, vector<32x256xf32>
    %290 = arith.addf %264, %289 : vector<32x256xf32>
    %cst_125 = arith.constant 8.000000e+00 : f32
    %cst_126 = arith.constant 0.000000e+00 : f32
    %291 = vector.broadcast %cst_125 : f32 to vector<32x256xf32>
    %292 = vector.broadcast %cst_126 : f32 to vector<32x256xf32>
    %293 = arith.select %286, %291, %292 : vector<32x256xi1>, vector<32x256xf32>
    %294 = arith.addf %284, %293 : vector<32x256xf32>
    %cst_127 = arith.constant -6.500000e+01 : f32
    %295 = vector.broadcast %cst_127 : f32 to vector<32x256xf32>
    %296 = arith.select %286, %295, %279 : vector<32x256xi1>, vector<32x256xf32>
    %cst_128 = arith.constant 2.000000e-02 : f32
    %297 = vector.broadcast %cst_128 : f32 to vector<32x256xf32>
    %298 = arith.mulf %297, %296 : vector<32x256xf32>
    %cst_129 = arith.constant 3.500000e+00 : f32
    %299 = vector.broadcast %cst_129 : f32 to vector<32x256xf32>
    %300 = arith.addf %298, %299 : vector<32x256xf32>
    %301 = arith.mulf %296, %300 : vector<32x256xf32>
    %cst_130 = arith.constant 5.000000e-01 : f32
    %302 = vector.broadcast %cst_130 : f32 to vector<32x256xf32>
    %303 = arith.mulf %302, %294 : vector<32x256xf32>
    %304 = arith.subf %33, %303 : vector<32x256xf32>
    %305 = arith.addf %301, %304 : vector<32x256xf32>
    %cst_131 = arith.constant 9.900000e-01 : f32
    %306 = vector.broadcast %cst_131 : f32 to vector<32x256xf32>
    %307 = arith.mulf %306, %294 : vector<32x256xf32>
    %cst_132 = arith.constant 2.000000e-03 : f32
    %308 = vector.broadcast %cst_132 : f32 to vector<32x256xf32>
    %309 = arith.mulf %308, %305 : vector<32x256xf32>
    %310 = arith.addf %307, %309 : vector<32x256xf32>
    %cst_133 = arith.constant 3.000000e+01 : f32
    %311 = vector.broadcast %cst_133 : f32 to vector<32x256xf32>
    %312 = arith.cmpf ogt, %305, %311 : vector<32x256xf32>
    %cst_134 = arith.constant 1.000000e+00 : f32
    %cst_135 = arith.constant 0.000000e+00 : f32
    %313 = vector.broadcast %cst_134 : f32 to vector<32x256xf32>
    %314 = vector.broadcast %cst_135 : f32 to vector<32x256xf32>
    %315 = arith.select %312, %313, %314 : vector<32x256xi1>, vector<32x256xf32>
    %316 = arith.addf %290, %315 : vector<32x256xf32>
    %cst_136 = arith.constant 8.000000e+00 : f32
    %cst_137 = arith.constant 0.000000e+00 : f32
    %317 = vector.broadcast %cst_136 : f32 to vector<32x256xf32>
    %318 = vector.broadcast %cst_137 : f32 to vector<32x256xf32>
    %319 = arith.select %312, %317, %318 : vector<32x256xi1>, vector<32x256xf32>
    %320 = arith.addf %310, %319 : vector<32x256xf32>
    %cst_138 = arith.constant -6.500000e+01 : f32
    %321 = vector.broadcast %cst_138 : f32 to vector<32x256xf32>
    %322 = arith.select %312, %321, %305 : vector<32x256xi1>, vector<32x256xf32>
    %cst_139 = arith.constant 2.000000e-02 : f32
    %323 = vector.broadcast %cst_139 : f32 to vector<32x256xf32>
    %324 = arith.mulf %323, %322 : vector<32x256xf32>
    %cst_140 = arith.constant 3.500000e+00 : f32
    %325 = vector.broadcast %cst_140 : f32 to vector<32x256xf32>
    %326 = arith.addf %324, %325 : vector<32x256xf32>
    %327 = arith.mulf %322, %326 : vector<32x256xf32>
    %cst_141 = arith.constant 5.000000e-01 : f32
    %328 = vector.broadcast %cst_141 : f32 to vector<32x256xf32>
    %329 = arith.mulf %328, %320 : vector<32x256xf32>
    %330 = arith.subf %33, %329 : vector<32x256xf32>
    %331 = arith.addf %327, %330 : vector<32x256xf32>
    %cst_142 = arith.constant 9.900000e-01 : f32
    %332 = vector.broadcast %cst_142 : f32 to vector<32x256xf32>
    %333 = arith.mulf %332, %320 : vector<32x256xf32>
    %cst_143 = arith.constant 2.000000e-03 : f32
    %334 = vector.broadcast %cst_143 : f32 to vector<32x256xf32>
    %335 = arith.mulf %334, %331 : vector<32x256xf32>
    %336 = arith.addf %333, %335 : vector<32x256xf32>
    %cst_144 = arith.constant 3.000000e+01 : f32
    %337 = vector.broadcast %cst_144 : f32 to vector<32x256xf32>
    %338 = arith.cmpf ogt, %331, %337 : vector<32x256xf32>
    %cst_145 = arith.constant 1.000000e+00 : f32
    %cst_146 = arith.constant 0.000000e+00 : f32
    %339 = vector.broadcast %cst_145 : f32 to vector<32x256xf32>
    %340 = vector.broadcast %cst_146 : f32 to vector<32x256xf32>
    %341 = arith.select %338, %339, %340 : vector<32x256xi1>, vector<32x256xf32>
    %342 = arith.addf %316, %341 : vector<32x256xf32>
    %cst_147 = arith.constant 8.000000e+00 : f32
    %cst_148 = arith.constant 0.000000e+00 : f32
    %343 = vector.broadcast %cst_147 : f32 to vector<32x256xf32>
    %344 = vector.broadcast %cst_148 : f32 to vector<32x256xf32>
    %345 = arith.select %338, %343, %344 : vector<32x256xi1>, vector<32x256xf32>
    %346 = arith.addf %336, %345 : vector<32x256xf32>
    %cst_149 = arith.constant -6.500000e+01 : f32
    %347 = vector.broadcast %cst_149 : f32 to vector<32x256xf32>
    %348 = arith.select %338, %347, %331 : vector<32x256xi1>, vector<32x256xf32>
    %cst_150 = arith.constant 2.000000e-02 : f32
    %349 = vector.broadcast %cst_150 : f32 to vector<32x256xf32>
    %350 = arith.mulf %349, %348 : vector<32x256xf32>
    %cst_151 = arith.constant 3.500000e+00 : f32
    %351 = vector.broadcast %cst_151 : f32 to vector<32x256xf32>
    %352 = arith.addf %350, %351 : vector<32x256xf32>
    %353 = arith.mulf %348, %352 : vector<32x256xf32>
    %cst_152 = arith.constant 5.000000e-01 : f32
    %354 = vector.broadcast %cst_152 : f32 to vector<32x256xf32>
    %355 = arith.mulf %354, %346 : vector<32x256xf32>
    %356 = arith.subf %33, %355 : vector<32x256xf32>
    %357 = arith.addf %353, %356 : vector<32x256xf32>
    %cst_153 = arith.constant 9.900000e-01 : f32
    %358 = vector.broadcast %cst_153 : f32 to vector<32x256xf32>
    %359 = arith.mulf %358, %346 : vector<32x256xf32>
    %cst_154 = arith.constant 2.000000e-03 : f32
    %360 = vector.broadcast %cst_154 : f32 to vector<32x256xf32>
    %361 = arith.mulf %360, %357 : vector<32x256xf32>
    %362 = arith.addf %359, %361 : vector<32x256xf32>
    %cst_155 = arith.constant 3.000000e+01 : f32
    %363 = vector.broadcast %cst_155 : f32 to vector<32x256xf32>
    %364 = arith.cmpf ogt, %357, %363 : vector<32x256xf32>
    %cst_156 = arith.constant 1.000000e+00 : f32
    %cst_157 = arith.constant 0.000000e+00 : f32
    %365 = vector.broadcast %cst_156 : f32 to vector<32x256xf32>
    %366 = vector.broadcast %cst_157 : f32 to vector<32x256xf32>
    %367 = arith.select %364, %365, %366 : vector<32x256xi1>, vector<32x256xf32>
    %368 = arith.addf %342, %367 : vector<32x256xf32>
    %cst_158 = arith.constant 8.000000e+00 : f32
    %cst_159 = arith.constant 0.000000e+00 : f32
    %369 = vector.broadcast %cst_158 : f32 to vector<32x256xf32>
    %370 = vector.broadcast %cst_159 : f32 to vector<32x256xf32>
    %371 = arith.select %364, %369, %370 : vector<32x256xi1>, vector<32x256xf32>
    %372 = arith.addf %362, %371 : vector<32x256xf32>
    %cst_160 = arith.constant -6.500000e+01 : f32
    %373 = vector.broadcast %cst_160 : f32 to vector<32x256xf32>
    %374 = arith.select %364, %373, %357 : vector<32x256xi1>, vector<32x256xf32>
    %cst_161 = arith.constant 2.000000e-02 : f32
    %375 = vector.broadcast %cst_161 : f32 to vector<32x256xf32>
    %376 = arith.mulf %375, %374 : vector<32x256xf32>
    %cst_162 = arith.constant 3.500000e+00 : f32
    %377 = vector.broadcast %cst_162 : f32 to vector<32x256xf32>
    %378 = arith.addf %376, %377 : vector<32x256xf32>
    %379 = arith.mulf %374, %378 : vector<32x256xf32>
    %cst_163 = arith.constant 5.000000e-01 : f32
    %380 = vector.broadcast %cst_163 : f32 to vector<32x256xf32>
    %381 = arith.mulf %380, %372 : vector<32x256xf32>
    %382 = arith.subf %33, %381 : vector<32x256xf32>
    %383 = arith.addf %379, %382 : vector<32x256xf32>
    %cst_164 = arith.constant 9.900000e-01 : f32
    %384 = vector.broadcast %cst_164 : f32 to vector<32x256xf32>
    %385 = arith.mulf %384, %372 : vector<32x256xf32>
    %cst_165 = arith.constant 2.000000e-03 : f32
    %386 = vector.broadcast %cst_165 : f32 to vector<32x256xf32>
    %387 = arith.mulf %386, %383 : vector<32x256xf32>
    %388 = arith.addf %385, %387 : vector<32x256xf32>
    %cst_166 = arith.constant 3.000000e+01 : f32
    %389 = vector.broadcast %cst_166 : f32 to vector<32x256xf32>
    %390 = arith.cmpf ogt, %383, %389 : vector<32x256xf32>
    %cst_167 = arith.constant 1.000000e+00 : f32
    %cst_168 = arith.constant 0.000000e+00 : f32
    %391 = vector.broadcast %cst_167 : f32 to vector<32x256xf32>
    %392 = vector.broadcast %cst_168 : f32 to vector<32x256xf32>
    %393 = arith.select %390, %391, %392 : vector<32x256xi1>, vector<32x256xf32>
    %394 = arith.addf %368, %393 : vector<32x256xf32>
    %cst_169 = arith.constant 8.000000e+00 : f32
    %cst_170 = arith.constant 0.000000e+00 : f32
    %395 = vector.broadcast %cst_169 : f32 to vector<32x256xf32>
    %396 = vector.broadcast %cst_170 : f32 to vector<32x256xf32>
    %397 = arith.select %390, %395, %396 : vector<32x256xi1>, vector<32x256xf32>
    %398 = arith.addf %388, %397 : vector<32x256xf32>
    %cst_171 = arith.constant -6.500000e+01 : f32
    %399 = vector.broadcast %cst_171 : f32 to vector<32x256xf32>
    %400 = arith.select %390, %399, %383 : vector<32x256xi1>, vector<32x256xf32>
    %cst_172 = arith.constant 2.000000e-02 : f32
    %401 = vector.broadcast %cst_172 : f32 to vector<32x256xf32>
    %402 = arith.mulf %401, %400 : vector<32x256xf32>
    %cst_173 = arith.constant 3.500000e+00 : f32
    %403 = vector.broadcast %cst_173 : f32 to vector<32x256xf32>
    %404 = arith.addf %402, %403 : vector<32x256xf32>
    %405 = arith.mulf %400, %404 : vector<32x256xf32>
    %cst_174 = arith.constant 5.000000e-01 : f32
    %406 = vector.broadcast %cst_174 : f32 to vector<32x256xf32>
    %407 = arith.mulf %406, %398 : vector<32x256xf32>
    %408 = arith.subf %33, %407 : vector<32x256xf32>
    %409 = arith.addf %405, %408 : vector<32x256xf32>
    %cst_175 = arith.constant 9.900000e-01 : f32
    %410 = vector.broadcast %cst_175 : f32 to vector<32x256xf32>
    %411 = arith.mulf %410, %398 : vector<32x256xf32>
    %cst_176 = arith.constant 2.000000e-03 : f32
    %412 = vector.broadcast %cst_176 : f32 to vector<32x256xf32>
    %413 = arith.mulf %412, %409 : vector<32x256xf32>
    %414 = arith.addf %411, %413 : vector<32x256xf32>
    %cst_177 = arith.constant 3.000000e+01 : f32
    %415 = vector.broadcast %cst_177 : f32 to vector<32x256xf32>
    %416 = arith.cmpf ogt, %409, %415 : vector<32x256xf32>
    %cst_178 = arith.constant 1.000000e+00 : f32
    %cst_179 = arith.constant 0.000000e+00 : f32
    %417 = vector.broadcast %cst_178 : f32 to vector<32x256xf32>
    %418 = vector.broadcast %cst_179 : f32 to vector<32x256xf32>
    %419 = arith.select %416, %417, %418 : vector<32x256xi1>, vector<32x256xf32>
    %420 = arith.addf %394, %419 : vector<32x256xf32>
    %cst_180 = arith.constant 8.000000e+00 : f32
    %cst_181 = arith.constant 0.000000e+00 : f32
    %421 = vector.broadcast %cst_180 : f32 to vector<32x256xf32>
    %422 = vector.broadcast %cst_181 : f32 to vector<32x256xf32>
    %423 = arith.select %416, %421, %422 : vector<32x256xi1>, vector<32x256xf32>
    %424 = arith.addf %414, %423 : vector<32x256xf32>
    %cst_182 = arith.constant -6.500000e+01 : f32
    %425 = vector.broadcast %cst_182 : f32 to vector<32x256xf32>
    %426 = arith.select %416, %425, %409 : vector<32x256xi1>, vector<32x256xf32>
    %cst_183 = arith.constant 2.000000e-02 : f32
    %427 = vector.broadcast %cst_183 : f32 to vector<32x256xf32>
    %428 = arith.mulf %427, %426 : vector<32x256xf32>
    %cst_184 = arith.constant 3.500000e+00 : f32
    %429 = vector.broadcast %cst_184 : f32 to vector<32x256xf32>
    %430 = arith.addf %428, %429 : vector<32x256xf32>
    %431 = arith.mulf %426, %430 : vector<32x256xf32>
    %cst_185 = arith.constant 5.000000e-01 : f32
    %432 = vector.broadcast %cst_185 : f32 to vector<32x256xf32>
    %433 = arith.mulf %432, %424 : vector<32x256xf32>
    %434 = arith.subf %33, %433 : vector<32x256xf32>
    %435 = arith.addf %431, %434 : vector<32x256xf32>
    %cst_186 = arith.constant 9.900000e-01 : f32
    %436 = vector.broadcast %cst_186 : f32 to vector<32x256xf32>
    %437 = arith.mulf %436, %424 : vector<32x256xf32>
    %cst_187 = arith.constant 2.000000e-03 : f32
    %438 = vector.broadcast %cst_187 : f32 to vector<32x256xf32>
    %439 = arith.mulf %438, %435 : vector<32x256xf32>
    %440 = arith.addf %437, %439 : vector<32x256xf32>
    %cst_188 = arith.constant 3.000000e+01 : f32
    %441 = vector.broadcast %cst_188 : f32 to vector<32x256xf32>
    %442 = arith.cmpf ogt, %435, %441 : vector<32x256xf32>
    %cst_189 = arith.constant 1.000000e+00 : f32
    %cst_190 = arith.constant 0.000000e+00 : f32
    %443 = vector.broadcast %cst_189 : f32 to vector<32x256xf32>
    %444 = vector.broadcast %cst_190 : f32 to vector<32x256xf32>
    %445 = arith.select %442, %443, %444 : vector<32x256xi1>, vector<32x256xf32>
    %446 = arith.addf %420, %445 : vector<32x256xf32>
    %cst_191 = arith.constant 8.000000e+00 : f32
    %cst_192 = arith.constant 0.000000e+00 : f32
    %447 = vector.broadcast %cst_191 : f32 to vector<32x256xf32>
    %448 = vector.broadcast %cst_192 : f32 to vector<32x256xf32>
    %449 = arith.select %442, %447, %448 : vector<32x256xi1>, vector<32x256xf32>
    %450 = arith.addf %440, %449 : vector<32x256xf32>
    %cst_193 = arith.constant -6.500000e+01 : f32
    %451 = vector.broadcast %cst_193 : f32 to vector<32x256xf32>
    %452 = arith.select %442, %451, %435 : vector<32x256xi1>, vector<32x256xf32>
    %cst_194 = arith.constant 2.000000e-02 : f32
    %453 = vector.broadcast %cst_194 : f32 to vector<32x256xf32>
    %454 = arith.mulf %453, %452 : vector<32x256xf32>
    %cst_195 = arith.constant 3.500000e+00 : f32
    %455 = vector.broadcast %cst_195 : f32 to vector<32x256xf32>
    %456 = arith.addf %454, %455 : vector<32x256xf32>
    %457 = arith.mulf %452, %456 : vector<32x256xf32>
    %cst_196 = arith.constant 5.000000e-01 : f32
    %458 = vector.broadcast %cst_196 : f32 to vector<32x256xf32>
    %459 = arith.mulf %458, %450 : vector<32x256xf32>
    %460 = arith.subf %33, %459 : vector<32x256xf32>
    %461 = arith.addf %457, %460 : vector<32x256xf32>
    %cst_197 = arith.constant 9.900000e-01 : f32
    %462 = vector.broadcast %cst_197 : f32 to vector<32x256xf32>
    %463 = arith.mulf %462, %450 : vector<32x256xf32>
    %cst_198 = arith.constant 2.000000e-03 : f32
    %464 = vector.broadcast %cst_198 : f32 to vector<32x256xf32>
    %465 = arith.mulf %464, %461 : vector<32x256xf32>
    %466 = arith.addf %463, %465 : vector<32x256xf32>
    %cst_199 = arith.constant 3.000000e+01 : f32
    %467 = vector.broadcast %cst_199 : f32 to vector<32x256xf32>
    %468 = arith.cmpf ogt, %461, %467 : vector<32x256xf32>
    %cst_200 = arith.constant 1.000000e+00 : f32
    %cst_201 = arith.constant 0.000000e+00 : f32
    %469 = vector.broadcast %cst_200 : f32 to vector<32x256xf32>
    %470 = vector.broadcast %cst_201 : f32 to vector<32x256xf32>
    %471 = arith.select %468, %469, %470 : vector<32x256xi1>, vector<32x256xf32>
    %472 = arith.addf %446, %471 : vector<32x256xf32>
    %cst_202 = arith.constant 8.000000e+00 : f32
    %cst_203 = arith.constant 0.000000e+00 : f32
    %473 = vector.broadcast %cst_202 : f32 to vector<32x256xf32>
    %474 = vector.broadcast %cst_203 : f32 to vector<32x256xf32>
    %475 = arith.select %468, %473, %474 : vector<32x256xi1>, vector<32x256xf32>
    %476 = arith.addf %466, %475 : vector<32x256xf32>
    %cst_204 = arith.constant -6.500000e+01 : f32
    %477 = vector.broadcast %cst_204 : f32 to vector<32x256xf32>
    %478 = arith.select %468, %477, %461 : vector<32x256xi1>, vector<32x256xf32>
    %cst_205 = arith.constant 2.000000e-02 : f32
    %479 = vector.broadcast %cst_205 : f32 to vector<32x256xf32>
    %480 = arith.mulf %479, %478 : vector<32x256xf32>
    %cst_206 = arith.constant 3.500000e+00 : f32
    %481 = vector.broadcast %cst_206 : f32 to vector<32x256xf32>
    %482 = arith.addf %480, %481 : vector<32x256xf32>
    %483 = arith.mulf %478, %482 : vector<32x256xf32>
    %cst_207 = arith.constant 5.000000e-01 : f32
    %484 = vector.broadcast %cst_207 : f32 to vector<32x256xf32>
    %485 = arith.mulf %484, %476 : vector<32x256xf32>
    %486 = arith.subf %33, %485 : vector<32x256xf32>
    %487 = arith.addf %483, %486 : vector<32x256xf32>
    %cst_208 = arith.constant 9.900000e-01 : f32
    %488 = vector.broadcast %cst_208 : f32 to vector<32x256xf32>
    %489 = arith.mulf %488, %476 : vector<32x256xf32>
    %cst_209 = arith.constant 2.000000e-03 : f32
    %490 = vector.broadcast %cst_209 : f32 to vector<32x256xf32>
    %491 = arith.mulf %490, %487 : vector<32x256xf32>
    %492 = arith.addf %489, %491 : vector<32x256xf32>
    %cst_210 = arith.constant 3.000000e+01 : f32
    %493 = vector.broadcast %cst_210 : f32 to vector<32x256xf32>
    %494 = arith.cmpf ogt, %487, %493 : vector<32x256xf32>
    %cst_211 = arith.constant 1.000000e+00 : f32
    %cst_212 = arith.constant 0.000000e+00 : f32
    %495 = vector.broadcast %cst_211 : f32 to vector<32x256xf32>
    %496 = vector.broadcast %cst_212 : f32 to vector<32x256xf32>
    %497 = arith.select %494, %495, %496 : vector<32x256xi1>, vector<32x256xf32>
    %498 = arith.addf %472, %497 : vector<32x256xf32>
    %cst_213 = arith.constant 8.000000e+00 : f32
    %cst_214 = arith.constant 0.000000e+00 : f32
    %499 = vector.broadcast %cst_213 : f32 to vector<32x256xf32>
    %500 = vector.broadcast %cst_214 : f32 to vector<32x256xf32>
    %501 = arith.select %494, %499, %500 : vector<32x256xi1>, vector<32x256xf32>
    %502 = arith.addf %492, %501 : vector<32x256xf32>
    %cst_215 = arith.constant -6.500000e+01 : f32
    %503 = vector.broadcast %cst_215 : f32 to vector<32x256xf32>
    %504 = arith.select %494, %503, %487 : vector<32x256xi1>, vector<32x256xf32>
    %cst_216 = arith.constant 2.000000e-02 : f32
    %505 = vector.broadcast %cst_216 : f32 to vector<32x256xf32>
    %506 = arith.mulf %505, %504 : vector<32x256xf32>
    %cst_217 = arith.constant 3.500000e+00 : f32
    %507 = vector.broadcast %cst_217 : f32 to vector<32x256xf32>
    %508 = arith.addf %506, %507 : vector<32x256xf32>
    %509 = arith.mulf %504, %508 : vector<32x256xf32>
    %cst_218 = arith.constant 5.000000e-01 : f32
    %510 = vector.broadcast %cst_218 : f32 to vector<32x256xf32>
    %511 = arith.mulf %510, %502 : vector<32x256xf32>
    %512 = arith.subf %33, %511 : vector<32x256xf32>
    %513 = arith.addf %509, %512 : vector<32x256xf32>
    %cst_219 = arith.constant 9.900000e-01 : f32
    %514 = vector.broadcast %cst_219 : f32 to vector<32x256xf32>
    %515 = arith.mulf %514, %502 : vector<32x256xf32>
    %cst_220 = arith.constant 2.000000e-03 : f32
    %516 = vector.broadcast %cst_220 : f32 to vector<32x256xf32>
    %517 = arith.mulf %516, %513 : vector<32x256xf32>
    %518 = arith.addf %515, %517 : vector<32x256xf32>
    %cst_221 = arith.constant 3.000000e+01 : f32
    %519 = vector.broadcast %cst_221 : f32 to vector<32x256xf32>
    %520 = arith.cmpf ogt, %513, %519 : vector<32x256xf32>
    %cst_222 = arith.constant 1.000000e+00 : f32
    %cst_223 = arith.constant 0.000000e+00 : f32
    %521 = vector.broadcast %cst_222 : f32 to vector<32x256xf32>
    %522 = vector.broadcast %cst_223 : f32 to vector<32x256xf32>
    %523 = arith.select %520, %521, %522 : vector<32x256xi1>, vector<32x256xf32>
    %524 = arith.addf %498, %523 : vector<32x256xf32>
    %cst_224 = arith.constant 8.000000e+00 : f32
    %cst_225 = arith.constant 0.000000e+00 : f32
    %525 = vector.broadcast %cst_224 : f32 to vector<32x256xf32>
    %526 = vector.broadcast %cst_225 : f32 to vector<32x256xf32>
    %527 = arith.select %520, %525, %526 : vector<32x256xi1>, vector<32x256xf32>
    %528 = arith.addf %518, %527 : vector<32x256xf32>
    %cst_226 = arith.constant -6.500000e+01 : f32
    %529 = vector.broadcast %cst_226 : f32 to vector<32x256xf32>
    %530 = arith.select %520, %529, %513 : vector<32x256xi1>, vector<32x256xf32>
    %cst_227 = arith.constant 2.000000e-02 : f32
    %531 = vector.broadcast %cst_227 : f32 to vector<32x256xf32>
    %532 = arith.mulf %531, %530 : vector<32x256xf32>
    %cst_228 = arith.constant 3.500000e+00 : f32
    %533 = vector.broadcast %cst_228 : f32 to vector<32x256xf32>
    %534 = arith.addf %532, %533 : vector<32x256xf32>
    %535 = arith.mulf %530, %534 : vector<32x256xf32>
    %cst_229 = arith.constant 5.000000e-01 : f32
    %536 = vector.broadcast %cst_229 : f32 to vector<32x256xf32>
    %537 = arith.mulf %536, %528 : vector<32x256xf32>
    %538 = arith.subf %33, %537 : vector<32x256xf32>
    %539 = arith.addf %535, %538 : vector<32x256xf32>
    %cst_230 = arith.constant 3.000000e+01 : f32
    %540 = vector.broadcast %cst_230 : f32 to vector<32x256xf32>
    %541 = arith.cmpf ogt, %539, %540 : vector<32x256xf32>
    %cst_231 = arith.constant 1.000000e+00 : f32
    %cst_232 = arith.constant 0.000000e+00 : f32
    %542 = vector.broadcast %cst_231 : f32 to vector<32x256xf32>
    %543 = vector.broadcast %cst_232 : f32 to vector<32x256xf32>
    %544 = arith.select %541, %542, %543 : vector<32x256xi1>, vector<32x256xf32>
    %545 = arith.addf %524, %544 : vector<32x256xf32>
    %cst_233 = arith.constant 5.000000e-02 : f32
    %546 = vector.broadcast %cst_233 : f32 to vector<32x256xf32>
    %547 = arith.mulf %545, %546 : vector<32x256xf32>
    %c0_234 = arith.constant 0 : index
    %c0_235 = arith.constant 0 : index
    %548 = vector.load %arg7[%c0_234, %c0_235] : memref<32x256xf32, #tpu.memory_space<vmem>>, vector<32x256xf32>
    tpu.vector_store %arg7[%c0_234, %c0_235], %547 {strides = array<i32>} : memref<32x256xf32, #tpu.memory_space<vmem>>, vector<32x256xf32>,
    %c0_236 = arith.constant 0 : index
    %c0_237 = arith.constant 0 : index
    %549 = vector.load %arg8[%c0_236, %c0_237] : memref<32x256xf32, #tpu.memory_space<vmem>>, vector<32x256xf32>
    %cst_238 = arith.constant 5.000000e-01 : f32
    %550 = vector.broadcast %cst_238 : f32 to vector<32x256xf32>
    %551 = arith.cmpf oge, %549, %550 : vector<32x256xf32>
    %cst_239 = arith.constant 1.000000e+00 : f32
    %cst_240 = arith.constant 0.000000e+00 : f32
    %552 = vector.broadcast %cst_239 : f32 to vector<32x256xf32>
    %553 = vector.broadcast %cst_240 : f32 to vector<32x256xf32>
    %554 = arith.select %551, %552, %553 : vector<32x256xi1>, vector<32x256xf32>
    %cst_241 = arith.constant dense<0.000000e+00> : vector<32xf32>
    %555 = vector.multi_reduction <add>, %554, %cst_241 [1] : vector<32x256xf32> to vector<32xf32>
    %556 = vector.shape_cast %555 : vector<32xf32> to vector<32x1xf32>
    %cst_242 = arith.constant 0.000000e+00 : f32
    %557 = vector.broadcast %cst_242 : f32 to vector<32x1xf32>
    %558 = arith.cmpf ogt, %556, %557 : vector<32x1xf32>
    %cst_243 = arith.constant 1.000000e+00 : f32
    %cst_244 = arith.constant 0.000000e+00 : f32
    %559 = vector.broadcast %cst_243 : f32 to vector<32x1xf32>
    %560 = vector.broadcast %cst_244 : f32 to vector<32x1xf32>
    %561 = arith.select %558, %559, %560 : vector<32x1xi1>, vector<32x1xf32>
    %c0_245 = arith.constant 0 : index
    %c0_246 = arith.constant 0 : index
    %562 = vector.load %arg2[%c0_245, %c0_246] : memref<32x1xf32, #tpu.memory_space<vmem>>, vector<32x1xf32>
    %563 = arith.addf %562, %561 : vector<32x1xf32>
    %c0_247 = arith.constant 0 : index
    %c0_248 = arith.constant 0 : index
    %564 = vector.load %arg9[%c0_247, %c0_248] : memref<32x1xf32, #tpu.memory_space<vmem>>, vector<32x1xf32>
    tpu.vector_store %arg9[%c0_247, %c0_248], %563 {strides = array<i32>} : memref<32x1xf32, #tpu.memory_space<vmem>>, vector<32x1xf32>,
    %c0_249 = arith.constant 0 : index
    %c0_250 = arith.constant 0 : index
    %565 = vector.load %arg6[%c0_249, %c0_250] : memref<32x256xf32, #tpu.memory_space<vmem>>, vector<32x256xf32>
    %cst_251 = arith.constant 1.000000e+00 : f32
    %566 = vector.broadcast %cst_251 : f32 to vector<32x256xf32>
    %567 = arith.subf %566, %554 : vector<32x256xf32>
    %cst_252 = arith.constant 1.57079637 : f32
    %568 = vector.broadcast %cst_252 : f32 to vector<32x256xf32>
    %569 = arith.mulf %567, %568 : vector<32x256xf32>
    %570 = math.exp %563 : vector<32x1xf32>
    %cst_253 = arith.constant 2.000000e+00 : f32
    %571 = vector.broadcast %cst_253 : f32 to vector<32x256xf32>
    %572 = arith.mulf %571, %569 : vector<32x256xf32>
    %573 = vector.broadcast %570 : vector<32x1xf32> to vector<32x256xf32>
    %574 = arith.mulf %572, %573 : vector<32x256xf32>
    %575 = arith.subf %565, %574 : vector<32x256xf32>
    %cst_254 = arith.constant 1.000000e+00 : f32
    %576 = vector.broadcast %cst_254 : f32 to vector<32x256xf32>
    %577 = arith.subf %575, %576 : vector<32x256xf32>
    %578 = math.tanh %577 : vector<32x256xf32>
    %cst_255 = arith.constant 1.000000e+00 : f32
    %579 = vector.broadcast %cst_255 : f32 to vector<32x256xf32>
    %580 = arith.addf %578, %579 : vector<32x256xf32>
    %581 = vector.shape_cast %561 : vector<32x1xf32> to vector<32x1xf32>
    %582 = vector.broadcast %581 : vector<32x1xf32> to vector<32x256xf32>
    %cst_256 = arith.constant 5.000000e-01 : f32
    %583 = vector.broadcast %cst_256 : f32 to vector<32x256xf32>
    %584 = arith.cmpf ogt, %582, %583 : vector<32x256xf32>
    %585 = arith.select %584, %580, %565 : vector<32x256xi1>, vector<32x256xf32>
    %c0_257 = arith.constant 0 : index
    %c0_258 = arith.constant 0 : index
    %586 = vector.load %arg10[%c0_257, %c0_258] : memref<32x256xf32, #tpu.memory_space<vmem>>, vector<32x256xf32>
    tpu.vector_store %arg10[%c0_257, %c0_258], %585 {strides = array<i32>} : memref<32x256xf32, #tpu.memory_space<vmem>>, vector<32x256xf32>,
    return
  }
  func.func @transform_0(%arg0: i32) -> (i32, i32) {
    %c0_i32 = arith.constant 0 : i32
    %c0_i32_0 = arith.constant 0 : i32
    return %arg0, %c0_i32 : i32, i32
  }
  func.func @transform_1(%arg0: i32) -> (i32, i32) {
    %c0_i32 = arith.constant 0 : i32
    %c0_i32_0 = arith.constant 0 : i32
    return %arg0, %c0_i32 : i32, i32
  }
  func.func @transform_2(%arg0: i32) -> (i32, i32) {
    %c0_i32 = arith.constant 0 : i32
    %c0_i32_0 = arith.constant 0 : i32
    return %arg0, %c0_i32 : i32, i32
  }
  func.func @transform_3(%arg0: i32) -> (i32, i32) {
    %c0_i32 = arith.constant 0 : i32
    %c0_i32_0 = arith.constant 0 : i32
    %c0_i32_1 = arith.constant 0 : i32
    return %c0_i32, %c0_i32_0 : i32, i32
  }
  func.func @transform_4(%arg0: i32) -> (i32, i32) {
    %c0_i32 = arith.constant 0 : i32
    %c0_i32_0 = arith.constant 0 : i32
    return %arg0, %c0_i32 : i32, i32
  }
  func.func @transform_5(%arg0: i32) -> (i32, i32) {
    %c0_i32 = arith.constant 0 : i32
    %c0_i32_0 = arith.constant 0 : i32
    return %arg0, %c0_i32 : i32, i32
  }
  func.func @transform_6(%arg0: i32) -> (i32, i32) {
    %c0_i32 = arith.constant 0 : i32
    %c0_i32_0 = arith.constant 0 : i32
    return %arg0, %c0_i32 : i32, i32
  }
  func.func @transform_7(%arg0: i32) -> (i32, i32) {
    %c0_i32 = arith.constant 0 : i32
    %c0_i32_0 = arith.constant 0 : i32
    return %arg0, %c0_i32 : i32, i32
  }
  func.func @transform_8(%arg0: i32) -> (i32, i32) {
    %c0_i32 = arith.constant 0 : i32
    %c0_i32_0 = arith.constant 0 : i32
    return %arg0, %c0_i32 : i32, i32
  }
  func.func @transform_9(%arg0: i32) -> (i32, i32) {
    %c0_i32 = arith.constant 0 : i32
    %c0_i32_0 = arith.constant 0 : i32
    return %arg0, %c0_i32 : i32, i32
  }
}

</mosaic_0001>

<llo_original>
// kernel: tpu_custom_call.1
$region0: #{tpu_custom_call.1}
  #allocation0 [shape = 'u32[]', space=smem, size = 0x4, offset = 0x4, fixed_abs, tag = 'smem constant byte address 0x4 - core index']
  #allocation1 [shape = 'u32[72,128]{1,0:T(1,128)}', space=vmem, size = 0x9000, scoped, tag = 'internal scratch']
  %s0 = inlined_call_operand.vmem [shape: f32[64,1], index: 0, kind: input, shape index: {}]
  %s1 = inlined_call_operand.vmem [shape: f32[64,1], index: 1, kind: input, shape index: {}]
  %s2 = inlined_call_operand.hbm [shape: f32[64,1024], index: 2, kind: input, shape index: {}]
  %s3 = inlined_call_operand.hbm [shape: f32[1,1024], index: 3, kind: input, shape index: {}]
  %s4 = inlined_call_operand.vmem [shape: f32[64,256], index: 4, kind: input, shape index: {}]
  %s5 = inlined_call_operand.hbm [shape: f32[64,256], index: 5, kind: input, shape index: {}]
  %s6 = inlined_call_operand.hbm [shape: f32[64,256], index: 6, kind: output, shape index: {0}]
  %s7 = inlined_call_operand.hbm [shape: f32[64,256], index: 7, kind: output, shape index: {1}]
  %s8 = inlined_call_operand.vmem [shape: f32[64,1], index: 8, kind: output, shape index: {2}]
  %s9 = inlined_call_operand.hbm [shape: f32[64,256], index: 9, kind: output, shape index: {3}]
  %10 = xla_tuple %s6, %s7, %s8, %s9
  %s11 = sld [smem:[#allocation0]]
  $region93: #{tpu_custom_call.1} parent=0
    _
  %s13 = ssub.s32 1, %s11
  %s14 = scalar_select 0, %s13, %s11
  $region1: #{tpu_custom_call.1} parent=0
    #allocation2 [shape = 'u8[262144]{0}', space=vmem, size = 0x40000, scoped, tag = 'input window, operand 2']
    #allocation3 [shape = 's32[2]{0}', space=sflag, size = 0x8, scoped, tag = 'scoped memory for tpu_custom_call.1']
    #allocation4 [shape = 's32[2]{0}', space=sflag, size = 0x8, scoped, tag = 'scoped memory for tpu_custom_call.1']
    #allocation5 [shape = 'u8[4096]{0}', space=vmem, size = 0x1000, scoped, tag = 'input window, operand 3, single buffered']
    #allocation6 [shape = 's32[1]{0}', space=sflag, size = 0x4, scoped, tag = 'scoped memory for tpu_custom_call.1']
    #allocation7 [shape = 'u8[65536]{0}', space=vmem, size = 0x10000, scoped, tag = 'input window, operand 5']
    #allocation8 [shape = 'u8[65536]{0}', space=vmem, size = 0x10000, scoped, tag = 'output window, operand 0']
    #allocation9 [shape = 'u8[65536]{0}', space=vmem, size = 0x10000, scoped, tag = 'output window, operand 1']
    #allocation10 [shape = 's32[2]{0}', space=sflag, size = 0x8, scoped, tag = 'scoped memory for tpu_custom_call.1']
    #allocation11 [shape = 'u8[65536]{0}', space=vmem, size = 0x10000, scoped, tag = 'output window, operand 3']
    %15 = vsyncpa [#allocation3], 0
    %s16 = scalar_lea.sflag [#allocation3], 1
    %17 = vsyncpa %s16, 0
    %18 = vsyncpa [#allocation6], 0
    %19 = vsyncpa [#allocation4], 0
    %s20 = scalar_lea.sflag [#allocation4], 1
    %21 = vsyncpa %s20, 0
    %22 = vsyncpa [#allocation10], 0
    %s23 = scalar_lea.sflag [#allocation10], 1
    %24 = vsyncpa %s23, 0
    loop: start=0, step=1, limit=4
    $region2: #{tpu_custom_call.1} parent=1 // loop_pre_header
      _
    $region3: #{tpu_custom_call.1} parent=1 // loop_header
      %s26 = sphi 0, %s30
      %p27 = scmp.ge.s32.totalorder %s26, 4
      %s36 = sphi 0, %s38
      %s39 = sphi 0, %s36
      %s40 = sphi 0, %s39
      %s56 = sphi 0, %s40
      %s62 = sphi 0, %s64
      %s65 = sphi 0, %s62
      %s66 = sphi 0, %s65
      %s82 = sphi 0, %s66
      %s88 = sphi 0, %s90
      %s91 = sphi 0, %s88
      %s92 = sphi 0, %s91
      %s108 = sphi 0, %s92
      %s112 = sphi 0, %s112
      %s114 = sphi 0, %s112
      %s115 = sphi 0, %s114
      %s129 = sphi 0, %s115
      %s135 = sphi 0, %s137
      %s138 = sphi 0, %s135
      %s139 = sphi 0, %s138
      %s155 = sphi 0, %s139
      %s161 = sphi 0, %s163
      %s164 = sphi 0, %s161
      %s165 = sphi 0, %s164
      %s181 = sphi 0, %s165
      %s187 = sphi 0, %s189
      %s190 = sphi 0, %s187
      %s191 = sphi 0, %s190
      %s207 = sphi 0, %s191
      %s213 = sphi 0, %s215
      %s216 = sphi 0, %s213
      %s217 = sphi 0, %s216
      %s233 = sphi 0, %s217
      %s239 = sphi 0, %s241
      %s242 = sphi 0, %s239
      %s243 = sphi 0, %s242
      %s259 = sphi 0, %s243
      %s265 = sphi 0, %s267
      %s268 = sphi 0, %s265
      %s269 = sphi 0, %s268
      %s285 = sphi 0, %s269
    $region4: #{tpu_custom_call.1} parent=1 // loop_header_branch
      %29 = sbr.rel (%p27) target = $region8
    $region5: #{tpu_custom_call.1} parent=1 // loop_body
      %s31 = ssub.s32 %s26, 1
      %s32 = ssub.s32 %s26, 2
      %s33 = sadd.s32 %s26, 1
      %s34 = ssub.s32 %s26, %s33
      %p35 = scmp.eq.s32.totalorder %s34, 0
      %s37 = sadd.s32 %s36, 1
      %s38 = scalar_select %p35, %s36, %s37
      %p41 = pneg %p35
      %p42 = scmp.eq.s32.totalorder %s26, 1
      %p43 = por %p41, %p42
      %p44 = scmp.ne.s32.totalorder %s36, %s39
      %p45 = scmp.eq.s32.totalorder %s26, 0
      %p46 = por %p44, %p45
      %p47 = scmp.ne.s32.totalorder %s36, %s39
      %p48 = scmp.eq.s32.totalorder %s31, 1
      %p49 = por %p47, %p48
      %p50 = scmp.ne.s32.totalorder %s39, %s40
      %p51 = scmp.eq.s32.totalorder %s31, 0
      %p52 = por %p50, %p51
      %p53 = scmp.ne.s32.totalorder %s39, %s40
      %p54 = scmp.eq.s32.totalorder %s32, 1
      %p55 = por %p53, %p54
      %p57 = scmp.ne.s32.totalorder %s40, %s56
      %p58 = scmp.eq.s32.totalorder %s32, 0
      %p59 = por %p57, %p58
      %s60 = ssub.s32 %s26, %s33
      %p61 = scmp.eq.s32.totalorder %s60, 0
      %s63 = sadd.s32 %s62, 1
      %s64 = scalar_select %p61, %s62, %s63
      %p67 = pneg %p61
      %p68 = scmp.eq.s32.totalorder %s26, 1
      %p69 = por %p67, %p68
      %p70 = scmp.ne.s32.totalorder %s62, %s65
      %p71 = scmp.eq.s32.totalorder %s26, 0
      %p72 = por %p70, %p71
      %p73 = scmp.ne.s32.totalorder %s62, %s65
      %p74 = scmp.eq.s32.totalorder %s31, 1
      %p75 = por %p73, %p74
      %p76 = scmp.ne.s32.totalorder %s65, %s66
      %p77 = scmp.eq.s32.totalorder %s31, 0
      %p78 = por %p76, %p77
      %p79 = scmp.ne.s32.totalorder %s65, %s66
      %p80 = scmp.eq.s32.totalorder %s32, 1
      %p81 = por %p79, %p80
      %p83 = scmp.ne.s32.totalorder %s66, %s82
      %p84 = scmp.eq.s32.totalorder %s32, 0
      %p85 = por %p83, %p84
      %s86 = ssub.s32 %s26, %s33
      %p87 = scmp.eq.s32.totalorder %s86, 0
      %s89 = sadd.s32 %s88, 1
      %s90 = scalar_select %p87, %s88, %s89
      %p93 = pneg %p87
      %p94 = scmp.eq.s32.totalorder %s26, 1
      %p95 = por %p93, %p94
      %p96 = scmp.ne.s32.totalorder %s88, %s91
      %p97 = scmp.eq.s32.totalorder %s26, 0
      %p98 = por %p96, %p97
      %p99 = scmp.ne.s32.totalorder %s88, %s91
      %p100 = scmp.eq.s32.totalorder %s31, 1
      %p101 = por %p99, %p100
      %p102 = scmp.ne.s32.totalorder %s91, %s92
      %p103 = scmp.eq.s32.totalorder %s31, 0
      %p104 = por %p102, %p103
      %p105 = scmp.ne.s32.totalorder %s91, %s92
      %p106 = scmp.eq.s32.totalorder %s32, 1
      %p107 = por %p105, %p106
      %p109 = scmp.ne.s32.totalorder %s92, %s108
      %p110 = scmp.eq.s32.totalorder %s32, 0
      %p111 = por %p109, %p110
      %s113 = sadd.s32 %s112, 1
      %p116 = scmp.eq.s32.totalorder %s26, 1
      %p117 = scmp.ne.s32.totalorder %s112, %s114
      %p118 = scmp.eq.s32.totalorder %s26, 0
      %p119 = por %p117, %p118
      %p120 = scmp.ne.s32.totalorder %s112, %s114
      %p121 = scmp.eq.s32.totalorder %s31, 1
      %p122 = por %p120, %p121
      %p123 = scmp.ne.s32.totalorder %s114, %s115
      %p124 = scmp.eq.s32.totalorder %s31, 0
      %p125 = por %p123, %p124
      %p126 = scmp.ne.s32.totalorder %s114, %s115
      %p127 = scmp.eq.s32.totalorder %s32, 1
      %p128 = por %p126, %p127
      %p130 = scmp.ne.s32.totalorder %s115, %s129
      %p131 = scmp.eq.s32.totalorder %s32, 0
      %p132 = por %p130, %p131
      %s133 = ssub.s32 %s26, %s33
      %p134 = scmp.eq.s32.totalorder %s133, 0
      %s136 = sadd.s32 %s135, 1
      %s137 = scalar_select %p134, %s135, %s136
      %p140 = pneg %p134
      %p141 = scmp.eq.s32.totalorder %s26, 1
      %p142 = por %p140, %p141
      %p143 = scmp.ne.s32.totalorder %s135, %s138
      %p144 = scmp.eq.s32.totalorder %s26, 0
      %p145 = por %p143, %p144
      %p146 = scmp.ne.s32.totalorder %s135, %s138
      %p147 = scmp.eq.s32.totalorder %s31, 1
      %p148 = por %p146, %p147
      %p149 = scmp.ne.s32.totalorder %s138, %s139
      %p150 = scmp.eq.s32.totalorder %s31, 0
      %p151 = por %p149, %p150
      %p152 = scmp.ne.s32.totalorder %s138, %s139
      %p153 = scmp.eq.s32.totalorder %s32, 1
      %p154 = por %p152, %p153
      %p156 = scmp.ne.s32.totalorder %s139, %s155
      %p157 = scmp.eq.s32.totalorder %s32, 0
      %p158 = por %p156, %p157
      %s159 = ssub.s32 %s26, %s33
      %p160 = scmp.eq.s32.totalorder %s159, 0
      %s162 = sadd.s32 %s161, 1
      %s163 = scalar_select %p160, %s161, %s162
      %p166 = pneg %p160
      %p167 = scmp.eq.s32.totalorder %s26, 1
      %p168 = por %p166, %p167
      %p169 = scmp.ne.s32.totalorder %s161, %s164
      %p170 = scmp.eq.s32.totalorder %s26, 0
      %p171 = por %p169, %p170
      %p172 = scmp.ne.s32.totalorder %s161, %s164
      %p173 = scmp.eq.s32.totalorder %s31, 1
      %p174 = por %p172, %p173
      %p175 = scmp.ne.s32.totalorder %s164, %s165
      %p176 = scmp.eq.s32.totalorder %s31, 0
      %p177 = por %p175, %p176
      %p178 = scmp.ne.s32.totalorder %s164, %s165
      %p179 = scmp.eq.s32.totalorder %s32, 1
      %p180 = por %p178, %p179
      %p182 = scmp.ne.s32.totalorder %s165, %s181
      %p183 = scmp.eq.s32.totalorder %s32, 0
      %p184 = por %p182, %p183
      %s185 = ssub.s32 %s26, %s33
      %p186 = scmp.eq.s32.totalorder %s185, 0
      %s188 = sadd.s32 %s187, 1
      %s189 = scalar_select %p186, %s187, %s188
      %p192 = pneg %p186
      %p193 = scmp.eq.s32.totalorder %s26, 1
      %p194 = por %p192, %p193
      %p195 = scmp.ne.s32.totalorder %s187, %s190
      %p196 = scmp.eq.s32.totalorder %s26, 0
      %p197 = por %p195, %p196
      %p198 = scmp.ne.s32.totalorder %s187, %s190
      %p199 = scmp.eq.s32.totalorder %s31, 1
      %p200 = por %p198, %p199
      %p201 = scmp.ne.s32.totalorder %s190, %s191
      %p202 = scmp.eq.s32.totalorder %s31, 0
      %p203 = por %p201, %p202
      %p204 = scmp.ne.s32.totalorder %s190, %s191
      %p205 = scmp.eq.s32.totalorder %s32, 1
      %p206 = por %p204, %p205
      %p208 = scmp.ne.s32.totalorder %s191, %s207
      %p209 = scmp.eq.s32.totalorder %s32, 0
      %p210 = por %p208, %p209
      %s211 = ssub.s32 %s26, %s33
      %p212 = scmp.eq.s32.totalorder %s211, 0
      %s214 = sadd.s32 %s213, 1
      %s215 = scalar_select %p212, %s213, %s214
      %p218 = pneg %p212
      %p219 = scmp.eq.s32.totalorder %s26, 1
      %p220 = por %p218, %p219
      %p221 = scmp.ne.s32.totalorder %s213, %s216
      %p222 = scmp.eq.s32.totalorder %s26, 0
      %p223 = por %p221, %p222
      %p224 = scmp.ne.s32.totalorder %s213, %s216
      %p225 = scmp.eq.s32.totalorder %s31, 1
      %p226 = por %p224, %p225
      %p227 = scmp.ne.s32.totalorder %s216, %s217
      %p228 = scmp.eq.s32.totalorder %s31, 0
      %p229 = por %p227, %p228
      %p230 = scmp.ne.s32.totalorder %s216, %s217
      %p231 = scmp.eq.s32.totalorder %s32, 1
      %p232 = por %p230, %p231
      %p234 = scmp.ne.s32.totalorder %s217, %s233
      %p235 = scmp.eq.s32.totalorder %s32, 0
      %p236 = por %p234, %p235
      %s237 = ssub.s32 %s26, %s33
      %p238 = scmp.eq.s32.totalorder %s237, 0
      %s240 = sadd.s32 %s239, 1
      %s241 = scalar_select %p238, %s239, %s240
      %p244 = pneg %p238
      %p245 = scmp.eq.s32.totalorder %s26, 1
      %p246 = por %p244, %p245
      %p247 = scmp.ne.s32.totalorder %s239, %s242
      %p248 = scmp.eq.s32.totalorder %s26, 0
      %p249 = por %p247, %p248
      %p250 = scmp.ne.s32.totalorder %s239, %s242
      %p251 = scmp.eq.s32.totalorder %s31, 1
      %p252 = por %p250, %p251
      %p253 = scmp.ne.s32.totalorder %s242, %s243
      %p254 = scmp.eq.s32.totalorder %s31, 0
      %p255 = por %p253, %p254
      %p256 = scmp.ne.s32.totalorder %s242, %s243
      %p257 = scmp.eq.s32.totalorder %s32, 1
      %p258 = por %p256, %p257
      %p260 = scmp.ne.s32.totalorder %s243, %s259
      %p261 = scmp.eq.s32.totalorder %s32, 0
      %p262 = por %p260, %p261
      %s263 = ssub.s32 %s26, %s33
      %p264 = scmp.eq.s32.totalorder %s263, 0
      %s266 = sadd.s32 %s265, 1
      %s267 = scalar_select %p264, %s265, %s266
      %p270 = pneg %p264
      %p271 = scmp.eq.s32.totalorder %s26, 1
      %p272 = por %p270, %p271
      %p273 = scmp.ne.s32.totalorder %s265, %s268
      %p274 = scmp.eq.s32.totalorder %s26, 0
      %p275 = por %p273, %p274
      %p276 = scmp.ne.s32.totalorder %s265, %s268
      %p277 = scmp.eq.s32.totalorder %s31, 1
      %p278 = por %p276, %p277
      %p279 = scmp.ne.s32.totalorder %s268, %s269
      %p280 = scmp.eq.s32.totalorder %s31, 0
      %p281 = por %p279, %p280
      %p282 = scmp.ne.s32.totalorder %s268, %s269
      %p283 = scmp.eq.s32.totalorder %s32, 1
      %p284 = por %p282, %p283
      %p286 = scmp.ne.s32.totalorder %s269, %s285
      %p287 = scmp.eq.s32.totalorder %s32, 0
      %p288 = por %p286, %p287
      %p289 = scmp.le.s32.totalorder 1, %s26
      %p290 = scmp.lt.s32.totalorder %s26, 3
      %p291 = pnand %p289, %p290
      %p292 = pneg %p291
      // Predicated region
      $region9: #{tpu_custom_call.1} parent=5 // pred_check
        _
      $region10: #{tpu_custom_call.1} parent=5 // pred_check_branch
        %294 = sbr.rel (%p291) target = $region12
      $region11: #{tpu_custom_call.1} parent=5 // pred_region
        %s295 = ssub.s32 %s26, 1
        // Predicated region
        $region13: #{tpu_custom_call.1} parent=11 // pred_check
          %p296 = pneg %p125
        $region14: #{tpu_custom_call.1} parent=11 // pred_check_branch
          %298 = sbr.rel (%p296) target = $region16
        $region15: #{tpu_custom_call.1} parent=11 // pred_region
          %300 = vsyncadd [#allocation6], 0
          %s302 = sshll.u32 %s3, 4
          %s303 = int_to_ptr.hbm [resolvable:$true] %s302
          %s304 = sshll.u32 [#allocation5], 4
          %s305 = int_to_ptr.vmem [resolvable:$true] %s304
          %307 = dma.hbm_to_vmem [thread:$0]  %s303, 128, %s305, [#allocation6]
        $region16: #{tpu_custom_call.1} parent=11 // pred_fallthru
          _
      $region12: #{tpu_custom_call.1} parent=5 // pred_fallthru
        _
      %p308 = scmp.lt.s32.totalorder %s26, 2
      // Predicated region
      $region17: #{tpu_custom_call.1} parent=5 // pred_check
        %p309 = pneg %p308
      $region18: #{tpu_custom_call.1} parent=5 // pred_check_branch
        %311 = sbr.rel (%p309) target = $region20
      $region19: #{tpu_custom_call.1} parent=5 // pred_region
        // Predicated region
        $region21: #{tpu_custom_call.1} parent=19 // pred_check
          %p312 = pneg %p46
        $region22: #{tpu_custom_call.1} parent=19 // pred_check_branch
          %314 = sbr.rel (%p312) target = $region24
        $region23: #{tpu_custom_call.1} parent=19 // pred_region
          %s315 = smul.u32 4, %s26
          %p316 = scmp.lt.s32.totalorder %s315, 7
          %s317 = scalar_select %p316, %s315, 7
          %s318 = smul.addr %s317, 8
          %s319 = scalar_lea.vmem %s0, %s318
          %s320 = smul.u32 4, %s26
        $region24: #{tpu_custom_call.1} parent=19 // pred_fallthru
          _
        // Predicated region
        $region25: #{tpu_custom_call.1} parent=19 // pred_check
          %p321 = pneg %p72
        $region26: #{tpu_custom_call.1} parent=19 // pred_check_branch
          %323 = sbr.rel (%p321) target = $region28
        $region27: #{tpu_custom_call.1} parent=19 // pred_region
          %s324 = smul.u32 4, %s26
          %p325 = scmp.lt.s32.totalorder %s324, 7
          %s326 = scalar_select %p325, %s324, 7
          %s327 = smul.addr %s326, 8
          %s328 = scalar_lea.vmem %s1, %s327
          %s329 = smul.u32 4, %s26
        $region28: #{tpu_custom_call.1} parent=19 // pred_fallthru
          _
        // Predicated region
        $region29: #{tpu_custom_call.1} parent=19 // pred_check
          %p330 = pneg %p98
        $region30: #{tpu_custom_call.1} parent=19 // pred_check_branch
          %332 = sbr.rel (%p330) target = $region32
        $region31: #{tpu_custom_call.1} parent=19 // pred_region
          %s333 = sand.u32 %s26, 1
          %s334 = scalar_lea.sflag [#allocation3], %s333
          %s335 = sand.u32 %s88, 1
          %s336 = smul.addr %s335, 256
          %s337 = scalar_lea.vmem [#allocation2], %s336
          %s338 = smul.u32 4, %s26
          %340 = vsyncadd %s334, 0
          %s341 = smul.addr %s338, 8
          %s342 = smul.addr %s341, 8
          %s343 = scalar_lea.hbm %s2, %s342
          %s344 = sshll.u32 %s343, 4
          %s345 = int_to_ptr.hbm [resolvable:$true] %s344
          %s346 = sshll.u32 %s337, 4
          %s347 = int_to_ptr.vmem [resolvable:$true] %s346
          %352 = dma.hbm_to_vmem [thread:$0]  %s345, 4096, %s347, %s334, 1024, 1024, 64
        $region32: #{tpu_custom_call.1} parent=19 // pred_fallthru
          _
        // Predicated region
        $region33: #{tpu_custom_call.1} parent=19 // pred_check
          %p353 = pneg %p145
        $region34: #{tpu_custom_call.1} parent=19 // pred_check_branch
          %355 = sbr.rel (%p353) target = $region36
        $region35: #{tpu_custom_call.1} parent=19 // pred_region
          %s356 = smul.u32 4, %s26
          %p357 = scmp.lt.s32.totalorder %s356, 7
          %s358 = scalar_select %p357, %s356, 7
          %s359 = smul.addr %s358, 2
          %s360 = smul.addr %s359, 8
          %s361 = scalar_lea.vmem %s4, %s360
          %s362 = smul.u32 4, %s26
        $region36: #{tpu_custom_call.1} parent=19 // pred_fallthru
          _
        // Predicated region
        $region37: #{tpu_custom_call.1} parent=19 // pred_check
          %p363 = pneg %p171
        $region38: #{tpu_custom_call.1} parent=19 // pred_check_branch
          %365 = sbr.rel (%p363) target = $region40
        $region39: #{tpu_custom_call.1} parent=19 // pred_region
          %s366 = sand.u32 %s26, 1
          %s367 = scalar_lea.sflag [#allocation3], %s366
          %s368 = sand.u32 %s161, 1
          %s369 = smul.addr %s368, 64
          %s370 = scalar_lea.vmem [#allocation7], %s369
          %s371 = smul.u32 4, %s26
          %373 = vsyncadd %s367, 0
          %s374 = smul.addr %s371, 2
          %s375 = smul.addr %s374, 8
          %s376 = scalar_lea.hbm %s5, %s375
          %s377 = sshll.u32 %s376, 4
          %s378 = int_to_ptr.hbm [resolvable:$true] %s377
          %s379 = sshll.u32 %s370, 4
          %s380 = int_to_ptr.vmem [resolvable:$true] %s379
          %385 = dma.hbm_to_vmem [thread:$0]  %s378, 1024, %s380, %s367, 256, 256, 16
        $region40: #{tpu_custom_call.1} parent=19 // pred_fallthru
          _
      $region20: #{tpu_custom_call.1} parent=5 // pred_fallthru
        _
      %p386 = scmp.le.s32.totalorder 1, %s26
      %p387 = scmp.lt.s32.totalorder %s26, 3
      %p388 = pnand %p386, %p387
      %p389 = pneg %p388
      // Predicated region
      $region41: #{tpu_custom_call.1} parent=5 // pred_check
        _
      $region42: #{tpu_custom_call.1} parent=5 // pred_check_branch
        %391 = sbr.rel (%p388) target = $region44
      $region43: #{tpu_custom_call.1} parent=5 // pred_region
        %s392 = ssub.s32 %s26, 1
        %s393 = sand.u32 %s31, 1
        %s394 = scalar_lea.sflag [#allocation3], %s393
        %s395 = sand.u32 %s91, 1
        %s396 = smul.addr %s395, 256
        %s397 = scalar_lea.vmem [#allocation2], %s396
        // Predicated region
        $region45: #{tpu_custom_call.1} parent=43 // pred_check
          %p398 = pneg %p104
        $region46: #{tpu_custom_call.1} parent=43 // pred_check_branch
          %400 = sbr.rel (%p398) target = $region48
        $region47: #{tpu_custom_call.1} parent=43 // pred_region
          %402 = dma.done %s394, 4096
        $region48: #{tpu_custom_call.1} parent=43 // pred_fallthru
          _
        // Predicated region
        $region49: #{tpu_custom_call.1} parent=43 // pred_check
          %p403 = pneg %p125
        $region50: #{tpu_custom_call.1} parent=43 // pred_check_branch
          %405 = sbr.rel (%p403) target = $region52
        $region51: #{tpu_custom_call.1} parent=43 // pred_region
          %407 = dma.done [#allocation6], 128
        $region52: #{tpu_custom_call.1} parent=43 // pred_fallthru
          _
        %s408 = sand.u32 %s31, 1
        %s409 = scalar_lea.sflag [#allocation3], %s408
        %s410 = sand.u32 %s164, 1
        %s411 = smul.addr %s410, 64
        %s412 = scalar_lea.vmem [#allocation7], %s411
        // Predicated region
        $region53: #{tpu_custom_call.1} parent=43 // pred_check
          %p413 = pneg %p177
        $region54: #{tpu_custom_call.1} parent=43 // pred_check_branch
          %415 = sbr.rel (%p413) target = $region56
        $region55: #{tpu_custom_call.1} parent=43 // pred_region
          %417 = dma.done %s409, 1024
        $region56: #{tpu_custom_call.1} parent=43 // pred_fallthru
          _
        %s418 = smul.u32 4, %s31
        %p419 = scmp.lt.s32.totalorder %s418, 7
        %s420 = scalar_select %p419, %s418, 7
        %s421 = smul.addr %s420, 8
        %s422 = scalar_lea.vmem %s0, %s421
        %p423 = pneg %p52
        %p424 = pneg %p49
        %s425 = smul.u32 4, %s31
        %p426 = scmp.lt.s32.totalorder %s425, 7
        %s427 = scalar_select %p426, %s425, 7
        %s428 = smul.addr %s427, 8
        %s429 = scalar_lea.vmem %s1, %s428
        %p430 = pneg %p78
        %p431 = pneg %p75
        %s432 = sand.u32 %s31, 1
        %s433 = scalar_lea.sflag [#allocation3], %s432
        %s434 = sand.u32 %s91, 1
        %s435 = smul.addr %s434, 256
        %s436 = scalar_lea.vmem [#allocation2], %s435
        %p437 = pneg %p104
        %p438 = pneg %p101
        %p439 = pneg %p125
        %p440 = pneg %p122
        %s441 = smul.u32 4, %s31
        %p442 = scmp.lt.s32.totalorder %s441, 7
        %s443 = scalar_select %p442, %s441, 7
        %s444 = smul.addr %s443, 2
        %s445 = smul.addr %s444, 8
        %s446 = scalar_lea.vmem %s4, %s445
        %p447 = pneg %p151
        %p448 = pneg %p148
        %s449 = sand.u32 %s31, 1
        %s450 = scalar_lea.sflag [#allocation3], %s449
        %s451 = sand.u32 %s164, 1
        %s452 = smul.addr %s451, 64
        %s453 = scalar_lea.vmem [#allocation7], %s452
        %p454 = pneg %p177
        %p455 = pneg %p174
        %p456 = pneg %p203
        %p457 = pneg %p200
        %s458 = sand.u32 %s190, 1
        %s459 = scalar_lea.sflag [#allocation4], %s458
        %s460 = sand.u32 %s190, 1
        %s461 = smul.addr %s460, 64
        %s462 = scalar_lea.vmem [#allocation8], %s461
        %p463 = pneg %p229
        %p464 = pneg %p226
        %s465 = sand.u32 %s31, 1
        %s466 = scalar_lea.sflag [#allocation10], %s465
        %s467 = sand.u32 %s216, 1
        %s468 = smul.addr %s467, 64
        %s469 = scalar_lea.vmem [#allocation9], %s468
        %p470 = pneg %p255
        %p471 = pneg %p252
        %s472 = smul.u32 4, %s31
        %p473 = scmp.lt.s32.totalorder %s472, 7
        %s474 = scalar_select %p473, %s472, 7
        %s475 = smul.addr %s474, 8
        %s476 = scalar_lea.vmem %s8, %s475
        %p477 = pneg %p281
        %p478 = pneg %p278
        %s479 = sand.u32 %s31, 1
        %s480 = scalar_lea.sflag [#allocation10], %s479
        %s481 = sand.u32 %s268, 1
        %s482 = smul.addr %s481, 64
        %s483 = scalar_lea.vmem [#allocation11], %s482
        %s484 = smul.u32 4, %s31
        %p485 = scmp.lt.s32.totalorder %s484, 7
        %s486 = scalar_select %p485, %s484, 7
        %s487 = smul.addr %s486, 8
        %s488 = scalar_lea.vmem %s0, %s487
        %s489 = smul.u32 4, %s31
        %s490 = smul.u32 4, %s31
        %p491 = scmp.lt.s32.totalorder %s490, 7
        %s492 = scalar_select %p491, %s490, 7
        %s493 = smul.addr %s492, 8
        %s494 = scalar_lea.vmem %s1, %s493
        %s495 = smul.u32 4, %s31
        %s496 = smul.u32 4, %s31
        %s497 = smul.u32 4, %s31
        %p498 = scmp.lt.s32.totalorder %s497, 7
        %s499 = scalar_select %p498, %s497, 7
        %s500 = smul.addr %s499, 2
        %s501 = smul.addr %s500, 8
        %s502 = scalar_lea.vmem %s4, %s501
        %s503 = smul.u32 4, %s31
        %s504 = smul.u32 4, %s31
        %s505 = smul.u32 4, %s31
        %s506 = smul.u32 4, %s31
        %s507 = smul.u32 4, %s31
        %p508 = scmp.lt.s32.totalorder %s507, 7
        %s509 = scalar_select %p508, %s507, 7
        %s510 = smul.addr %s509, 8
        %s511 = scalar_lea.vmem %s8, %s510
        %s512 = smul.u32 4, %s31
        %s513 = smul.u32 4, %s31
        %v514 = vld [vmem:[%s397] sm:$0xff]
        %v515 = vld [vmem:[%s397 + $0x8] sm:$0xff]
        %v516 = vld [vmem:[%s397 + $0x10] sm:$0xff]
        %v517 = vld [vmem:[%s397 + $0x18] sm:$0xff]
        %v518 = vld [vmem:[%s397 + $0x20] sm:$0xff]
        %v519 = vld [vmem:[%s397 + $0x28] sm:$0xff]
        %v520 = vld [vmem:[%s397 + $0x30] sm:$0xff]
        %v521 = vld [vmem:[%s397 + $0x38] sm:$0xff]
        %v522 = vld [vmem:[%s397 + $0x40] sm:$0xff]
        %v523 = vld [vmem:[%s397 + $0x48] sm:$0xff]
        %v524 = vld [vmem:[%s397 + $0x50] sm:$0xff]
        %v525 = vld [vmem:[%s397 + $0x58] sm:$0xff]
        %v526 = vld [vmem:[%s397 + $0x60] sm:$0xff]
        %v527 = vld [vmem:[%s397 + $0x68] sm:$0xff]
        %v528 = vld [vmem:[%s397 + $0x70] sm:$0xff]
        %v529 = vld [vmem:[%s397 + $0x78] sm:$0xff]
        %v530 = vld [vmem:[%s397 + $0x80] sm:$0xff]
        %v531 = vld [vmem:[%s397 + $0x88] sm:$0xff]
        %v532 = vld [vmem:[%s397 + $0x90] sm:$0xff]
        %v533 = vld [vmem:[%s397 + $0x98] sm:$0xff]
        %v534 = vld [vmem:[%s397 + $0xa0] sm:$0xff]
        %v535 = vld [vmem:[%s397 + $0xa8] sm:$0xff]
        %v536 = vld [vmem:[%s397 + $0xb0] sm:$0xff]
        %v537 = vld [vmem:[%s397 + $0xb8] sm:$0xff]
        %v538 = vld [vmem:[%s397 + $0xc0] sm:$0xff]
        %v539 = vld [vmem:[%s397 + $0xc8] sm:$0xff]
        %v540 = vld [vmem:[%s397 + $0xd0] sm:$0xff]
        %v541 = vld [vmem:[%s397 + $0xd8] sm:$0xff]
        %v542 = vld [vmem:[%s397 + $0xe0] sm:$0xff]
        %v543 = vld [vmem:[%s397 + $0xe8] sm:$0xff]
        %v544 = vld [vmem:[%s397 + $0xf0] sm:$0xff]
        %v545 = vld [vmem:[%s397 + $0xf8] sm:$0xff]
        %v546 = vld [vmem:[#allocation5] sm:$0xff]
        %v548 = vperm.slane %v546, 0
        %v549 = vperm.slane %v546, 1
        %v550 = vperm.slane %v546, 2
        %v551 = vperm.slane %v546, 3
        %v552 = vperm.slane %v546, 4
        %v553 = vperm.slane %v546, 5
        %v554 = vperm.slane %v546, 6
        %v555 = vperm.slane %v546, 7
        %v564 = vmul.f32 %v514, %v548
        %v565 = vmul.f32 %v515, %v549
        %v566 = vmul.f32 %v516, %v550
        %v567 = vmul.f32 %v517, %v551
        %v568 = vmul.f32 %v518, %v552
        %v569 = vmul.f32 %v519, %v553
        %v570 = vmul.f32 %v520, %v554
        %v571 = vmul.f32 %v521, %v555
        %v572 = vmul.f32 %v522, %v548
        %v573 = vmul.f32 %v523, %v549
        %v574 = vmul.f32 %v524, %v550
        %v575 = vmul.f32 %v525, %v551
        %v576 = vmul.f32 %v526, %v552
        %v577 = vmul.f32 %v527, %v553
        %v578 = vmul.f32 %v528, %v554
        %v579 = vmul.f32 %v529, %v555
        %v580 = vmul.f32 %v530, %v548
        %v581 = vmul.f32 %v531, %v549
        %v582 = vmul.f32 %v532, %v550
        %v583 = vmul.f32 %v533, %v551
        %v584 = vmul.f32 %v534, %v552
        %v585 = vmul.f32 %v535, %v553
        %v586 = vmul.f32 %v536, %v554
        %v587 = vmul.f32 %v537, %v555
        %v588 = vmul.f32 %v538, %v548
        %v589 = vmul.f32 %v539, %v549
        %v590 = vmul.f32 %v540, %v550
        %v591 = vmul.f32 %v541, %v551
        %v592 = vmul.f32 %v542, %v552
        %v593 = vmul.f32 %v543, %v553
        %v594 = vmul.f32 %v544, %v554
        %v595 = vmul.f32 %v545, %v555
        %v596 = vadd.f32 %v564, %v566
        %v597 = vadd.f32 %v565, %v567
        %v598 = vadd.f32 %v572, %v574
        %v599 = vadd.f32 %v573, %v575
        %v600 = vadd.f32 %v580, %v582
        %v601 = vadd.f32 %v581, %v583
        %v602 = vadd.f32 %v588, %v590
        %v603 = vadd.f32 %v589, %v591
        %v604 = vadd.f32 %v596, %v568
        %v605 = vadd.f32 %v597, %v569
        %v606 = vadd.f32 %v598, %v576
        %v607 = vadd.f32 %v599, %v577
        %v608 = vadd.f32 %v600, %v584
        %v609 = vadd.f32 %v601, %v585
        %v610 = vadd.f32 %v602, %v592
        %v611 = vadd.f32 %v603, %v593
        %v612 = vadd.f32 %v604, %v570
        %v613 = vadd.f32 %v605, %v571
        %v614 = vadd.f32 %v606, %v578
        %v615 = vadd.f32 %v607, %v579
        %v616 = vadd.f32 %v608, %v586
        %v617 = vadd.f32 %v609, %v587
        %v618 = vadd.f32 %v610, %v594
        %v619 = vadd.f32 %v611, %v595
        %v620 = vtanh.pop %v612
        %v621 = vtanh.pop %v613
        %v622 = vtanh.pop %v614
        %v623 = vtanh.pop %v615
        %v624 = vtanh.pop %v616
        %v625 = vtanh.pop %v617
        %v626 = vtanh.pop %v618
        %v627 = vtanh.pop %v619
        %vm628 = vcmp.lt.f32.partialorder %v620, 0.0
        %vm629 = vcmp.lt.f32.partialorder %v621, 0.0
        %vm630 = vcmp.lt.f32.partialorder %v622, 0.0
        %vm631 = vcmp.lt.f32.partialorder %v623, 0.0
        %vm632 = vcmp.lt.f32.partialorder %v624, 0.0
        %vm633 = vcmp.lt.f32.partialorder %v625, 0.0
        %vm634 = vcmp.lt.f32.partialorder %v626, 0.0
        %vm635 = vcmp.lt.f32.partialorder %v627, 0.0
        %v636 = vsel %vm628, 0.0, %v620
        %v637 = vsel %vm629, 0.0, %v621
        %v638 = vsel %vm630, 0.0, %v622
        %v639 = vsel %vm631, 0.0, %v623
        %v640 = vsel %vm632, 0.0, %v624
        %v641 = vsel %vm633, 0.0, %v625
        %v642 = vsel %vm634, 0.0, %v626
        %v643 = vsel %vm635, 0.0, %v627
        %v644 = vld [vmem:[%s502] sm:$0xff]
        %v645 = vld [vmem:[%s502 + $0x8] sm:$0xff]
        %v646 = vld [vmem:[%s502 + $0x10] sm:$0xff]
        %v647 = vld [vmem:[%s502 + $0x18] sm:$0xff]
        %v648 = vld [vmem:[%s502 + $0x20] sm:$0xff]
        %v649 = vld [vmem:[%s502 + $0x28] sm:$0xff]
        %v650 = vld [vmem:[%s502 + $0x30] sm:$0xff]
        %v651 = vld [vmem:[%s502 + $0x38] sm:$0xff]
        %v652 = vld [vmem:[%s488] sm:$0xff]
        %v653 = vld [vmem:[%s488 + $0x8] sm:$0xff]
        %v654 = vld [vmem:[%s488 + $0x10] sm:$0xff]
        %v655 = vld [vmem:[%s488 + $0x18] sm:$0xff]
        %v656 = vsub.f32 %v636, %v644
        %v657 = vsub.f32 %v637, %v645
        %v658 = vsub.f32 %v638, %v646
        %v659 = vsub.f32 %v639, %v647
        %v660 = vsub.f32 %v640, %v648
        %v661 = vsub.f32 %v641, %v649
        %v662 = vsub.f32 %v642, %v650
        %v663 = vsub.f32 %v643, %v651
        %665 = vset.pattern.permute.xlu0 0
        %666 = vperm.xlu0 %665, %v652
        %v667 = vpop.permute.xlu0 %666
        %670 = vset.pattern.permute.xlu0 0
        %671 = vperm.xlu0 %670, %v653
        %v672 = vpop.permute.xlu0 %671
        %675 = vset.pattern.permute.xlu0 0
        %676 = vperm.xlu0 %675, %v654
        %v677 = vpop.permute.xlu0 %676
        %680 = vset.pattern.permute.xlu0 0
        %681 = vperm.xlu0 %680, %v655
        %v682 = vpop.permute.xlu0 %681
        %v684 = vmul.f32 %v667, %v656
        %v685 = vmul.f32 %v667, %v657
        %v686 = vmul.f32 %v672, %v658
        %v687 = vmul.f32 %v672, %v659
        %v688 = vmul.f32 %v677, %v660
        %v689 = vmul.f32 %v677, %v661
        %v690 = vmul.f32 %v682, %v662
        %v691 = vmul.f32 %v682, %v663
        %v692 = vadd.f32 %v644, %v684
        %v693 = vadd.f32 %v645, %v685
        %v694 = vadd.f32 %v646, %v686
        %v695 = vadd.f32 %v647, %v687
        %v696 = vadd.f32 %v648, %v688
        %v697 = vadd.f32 %v649, %v689
        %v698 = vadd.f32 %v650, %v690
        %v699 = vadd.f32 %v651, %v691
        %vm700 = vcmp.lt.f32.partialorder %v692, 0.0
        %vm701 = vcmp.lt.f32.partialorder %v693, 0.0
        %vm702 = vcmp.lt.f32.partialorder %v694, 0.0
        %vm703 = vcmp.lt.f32.partialorder %v695, 0.0
        %vm704 = vcmp.lt.f32.partialorder %v696, 0.0
        %vm705 = vcmp.lt.f32.partialorder %v697, 0.0
        %vm706 = vcmp.lt.f32.partialorder %v698, 0.0
        %vm707 = vcmp.lt.f32.partialorder %v699, 0.0
        %v708 = vsel %vm700, 0.0, %v692
        %v709 = vsel %vm701, 0.0, %v693
        %v710 = vsel %vm702, 0.0, %v694
        %v711 = vsel %vm703, 0.0, %v695
        %v712 = vsel %vm704, 0.0, %v696
        %v713 = vsel %vm705, 0.0, %v697
        %v714 = vsel %vm706, 0.0, %v698
        %v715 = vsel %vm707, 0.0, %v699
        %716 = vst [vmem:[%s469] sm:$0xff] %v708
        %717 = vst [vmem:[%s469 + $0x8] sm:$0xff] %v709
        %718 = vst [vmem:[%s469 + $0x10] sm:$0xff] %v710
        %719 = vst [vmem:[%s469 + $0x18] sm:$0xff] %v711
        %720 = vst [vmem:[%s469 + $0x20] sm:$0xff] %v712
        %721 = vst [vmem:[%s469 + $0x28] sm:$0xff] %v713
        %722 = vst [vmem:[%s469 + $0x30] sm:$0xff] %v714
        %723 = vst [vmem:[%s469 + $0x38] sm:$0xff] %v715
        %v724 = vmul.f32 %v708, 30.0
        %v725 = vmul.f32 %v709, 30.0
        %v726 = vmul.f32 %v710, 30.0
        %v727 = vmul.f32 %v711, 30.0
        %v728 = vmul.f32 %v712, 30.0
        %v729 = vmul.f32 %v713, 30.0
        %v730 = vmul.f32 %v714, 30.0
        %v731 = vmul.f32 %v715, 30.0
        %v732 = vround.ne.pseudo %v724
        %v733 = vround.ne.pseudo %v725
        %v734 = vround.ne.pseudo %v726
        %v735 = vround.ne.pseudo %v727
        %v736 = vround.ne.pseudo %v728
        %v737 = vround.ne.pseudo %v729
        %v738 = vround.ne.pseudo %v730
        %v739 = vround.ne.pseudo %v731
        %v740 = vmul.f32 %v732, 0.5
        %v741 = vmul.f32 %v733, 0.5
        %v742 = vmul.f32 %v734, 0.5
        %v743 = vmul.f32 %v735, 0.5
        %v744 = vmul.f32 %v736, 0.5
        %v745 = vmul.f32 %v737, 0.5
        %v746 = vmul.f32 %v738, 0.5
        %v747 = vmul.f32 %v739, 0.5
        %v748 = vadd.f32 %v740, 70.0
        %v749 = vadd.f32 %v741, 70.0
        %v750 = vadd.f32 %v742, 70.0
        %v751 = vadd.f32 %v743, 70.0
        %v752 = vadd.f32 %v744, 70.0
        %v753 = vadd.f32 %v745, 70.0
        %v754 = vadd.f32 %v746, 70.0
        %v755 = vadd.f32 %v747, 70.0
        %v756 = vsub.f32 %v748, -7.0
        %v757 = vsub.f32 %v749, -7.0
        %v758 = vsub.f32 %v750, -7.0
        %v759 = vsub.f32 %v751, -7.0
        %v760 = vsub.f32 %v752, -7.0
        %v761 = vsub.f32 %v753, -7.0
        %v762 = vsub.f32 %v754, -7.0
        %v763 = vsub.f32 %v755, -7.0
        %v764 = vadd.f32 %v756, -147.0
        %v765 = vadd.f32 %v757, -147.0
        %v766 = vadd.f32 %v758, -147.0
        %v767 = vadd.f32 %v759, -147.0
        %v768 = vadd.f32 %v760, -147.0
        %v769 = vadd.f32 %v761, -147.0
        %v770 = vadd.f32 %v762, -147.0
        %v771 = vadd.f32 %v763, -147.0
        %v772 = vmul.f32 %v764, 0.002
        %v773 = vmul.f32 %v765, 0.002
        %v774 = vmul.f32 %v766, 0.002
        %v775 = vmul.f32 %v767, 0.002
        %v776 = vmul.f32 %v768, 0.002
        %v777 = vmul.f32 %v769, 0.002
        %v778 = vmul.f32 %v770, 0.002
        %v779 = vmul.f32 %v771, 0.002
        %v780 = vadd.f32 %v772, -13.860001
        %v781 = vadd.f32 %v773, -13.860001
        %v782 = vadd.f32 %v774, -13.860001
        %v783 = vadd.f32 %v775, -13.860001
        %v784 = vadd.f32 %v776, -13.860001
        %v785 = vadd.f32 %v777, -13.860001
        %v786 = vadd.f32 %v778, -13.860001
        %v787 = vadd.f32 %v779, -13.860001
        %vm788 = vcmp.gt.f32.partialorder %v764, 30.0
        %vm789 = vcmp.gt.f32.partialorder %v765, 30.0
        %vm790 = vcmp.gt.f32.partialorder %v766, 30.0
        %vm791 = vcmp.gt.f32.partialorder %v767, 30.0
        %vm792 = vcmp.gt.f32.partialorder %v768, 30.0
        %vm793 = vcmp.gt.f32.partialorder %v769, 30.0
        %vm794 = vcmp.gt.f32.partialorder %v770, 30.0
        %vm795 = vcmp.gt.f32.partialorder %v771, 30.0
        %v796 = vsel %vm788, 1.0, 0.0
        %v797 = vsel %vm789, 1.0, 0.0
        %v798 = vsel %vm790, 1.0, 0.0
        %v799 = vsel %vm791, 1.0, 0.0
        %v800 = vsel %vm792, 1.0, 0.0
        %v801 = vsel %vm793, 1.0, 0.0
        %v802 = vsel %vm794, 1.0, 0.0
        %v803 = vsel %vm795, 1.0, 0.0
        %v804 = vadd.f32 %v796, 0.0
        %v805 = vadd.f32 %v797, 0.0
        %v806 = vadd.f32 %v798, 0.0
        %v807 = vadd.f32 %v799, 0.0
        %v808 = vadd.f32 %v800, 0.0
        %v809 = vadd.f32 %v801, 0.0
        %v810 = vadd.f32 %v802, 0.0
        %v811 = vadd.f32 %v803, 0.0
        %v812 = vsel %vm788, 8.0, 0.0
        %v813 = vsel %vm789, 8.0, 0.0
        %v814 = vsel %vm790, 8.0, 0.0
        %v815 = vsel %vm791, 8.0, 0.0
        %v816 = vsel %vm792, 8.0, 0.0
        %v817 = vsel %vm793, 8.0, 0.0
        %v818 = vsel %vm794, 8.0, 0.0
        %v819 = vsel %vm795, 8.0, 0.0
        %v820 = vadd.f32 %v780, %v812
        %v821 = vadd.f32 %v781, %v813
        %v822 = vadd.f32 %v782, %v814
        %v823 = vadd.f32 %v783, %v815
        %v824 = vadd.f32 %v784, %v816
        %v825 = vadd.f32 %v785, %v817
        %v826 = vadd.f32 %v786, %v818
        %v827 = vadd.f32 %v787, %v819
        %v828 = vsel %vm788, -65.0, %v764
        %v829 = vsel %vm789, -65.0, %v765
        %v830 = vsel %vm790, -65.0, %v766
        %v831 = vsel %vm791, -65.0, %v767
        %v832 = vsel %vm792, -65.0, %v768
        %v833 = vsel %vm793, -65.0, %v769
        %v834 = vsel %vm794, -65.0, %v770
        %v835 = vsel %vm795, -65.0, %v771
        %v836 = vmul.f32 %v828, 0.02
        %v837 = vmul.f32 %v829, 0.02
        %v838 = vmul.f32 %v830, 0.02
        %v839 = vmul.f32 %v831, 0.02
        %v840 = vmul.f32 %v832, 0.02
        %v841 = vmul.f32 %v833, 0.02
        %v842 = vmul.f32 %v834, 0.02
        %v843 = vmul.f32 %v835, 0.02
        %v844 = vadd.f32 %v836, 3.5
        %v845 = vadd.f32 %v837, 3.5
        %v846 = vadd.f32 %v838, 3.5
        %v847 = vadd.f32 %v839, 3.5
        %v848 = vadd.f32 %v840, 3.5
        %v849 = vadd.f32 %v841, 3.5
        %v850 = vadd.f32 %v842, 3.5
        %v851 = vadd.f32 %v843, 3.5
        %v852 = vmul.f32 %v828, %v844
        %v853 = vmul.f32 %v829, %v845
        %v854 = vmul.f32 %v830, %v846
        %v855 = vmul.f32 %v831, %v847
        %v856 = vmul.f32 %v832, %v848
        %v857 = vmul.f32 %v833, %v849
        %v858 = vmul.f32 %v834, %v850
        %v859 = vmul.f32 %v835, %v851
        %v860 = vmul.f32 %v820, 0.5
        %v861 = vmul.f32 %v821, 0.5
        %v862 = vmul.f32 %v822, 0.5
        %v863 = vmul.f32 %v823, 0.5
        %v864 = vmul.f32 %v824, 0.5
        %v865 = vmul.f32 %v825, 0.5
        %v866 = vmul.f32 %v826, 0.5
        %v867 = vmul.f32 %v827, 0.5
        %v868 = vsub.f32 %v748, %v860
        %v869 = vsub.f32 %v749, %v861
        %v870 = vsub.f32 %v750, %v862
        %v871 = vsub.f32 %v751, %v863
        %v872 = vsub.f32 %v752, %v864
        %v873 = vsub.f32 %v753, %v865
        %v874 = vsub.f32 %v754, %v866
        %v875 = vsub.f32 %v755, %v867
        %v876 = vadd.f32 %v852, %v868
        %v877 = vadd.f32 %v853, %v869
        %v878 = vadd.f32 %v854, %v870
        %v879 = vadd.f32 %v855, %v871
        %v880 = vadd.f32 %v856, %v872
        %v881 = vadd.f32 %v857, %v873
        %v882 = vadd.f32 %v858, %v874
        %v883 = vadd.f32 %v859, %v875
        %v884 = vmul.f32 %v820, 0.99
        %v885 = vmul.f32 %v821, 0.99
        %v886 = vmul.f32 %v822, 0.99
        %v887 = vmul.f32 %v823, 0.99
        %v888 = vmul.f32 %v824, 0.99
        %v889 = vmul.f32 %v825, 0.99
        %v890 = vmul.f32 %v826, 0.99
        %v891 = vmul.f32 %v827, 0.99
        %v892 = vmul.f32 %v876, 0.002
        %v893 = vmul.f32 %v877, 0.002
        %v894 = vmul.f32 %v878, 0.002
        %v895 = vmul.f32 %v879, 0.002
        %v896 = vmul.f32 %v880, 0.002
        %v897 = vmul.f32 %v881, 0.002
        %v898 = vmul.f32 %v882, 0.002
        %v899 = vmul.f32 %v883, 0.002
        %v900 = vadd.f32 %v884, %v892
        %v901 = vadd.f32 %v885, %v893
        %v902 = vadd.f32 %v886, %v894
        %v903 = vadd.f32 %v887, %v895
        %v904 = vadd.f32 %v888, %v896
        %v905 = vadd.f32 %v889, %v897
        %v906 = vadd.f32 %v890, %v898
        %v907 = vadd.f32 %v891, %v899
        %vm908 = vcmp.gt.f32.partialorder %v876, 30.0
        %vm909 = vcmp.gt.f32.partialorder %v877, 30.0
        %vm910 = vcmp.gt.f32.partialorder %v878, 30.0
        %vm911 = vcmp.gt.f32.partialorder %v879, 30.0
        %vm912 = vcmp.gt.f32.partialorder %v880, 30.0
        %vm913 = vcmp.gt.f32.partialorder %v881, 30.0
        %vm914 = vcmp.gt.f32.partialorder %v882, 30.0
        %vm915 = vcmp.gt.f32.partialorder %v883, 30.0
        %v916 = vsel %vm908, 1.0, 0.0
        %v917 = vsel %vm909, 1.0, 0.0
        %v918 = vsel %vm910, 1.0, 0.0
        %v919 = vsel %vm911, 1.0, 0.0
        %v920 = vsel %vm912, 1.0, 0.0
        %v921 = vsel %vm913, 1.0, 0.0
        %v922 = vsel %vm914, 1.0, 0.0
        %v923 = vsel %vm915, 1.0, 0.0
        %v924 = vadd.f32 %v804, %v916
        %v925 = vadd.f32 %v805, %v917
        %v926 = vadd.f32 %v806, %v918
        %v927 = vadd.f32 %v807, %v919
        %v928 = vadd.f32 %v808, %v920
        %v929 = vadd.f32 %v809, %v921
        %v930 = vadd.f32 %v810, %v922
        %v931 = vadd.f32 %v811, %v923
        %v932 = vsel %vm908, 8.0, 0.0
        %v933 = vsel %vm909, 8.0, 0.0
        %v934 = vsel %vm910, 8.0, 0.0
        %v935 = vsel %vm911, 8.0, 0.0
        %v936 = vsel %vm912, 8.0, 0.0
        %v937 = vsel %vm913, 8.0, 0.0
        %v938 = vsel %vm914, 8.0, 0.0
        %v939 = vsel %vm915, 8.0, 0.0
        %v940 = vadd.f32 %v900, %v932
        %v941 = vadd.f32 %v901, %v933
        %v942 = vadd.f32 %v902, %v934
        %v943 = vadd.f32 %v903, %v935
        %v944 = vadd.f32 %v904, %v936
        %v945 = vadd.f32 %v905, %v937
        %v946 = vadd.f32 %v906, %v938
        %v947 = vadd.f32 %v907, %v939
        %v948 = vsel %vm908, -65.0, %v876
        %v949 = vsel %vm909, -65.0, %v877
        %v950 = vsel %vm910, -65.0, %v878
        %v951 = vsel %vm911, -65.0, %v879
        %v952 = vsel %vm912, -65.0, %v880
        %v953 = vsel %vm913, -65.0, %v881
        %v954 = vsel %vm914, -65.0, %v882
        %v955 = vsel %vm915, -65.0, %v883
        %v956 = vmul.f32 %v948, 0.02
        %v957 = vmul.f32 %v949, 0.02
        %v958 = vmul.f32 %v950, 0.02
        %v959 = vmul.f32 %v951, 0.02
        %v960 = vmul.f32 %v952, 0.02
        %v961 = vmul.f32 %v953, 0.02
        %v962 = vmul.f32 %v954, 0.02
        %v963 = vmul.f32 %v955, 0.02
        %v964 = vadd.f32 %v956, 3.5
        %v965 = vadd.f32 %v957, 3.5
        %v966 = vadd.f32 %v958, 3.5
        %v967 = vadd.f32 %v959, 3.5
        %v968 = vadd.f32 %v960, 3.5
        %v969 = vadd.f32 %v961, 3.5
        %v970 = vadd.f32 %v962, 3.5
        %v971 = vadd.f32 %v963, 3.5
        %v972 = vmul.f32 %v948, %v964
        %v973 = vmul.f32 %v949, %v965
        %v974 = vmul.f32 %v950, %v966
        %v975 = vmul.f32 %v951, %v967
        %v976 = vmul.f32 %v952, %v968
        %v977 = vmul.f32 %v953, %v969
        %v978 = vmul.f32 %v954, %v970
        %v979 = vmul.f32 %v955, %v971
        %v980 = vmul.f32 %v940, 0.5
        %v981 = vmul.f32 %v941, 0.5
        %v982 = vmul.f32 %v942, 0.5
        %v983 = vmul.f32 %v943, 0.5
        %v984 = vmul.f32 %v944, 0.5
        %v985 = vmul.f32 %v945, 0.5
        %v986 = vmul.f32 %v946, 0.5
        %v987 = vmul.f32 %v947, 0.5
        %v988 = vsub.f32 %v748, %v980
        %v989 = vsub.f32 %v749, %v981
        %v990 = vsub.f32 %v750, %v982
        %v991 = vsub.f32 %v751, %v983
        %v992 = vsub.f32 %v752, %v984
        %v993 = vsub.f32 %v753, %v985
        %v994 = vsub.f32 %v754, %v986
        %v995 = vsub.f32 %v755, %v987
        %v996 = vadd.f32 %v972, %v988
        %v997 = vadd.f32 %v973, %v989
        %v998 = vadd.f32 %v974, %v990
        %v999 = vadd.f32 %v975, %v991
        %v1000 = vadd.f32 %v976, %v992
        %v1001 = vadd.f32 %v977, %v993
        %v1002 = vadd.f32 %v978, %v994
        %v1003 = vadd.f32 %v979, %v995
        %v1004 = vmul.f32 %v940, 0.99
        %v1005 = vmul.f32 %v941, 0.99
        %v1006 = vmul.f32 %v942, 0.99
        %v1007 = vmul.f32 %v943, 0.99
        %v1008 = vmul.f32 %v944, 0.99
        %v1009 = vmul.f32 %v945, 0.99
        %v1010 = vmul.f32 %v946, 0.99
        %v1011 = vmul.f32 %v947, 0.99
        %v1012 = vmul.f32 %v996, 0.002
        %v1013 = vmul.f32 %v997, 0.002
        %v1014 = vmul.f32 %v998, 0.002
        %v1015 = vmul.f32 %v999, 0.002
        %v1016 = vmul.f32 %v1000, 0.002
        %v1017 = vmul.f32 %v1001, 0.002
        %v1018 = vmul.f32 %v1002, 0.002
        %v1019 = vmul.f32 %v1003, 0.002
        %v1020 = vadd.f32 %v1004, %v1012
        %v1021 = vadd.f32 %v1005, %v1013
        %v1022 = vadd.f32 %v1006, %v1014
        %v1023 = vadd.f32 %v1007, %v1015
        %v1024 = vadd.f32 %v1008, %v1016
        %v1025 = vadd.f32 %v1009, %v1017
        %v1026 = vadd.f32 %v1010, %v1018
        %v1027 = vadd.f32 %v1011, %v1019
        %vm1028 = vcmp.gt.f32.partialorder %v996, 30.0
        %vm1029 = vcmp.gt.f32.partialorder %v997, 30.0
        %vm1030 = vcmp.gt.f32.partialorder %v998, 30.0
        %vm1031 = vcmp.gt.f32.partialorder %v999, 30.0
        %vm1032 = vcmp.gt.f32.partialorder %v1000, 30.0
        %vm1033 = vcmp.gt.f32.partialorder %v1001, 30.0
        %vm1034 = vcmp.gt.f32.partialorder %v1002, 30.0
        %vm1035 = vcmp.gt.f32.partialorder %v1003, 30.0
        %v1036 = vsel %vm1028, 1.0, 0.0
        %v1037 = vsel %vm1029, 1.0, 0.0
        %v1038 = vsel %vm1030, 1.0, 0.0
        %v1039 = vsel %vm1031, 1.0, 0.0
        %v1040 = vsel %vm1032, 1.0, 0.0
        %v1041 = vsel %vm1033, 1.0, 0.0
        %v1042 = vsel %vm1034, 1.0, 0.0
        %v1043 = vsel %vm1035, 1.0, 0.0
        %v1044 = vadd.f32 %v924, %v1036
        %v1045 = vadd.f32 %v925, %v1037
        %v1046 = vadd.f32 %v926, %v1038
        %v1047 = vadd.f32 %v927, %v1039
        %v1048 = vadd.f32 %v928, %v1040
        %v1049 = vadd.f32 %v929, %v1041
        %v1050 = vadd.f32 %v930, %v1042
        %v1051 = vadd.f32 %v931, %v1043
        %v1052 = vsel %vm1028, 8.0, 0.0
        %v1053 = vsel %vm1029, 8.0, 0.0
        %v1054 = vsel %vm1030, 8.0, 0.0
        %v1055 = vsel %vm1031, 8.0, 0.0
        %v1056 = vsel %vm1032, 8.0, 0.0
        %v1057 = vsel %vm1033, 8.0, 0.0
        %v1058 = vsel %vm1034, 8.0, 0.0
        %v1059 = vsel %vm1035, 8.0, 0.0
        %v1060 = vadd.f32 %v1020, %v1052
        %v1061 = vadd.f32 %v1021, %v1053
        %v1062 = vadd.f32 %v1022, %v1054
        %v1063 = vadd.f32 %v1023, %v1055
        %v1064 = vadd.f32 %v1024, %v1056
        %v1065 = vadd.f32 %v1025, %v1057
        %v1066 = vadd.f32 %v1026, %v1058
        %v1067 = vadd.f32 %v1027, %v1059
        %v1068 = vsel %vm1028, -65.0, %v996
        %v1069 = vsel %vm1029, -65.0, %v997
        %v1070 = vsel %vm1030, -65.0, %v998
        %v1071 = vsel %vm1031, -65.0, %v999
        %v1072 = vsel %vm1032, -65.0, %v1000
        %v1073 = vsel %vm1033, -65.0, %v1001
        %v1074 = vsel %vm1034, -65.0, %v1002
        %v1075 = vsel %vm1035, -65.0, %v1003
        %v1076 = vmul.f32 %v1068, 0.02
        %v1077 = vmul.f32 %v1069, 0.02
        %v1078 = vmul.f32 %v1070, 0.02
        %v1079 = vmul.f32 %v1071, 0.02
        %v1080 = vmul.f32 %v1072, 0.02
        %v1081 = vmul.f32 %v1073, 0.02
        %v1082 = vmul.f32 %v1074, 0.02
        %v1083 = vmul.f32 %v1075, 0.02
        %v1084 = vadd.f32 %v1076, 3.5
        %v1085 = vadd.f32 %v1077, 3.5
        %v1086 = vadd.f32 %v1078, 3.5
        %v1087 = vadd.f32 %v1079, 3.5
        %v1088 = vadd.f32 %v1080, 3.5
        %v1089 = vadd.f32 %v1081, 3.5
        %v1090 = vadd.f32 %v1082, 3.5
        %v1091 = vadd.f32 %v1083, 3.5
        %v1092 = vmul.f32 %v1068, %v1084
        %v1093 = vmul.f32 %v1069, %v1085
        %v1094 = vmul.f32 %v1070, %v1086
        %v1095 = vmul.f32 %v1071, %v1087
        %v1096 = vmul.f32 %v1072, %v1088
        %v1097 = vmul.f32 %v1073, %v1089
        %v1098 = vmul.f32 %v1074, %v1090
        %v1099 = vmul.f32 %v1075, %v1091
        %v1100 = vmul.f32 %v1060, 0.5
        %v1101 = vmul.f32 %v1061, 0.5
        %v1102 = vmul.f32 %v1062, 0.5
        %v1103 = vmul.f32 %v1063, 0.5
        %v1104 = vmul.f32 %v1064, 0.5
        %v1105 = vmul.f32 %v1065, 0.5
        %v1106 = vmul.f32 %v1066, 0.5
        %v1107 = vmul.f32 %v1067, 0.5
        %v1108 = vsub.f32 %v748, %v1100
        %v1109 = vsub.f32 %v749, %v1101
        %v1110 = vsub.f32 %v750, %v1102
        %v1111 = vsub.f32 %v751, %v1103
        %v1112 = vsub.f32 %v752, %v1104
        %v1113 = vsub.f32 %v753, %v1105
        %v1114 = vsub.f32 %v754, %v1106
        %v1115 = vsub.f32 %v755, %v1107
        %v1116 = vadd.f32 %v1092, %v1108
        %v1117 = vadd.f32 %v1093, %v1109
        %v1118 = vadd.f32 %v1094, %v1110
        %v1119 = vadd.f32 %v1095, %v1111
        %v1120 = vadd.f32 %v1096, %v1112
        %v1121 = vadd.f32 %v1097, %v1113
        %v1122 = vadd.f32 %v1098, %v1114
        %v1123 = vadd.f32 %v1099, %v1115
        %v1124 = vmul.f32 %v1060, 0.99
        %v1125 = vmul.f32 %v1061, 0.99
        %v1126 = vmul.f32 %v1062, 0.99
        %v1127 = vmul.f32 %v1063, 0.99
        %v1128 = vmul.f32 %v1064, 0.99
        %v1129 = vmul.f32 %v1065, 0.99
        %v1130 = vmul.f32 %v1066, 0.99
        %v1131 = vmul.f32 %v1067, 0.99
        %v1132 = vmul.f32 %v1116, 0.002
        %v1133 = vmul.f32 %v1117, 0.002
        %v1134 = vmul.f32 %v1118, 0.002
        %v1135 = vmul.f32 %v1119, 0.002
        %v1136 = vmul.f32 %v1120, 0.002
        %v1137 = vmul.f32 %v1121, 0.002
        %v1138 = vmul.f32 %v1122, 0.002
        %v1139 = vmul.f32 %v1123, 0.002
        %v1140 = vadd.f32 %v1124, %v1132
        %v1141 = vadd.f32 %v1125, %v1133
        %v1142 = vadd.f32 %v1126, %v1134
        %v1143 = vadd.f32 %v1127, %v1135
        %v1144 = vadd.f32 %v1128, %v1136
        %v1145 = vadd.f32 %v1129, %v1137
        %v1146 = vadd.f32 %v1130, %v1138
        %v1147 = vadd.f32 %v1131, %v1139
        %vm1148 = vcmp.gt.f32.partialorder %v1116, 30.0
        %vm1149 = vcmp.gt.f32.partialorder %v1117, 30.0
        %vm1150 = vcmp.gt.f32.partialorder %v1118, 30.0
        %vm1151 = vcmp.gt.f32.partialorder %v1119, 30.0
        %vm1152 = vcmp.gt.f32.partialorder %v1120, 30.0
        %vm1153 = vcmp.gt.f32.partialorder %v1121, 30.0
        %vm1154 = vcmp.gt.f32.partialorder %v1122, 30.0
        %vm1155 = vcmp.gt.f32.partialorder %v1123, 30.0
        %v1156 = vsel %vm1148, 1.0, 0.0
        %v1157 = vsel %vm1149, 1.0, 0.0
        %v1158 = vsel %vm1150, 1.0, 0.0
        %v1159 = vsel %vm1151, 1.0, 0.0
        %v1160 = vsel %vm1152, 1.0, 0.0
        %v1161 = vsel %vm1153, 1.0, 0.0
        %v1162 = vsel %vm1154, 1.0, 0.0
        %v1163 = vsel %vm1155, 1.0, 0.0
        %v1164 = vadd.f32 %v1044, %v1156
        %v1165 = vadd.f32 %v1045, %v1157
        %v1166 = vadd.f32 %v1046, %v1158
        %v1167 = vadd.f32 %v1047, %v1159
        %v1168 = vadd.f32 %v1048, %v1160
        %v1169 = vadd.f32 %v1049, %v1161
        %v1170 = vadd.f32 %v1050, %v1162
        %v1171 = vadd.f32 %v1051, %v1163
        %v1172 = vsel %vm1148, 8.0, 0.0
        %v1173 = vsel %vm1149, 8.0, 0.0
        %v1174 = vsel %vm1150, 8.0, 0.0
        %v1175 = vsel %vm1151, 8.0, 0.0
        %v1176 = vsel %vm1152, 8.0, 0.0
        %v1177 = vsel %vm1153, 8.0, 0.0
        %v1178 = vsel %vm1154, 8.0, 0.0
        %v1179 = vsel %vm1155, 8.0, 0.0
        %v1180 = vadd.f32 %v1140, %v1172
        %v1181 = vadd.f32 %v1141, %v1173
        %v1182 = vadd.f32 %v1142, %v1174
        %v1183 = vadd.f32 %v1143, %v1175
        %v1184 = vadd.f32 %v1144, %v1176
        %v1185 = vadd.f32 %v1145, %v1177
        %v1186 = vadd.f32 %v1146, %v1178
        %v1187 = vadd.f32 %v1147, %v1179
        %v1188 = vsel %vm1148, -65.0, %v1116
        %v1189 = vsel %vm1149, -65.0, %v1117
        %v1190 = vsel %vm1150, -65.0, %v1118
        %v1191 = vsel %vm1151, -65.0, %v1119
        %v1192 = vsel %vm1152, -65.0, %v1120
        %v1193 = vsel %vm1153, -65.0, %v1121
        %v1194 = vsel %vm1154, -65.0, %v1122
        %v1195 = vsel %vm1155, -65.0, %v1123
        %v1196 = vmul.f32 %v1188, 0.02
        %v1197 = vmul.f32 %v1189, 0.02
        %v1198 = vmul.f32 %v1190, 0.02
        %v1199 = vmul.f32 %v1191, 0.02
        %v1200 = vmul.f32 %v1192, 0.02
        %v1201 = vmul.f32 %v1193, 0.02
        %v1202 = vmul.f32 %v1194, 0.02
        %v1203 = vmul.f32 %v1195, 0.02
        %v1204 = vadd.f32 %v1196, 3.5
        %v1205 = vadd.f32 %v1197, 3.5
        %v1206 = vadd.f32 %v1198, 3.5
        %v1207 = vadd.f32 %v1199, 3.5
        %v1208 = vadd.f32 %v1200, 3.5
        %v1209 = vadd.f32 %v1201, 3.5
        %v1210 = vadd.f32 %v1202, 3.5
        %v1211 = vadd.f32 %v1203, 3.5
        %v1212 = vmul.f32 %v1188, %v1204
        %v1213 = vmul.f32 %v1189, %v1205
        %v1214 = vmul.f32 %v1190, %v1206
        %v1215 = vmul.f32 %v1191, %v1207
        %v1216 = vmul.f32 %v1192, %v1208
        %v1217 = vmul.f32 %v1193, %v1209
        %v1218 = vmul.f32 %v1194, %v1210
        %v1219 = vmul.f32 %v1195, %v1211
        %v1220 = vmul.f32 %v1180, 0.5
        %v1221 = vmul.f32 %v1181, 0.5
        %v1222 = vmul.f32 %v1182, 0.5
        %v1223 = vmul.f32 %v1183, 0.5
        %v1224 = vmul.f32 %v1184, 0.5
        %v1225 = vmul.f32 %v1185, 0.5
        %v1226 = vmul.f32 %v1186, 0.5
        %v1227 = vmul.f32 %v1187, 0.5
        %v1228 = vsub.f32 %v748, %v1220
        %v1229 = vsub.f32 %v749, %v1221
        %v1230 = vsub.f32 %v750, %v1222
        %v1231 = vsub.f32 %v751, %v1223
        %v1232 = vsub.f32 %v752, %v1224
        %v1233 = vsub.f32 %v753, %v1225
        %v1234 = vsub.f32 %v754, %v1226
        %v1235 = vsub.f32 %v755, %v1227
        %v1236 = vadd.f32 %v1212, %v1228
        %v1237 = vadd.f32 %v1213, %v1229
        %v1238 = vadd.f32 %v1214, %v1230
        %v1239 = vadd.f32 %v1215, %v1231
        %v1240 = vadd.f32 %v1216, %v1232
        %v1241 = vadd.f32 %v1217, %v1233
        %v1242 = vadd.f32 %v1218, %v1234
        %v1243 = vadd.f32 %v1219, %v1235
        %v1244 = vmul.f32 %v1180, 0.99
        %v1245 = vmul.f32 %v1181, 0.99
        %v1246 = vmul.f32 %v1182, 0.99
        %v1247 = vmul.f32 %v1183, 0.99
        %v1248 = vmul.f32 %v1184, 0.99
        %v1249 = vmul.f32 %v1185, 0.99
        %v1250 = vmul.f32 %v1186, 0.99
        %v1251 = vmul.f32 %v1187, 0.99
        %v1252 = vmul.f32 %v1236, 0.002
        %v1253 = vmul.f32 %v1237, 0.002
        %v1254 = vmul.f32 %v1238, 0.002
        %v1255 = vmul.f32 %v1239, 0.002
        %v1256 = vmul.f32 %v1240, 0.002
        %v1257 = vmul.f32 %v1241, 0.002
        %v1258 = vmul.f32 %v1242, 0.002
        %v1259 = vmul.f32 %v1243, 0.002
        %v1260 = vadd.f32 %v1244, %v1252
        %v1261 = vadd.f32 %v1245, %v1253
        %v1262 = vadd.f32 %v1246, %v1254
        %v1263 = vadd.f32 %v1247, %v1255
        %v1264 = vadd.f32 %v1248, %v1256
        %v1265 = vadd.f32 %v1249, %v1257
        %v1266 = vadd.f32 %v1250, %v1258
        %v1267 = vadd.f32 %v1251, %v1259
        %vm1268 = vcmp.gt.f32.partialorder %v1236, 30.0
        %vm1269 = vcmp.gt.f32.partialorder %v1237, 30.0
        %vm1270 = vcmp.gt.f32.partialorder %v1238, 30.0
        %vm1271 = vcmp.gt.f32.partialorder %v1239, 30.0
        %vm1272 = vcmp.gt.f32.partialorder %v1240, 30.0
        %vm1273 = vcmp.gt.f32.partialorder %v1241, 30.0
        %vm1274 = vcmp.gt.f32.partialorder %v1242, 30.0
        %vm1275 = vcmp.gt.f32.partialorder %v1243, 30.0
        %v1276 = vsel %vm1268, 1.0, 0.0
        %v1277 = vsel %vm1269, 1.0, 0.0
        %v1278 = vsel %vm1270, 1.0, 0.0
        %v1279 = vsel %vm1271, 1.0, 0.0
        %v1280 = vsel %vm1272, 1.0, 0.0
        %v1281 = vsel %vm1273, 1.0, 0.0
        %v1282 = vsel %vm1274, 1.0, 0.0
        %v1283 = vsel %vm1275, 1.0, 0.0
        %v1284 = vadd.f32 %v1164, %v1276
        %v1285 = vadd.f32 %v1165, %v1277
        %v1286 = vadd.f32 %v1166, %v1278
        %v1287 = vadd.f32 %v1167, %v1279
        %v1288 = vadd.f32 %v1168, %v1280
        %v1289 = vadd.f32 %v1169, %v1281
        %v1290 = vadd.f32 %v1170, %v1282
        %v1291 = vadd.f32 %v1171, %v1283
        %v1292 = vsel %vm1268, 8.0, 0.0
        %v1293 = vsel %vm1269, 8.0, 0.0
        %v1294 = vsel %vm1270, 8.0, 0.0
        %v1295 = vsel %vm1271, 8.0, 0.0
        %v1296 = vsel %vm1272, 8.0, 0.0
        %v1297 = vsel %vm1273, 8.0, 0.0
        %v1298 = vsel %vm1274, 8.0, 0.0
        %v1299 = vsel %vm1275, 8.0, 0.0
        %v1300 = vadd.f32 %v1260, %v1292
        %v1301 = vadd.f32 %v1261, %v1293
        %v1302 = vadd.f32 %v1262, %v1294
        %v1303 = vadd.f32 %v1263, %v1295
        %v1304 = vadd.f32 %v1264, %v1296
        %v1305 = vadd.f32 %v1265, %v1297
        %v1306 = vadd.f32 %v1266, %v1298
        %v1307 = vadd.f32 %v1267, %v1299
        %v1308 = vsel %vm1268, -65.0, %v1236
        %v1309 = vsel %vm1269, -65.0, %v1237
        %v1310 = vsel %vm1270, -65.0, %v1238
        %v1311 = vsel %vm1271, -65.0, %v1239
        %v1312 = vsel %vm1272, -65.0, %v1240
        %v1313 = vsel %vm1273, -65.0, %v1241
        %v1314 = vsel %vm1274, -65.0, %v1242
        %v1315 = vsel %vm1275, -65.0, %v1243
        %v1316 = vmul.f32 %v1308, 0.02
        %v1317 = vmul.f32 %v1309, 0.02
        %v1318 = vmul.f32 %v1310, 0.02
        %v1319 = vmul.f32 %v1311, 0.02
        %v1320 = vmul.f32 %v1312, 0.02
        %v1321 = vmul.f32 %v1313, 0.02
        %v1322 = vmul.f32 %v1314, 0.02
        %v1323 = vmul.f32 %v1315, 0.02
        %v1324 = vadd.f32 %v1316, 3.5
        %v1325 = vadd.f32 %v1317, 3.5
        %v1326 = vadd.f32 %v1318, 3.5
        %v1327 = vadd.f32 %v1319, 3.5
        %v1328 = vadd.f32 %v1320, 3.5
        %v1329 = vadd.f32 %v1321, 3.5
        %v1330 = vadd.f32 %v1322, 3.5
        %v1331 = vadd.f32 %v1323, 3.5
        %v1332 = vmul.f32 %v1308, %v1324
        %v1333 = vmul.f32 %v1309, %v1325
        %v1334 = vmul.f32 %v1310, %v1326
        %v1335 = vmul.f32 %v1311, %v1327
        %v1336 = vmul.f32 %v1312, %v1328
        %v1337 = vmul.f32 %v1313, %v1329
        %v1338 = vmul.f32 %v1314, %v1330
        %v1339 = vmul.f32 %v1315, %v1331
        %v1340 = vmul.f32 %v1300, 0.5
        %v1341 = vmul.f32 %v1301, 0.5
        %v1342 = vmul.f32 %v1302, 0.5
        %v1343 = vmul.f32 %v1303, 0.5
        %v1344 = vmul.f32 %v1304, 0.5
        %v1345 = vmul.f32 %v1305, 0.5
        %v1346 = vmul.f32 %v1306, 0.5
        %v1347 = vmul.f32 %v1307, 0.5
        %v1348 = vsub.f32 %v748, %v1340
        %v1349 = vsub.f32 %v749, %v1341
        %v1350 = vsub.f32 %v750, %v1342
        %v1351 = vsub.f32 %v751, %v1343
        %v1352 = vsub.f32 %v752, %v1344
        %v1353 = vsub.f32 %v753, %v1345
        %v1354 = vsub.f32 %v754, %v1346
        %v1355 = vsub.f32 %v755, %v1347
        %v1356 = vadd.f32 %v1332, %v1348
        %v1357 = vadd.f32 %v1333, %v1349
        %v1358 = vadd.f32 %v1334, %v1350
        %v1359 = vadd.f32 %v1335, %v1351
        %v1360 = vadd.f32 %v1336, %v1352
        %v1361 = vadd.f32 %v1337, %v1353
        %v1362 = vadd.f32 %v1338, %v1354
        %v1363 = vadd.f32 %v1339, %v1355
        %v1364 = vmul.f32 %v1300, 0.99
        %v1365 = vmul.f32 %v1301, 0.99
        %v1366 = vmul.f32 %v1302, 0.99
        %v1367 = vmul.f32 %v1303, 0.99
        %v1368 = vmul.f32 %v1304, 0.99
        %v1369 = vmul.f32 %v1305, 0.99
        %v1370 = vmul.f32 %v1306, 0.99
        %v1371 = vmul.f32 %v1307, 0.99
        %v1372 = vmul.f32 %v1356, 0.002
        %v1373 = vmul.f32 %v1357, 0.002
        %v1374 = vmul.f32 %v1358, 0.002
        %v1375 = vmul.f32 %v1359, 0.002
        %v1376 = vmul.f32 %v1360, 0.002
        %v1377 = vmul.f32 %v1361, 0.002
        %v1378 = vmul.f32 %v1362, 0.002
        %v1379 = vmul.f32 %v1363, 0.002
        %v1380 = vadd.f32 %v1364, %v1372
        %v1381 = vadd.f32 %v1365, %v1373
        %v1382 = vadd.f32 %v1366, %v1374
        %v1383 = vadd.f32 %v1367, %v1375
        %v1384 = vadd.f32 %v1368, %v1376
        %v1385 = vadd.f32 %v1369, %v1377
        %v1386 = vadd.f32 %v1370, %v1378
        %v1387 = vadd.f32 %v1371, %v1379
        %vm1388 = vcmp.gt.f32.partialorder %v1356, 30.0
        %vm1389 = vcmp.gt.f32.partialorder %v1357, 30.0
        %vm1390 = vcmp.gt.f32.partialorder %v1358, 30.0
        %vm1391 = vcmp.gt.f32.partialorder %v1359, 30.0
        %vm1392 = vcmp.gt.f32.partialorder %v1360, 30.0
        %vm1393 = vcmp.gt.f32.partialorder %v1361, 30.0
        %vm1394 = vcmp.gt.f32.partialorder %v1362, 30.0
        %vm1395 = vcmp.gt.f32.partialorder %v1363, 30.0
        %v1396 = vsel %vm1388, 1.0, 0.0
        %v1397 = vsel %vm1389, 1.0, 0.0
        %v1398 = vsel %vm1390, 1.0, 0.0
        %v1399 = vsel %vm1391, 1.0, 0.0
        %v1400 = vsel %vm1392, 1.0, 0.0
        %v1401 = vsel %vm1393, 1.0, 0.0
        %v1402 = vsel %vm1394, 1.0, 0.0
        %v1403 = vsel %vm1395, 1.0, 0.0
        %v1404 = vadd.f32 %v1284, %v1396
        %v1405 = vadd.f32 %v1285, %v1397
        %v1406 = vadd.f32 %v1286, %v1398
        %v1407 = vadd.f32 %v1287, %v1399
        %v1408 = vadd.f32 %v1288, %v1400
        %v1409 = vadd.f32 %v1289, %v1401
        %v1410 = vadd.f32 %v1290, %v1402
        %v1411 = vadd.f32 %v1291, %v1403
        %v1412 = vsel %vm1388, 8.0, 0.0
        %v1413 = vsel %vm1389, 8.0, 0.0
        %v1414 = vsel %vm1390, 8.0, 0.0
        %v1415 = vsel %vm1391, 8.0, 0.0
        %v1416 = vsel %vm1392, 8.0, 0.0
        %v1417 = vsel %vm1393, 8.0, 0.0
        %v1418 = vsel %vm1394, 8.0, 0.0
        %v1419 = vsel %vm1395, 8.0, 0.0
        %v1420 = vadd.f32 %v1380, %v1412
        %v1421 = vadd.f32 %v1381, %v1413
        %v1422 = vadd.f32 %v1382, %v1414
        %v1423 = vadd.f32 %v1383, %v1415
        %v1424 = vadd.f32 %v1384, %v1416
        %v1425 = vadd.f32 %v1385, %v1417
        %v1426 = vadd.f32 %v1386, %v1418
        %v1427 = vadd.f32 %v1387, %v1419
        %v1428 = vsel %vm1388, -65.0, %v1356
        %v1429 = vsel %vm1389, -65.0, %v1357
        %v1430 = vsel %vm1390, -65.0, %v1358
        %v1431 = vsel %vm1391, -65.0, %v1359
        %v1432 = vsel %vm1392, -65.0, %v1360
        %v1433 = vsel %vm1393, -65.0, %v1361
        %v1434 = vsel %vm1394, -65.0, %v1362
        %v1435 = vsel %vm1395, -65.0, %v1363
        %v1436 = vmul.f32 %v1428, 0.02
        %v1437 = vmul.f32 %v1429, 0.02
        %v1438 = vmul.f32 %v1430, 0.02
        %v1439 = vmul.f32 %v1431, 0.02
        %v1440 = vmul.f32 %v1432, 0.02
        %v1441 = vmul.f32 %v1433, 0.02
        %v1442 = vmul.f32 %v1434, 0.02
        %v1443 = vmul.f32 %v1435, 0.02
        %v1444 = vadd.f32 %v1436, 3.5
        %v1445 = vadd.f32 %v1437, 3.5
        %v1446 = vadd.f32 %v1438, 3.5
        %v1447 = vadd.f32 %v1439, 3.5
        %v1448 = vadd.f32 %v1440, 3.5
        %v1449 = vadd.f32 %v1441, 3.5
        %v1450 = vadd.f32 %v1442, 3.5
        %v1451 = vadd.f32 %v1443, 3.5
        %v1452 = vmul.f32 %v1428, %v1444
        %v1453 = vmul.f32 %v1429, %v1445
        %v1454 = vmul.f32 %v1430, %v1446
        %v1455 = vmul.f32 %v1431, %v1447
        %v1456 = vmul.f32 %v1432, %v1448
        %v1457 = vmul.f32 %v1433, %v1449
        %v1458 = vmul.f32 %v1434, %v1450
        %v1459 = vmul.f32 %v1435, %v1451
        %v1460 = vmul.f32 %v1420, 0.5
        %v1461 = vmul.f32 %v1421, 0.5
        %v1462 = vmul.f32 %v1422, 0.5
        %v1463 = vmul.f32 %v1423, 0.5
        %v1464 = vmul.f32 %v1424, 0.5
        %v1465 = vmul.f32 %v1425, 0.5
        %v1466 = vmul.f32 %v1426, 0.5
        %v1467 = vmul.f32 %v1427, 0.5
        %v1468 = vsub.f32 %v748, %v1460
        %v1469 = vsub.f32 %v749, %v1461
        %v1470 = vsub.f32 %v750, %v1462
        %v1471 = vsub.f32 %v751, %v1463
        %v1472 = vsub.f32 %v752, %v1464
        %v1473 = vsub.f32 %v753, %v1465
        %v1474 = vsub.f32 %v754, %v1466
        %v1475 = vsub.f32 %v755, %v1467
        %v1476 = vadd.f32 %v1452, %v1468
        %v1477 = vadd.f32 %v1453, %v1469
        %v1478 = vadd.f32 %v1454, %v1470
        %v1479 = vadd.f32 %v1455, %v1471
        %v1480 = vadd.f32 %v1456, %v1472
        %v1481 = vadd.f32 %v1457, %v1473
        %v1482 = vadd.f32 %v1458, %v1474
        %v1483 = vadd.f32 %v1459, %v1475
        %v1484 = vmul.f32 %v1420, 0.99
        %v1485 = vmul.f32 %v1421, 0.99
        %v1486 = vmul.f32 %v1422, 0.99
        %v1487 = vmul.f32 %v1423, 0.99
        %v1488 = vmul.f32 %v1424, 0.99
        %v1489 = vmul.f32 %v1425, 0.99
        %v1490 = vmul.f32 %v1426, 0.99
        %v1491 = vmul.f32 %v1427, 0.99
        %v1492 = vmul.f32 %v1476, 0.002
        %v1493 = vmul.f32 %v1477, 0.002
        %v1494 = vmul.f32 %v1478, 0.002
        %v1495 = vmul.f32 %v1479, 0.002
        %v1496 = vmul.f32 %v1480, 0.002
        %v1497 = vmul.f32 %v1481, 0.002
        %v1498 = vmul.f32 %v1482, 0.002
        %v1499 = vmul.f32 %v1483, 0.002
        %v1500 = vadd.f32 %v1484, %v1492
        %v1501 = vadd.f32 %v1485, %v1493
        %v1502 = vadd.f32 %v1486, %v1494
        %v1503 = vadd.f32 %v1487, %v1495
        %v1504 = vadd.f32 %v1488, %v1496
        %v1505 = vadd.f32 %v1489, %v1497
        %v1506 = vadd.f32 %v1490, %v1498
        %v1507 = vadd.f32 %v1491, %v1499
        %vm1508 = vcmp.gt.f32.partialorder %v1476, 30.0
        %vm1509 = vcmp.gt.f32.partialorder %v1477, 30.0
        %vm1510 = vcmp.gt.f32.partialorder %v1478, 30.0
        %vm1511 = vcmp.gt.f32.partialorder %v1479, 30.0
        %vm1512 = vcmp.gt.f32.partialorder %v1480, 30.0
        %vm1513 = vcmp.gt.f32.partialorder %v1481, 30.0
        %vm1514 = vcmp.gt.f32.partialorder %v1482, 30.0
        %vm1515 = vcmp.gt.f32.partialorder %v1483, 30.0
        %v1516 = vsel %vm1508, 1.0, 0.0
        %v1517 = vsel %vm1509, 1.0, 0.0
        %v1518 = vsel %vm1510, 1.0, 0.0
        %v1519 = vsel %vm1511, 1.0, 0.0
        %v1520 = vsel %vm1512, 1.0, 0.0
        %v1521 = vsel %vm1513, 1.0, 0.0
        %v1522 = vsel %vm1514, 1.0, 0.0
        %v1523 = vsel %vm1515, 1.0, 0.0
        %v1524 = vadd.f32 %v1404, %v1516
        %v1525 = vadd.f32 %v1405, %v1517
        %v1526 = vadd.f32 %v1406, %v1518
        %v1527 = vadd.f32 %v1407, %v1519
        %v1528 = vadd.f32 %v1408, %v1520
        %v1529 = vadd.f32 %v1409, %v1521
        %v1530 = vadd.f32 %v1410, %v1522
        %v1531 = vadd.f32 %v1411, %v1523
        %v1532 = vsel %vm1508, 8.0, 0.0
        %v1533 = vsel %vm1509, 8.0, 0.0
        %v1534 = vsel %vm1510, 8.0, 0.0
        %v1535 = vsel %vm1511, 8.0, 0.0
        %v1536 = vsel %vm1512, 8.0, 0.0
        %v1537 = vsel %vm1513, 8.0, 0.0
        %v1538 = vsel %vm1514, 8.0, 0.0
        %v1539 = vsel %vm1515, 8.0, 0.0
        %v1540 = vadd.f32 %v1500, %v1532
        %v1541 = vadd.f32 %v1501, %v1533
        %v1542 = vadd.f32 %v1502, %v1534
        %v1543 = vadd.f32 %v1503, %v1535
        %v1544 = vadd.f32 %v1504, %v1536
        %v1545 = vadd.f32 %v1505, %v1537
        %v1546 = vadd.f32 %v1506, %v1538
        %v1547 = vadd.f32 %v1507, %v1539
        %v1548 = vsel %vm1508, -65.0, %v1476
        %v1549 = vsel %vm1509, -65.0, %v1477
        %v1550 = vsel %vm1510, -65.0, %v1478
        %v1551 = vsel %vm1511, -65.0, %v1479
        %v1552 = vsel %vm1512, -65.0, %v1480
        %v1553 = vsel %vm1513, -65.0, %v1481
        %v1554 = vsel %vm1514, -65.0, %v1482
        %v1555 = vsel %vm1515, -65.0, %v1483
        %v1556 = vmul.f32 %v1548, 0.02
        %v1557 = vmul.f32 %v1549, 0.02
        %v1558 = vmul.f32 %v1550, 0.02
        %v1559 = vmul.f32 %v1551, 0.02
        %v1560 = vmul.f32 %v1552, 0.02
        %v1561 = vmul.f32 %v1553, 0.02
        %v1562 = vmul.f32 %v1554, 0.02
        %v1563 = vmul.f32 %v1555, 0.02
        %v1564 = vadd.f32 %v1556, 3.5
        %v1565 = vadd.f32 %v1557, 3.5
        %v1566 = vadd.f32 %v1558, 3.5
        %v1567 = vadd.f32 %v1559, 3.5
        %v1568 = vadd.f32 %v1560, 3.5
        %v1569 = vadd.f32 %v1561, 3.5
        %v1570 = vadd.f32 %v1562, 3.5
        %v1571 = vadd.f32 %v1563, 3.5
        %v1572 = vmul.f32 %v1548, %v1564
        %v1573 = vmul.f32 %v1549, %v1565
        %v1574 = vmul.f32 %v1550, %v1566
        %v1575 = vmul.f32 %v1551, %v1567
        %v1576 = vmul.f32 %v1552, %v1568
        %v1577 = vmul.f32 %v1553, %v1569
        %v1578 = vmul.f32 %v1554, %v1570
        %v1579 = vmul.f32 %v1555, %v1571
        %v1580 = vmul.f32 %v1540, 0.5
        %v1581 = vmul.f32 %v1541, 0.5
        %v1582 = vmul.f32 %v1542, 0.5
        %v1583 = vmul.f32 %v1543, 0.5
        %v1584 = vmul.f32 %v1544, 0.5
        %v1585 = vmul.f32 %v1545, 0.5
        %v1586 = vmul.f32 %v1546, 0.5
        %v1587 = vmul.f32 %v1547, 0.5
        %v1588 = vsub.f32 %v748, %v1580
        %v1589 = vsub.f32 %v749, %v1581
        %v1590 = vsub.f32 %v750, %v1582
        %v1591 = vsub.f32 %v751, %v1583
        %v1592 = vsub.f32 %v752, %v1584
        %v1593 = vsub.f32 %v753, %v1585
        %v1594 = vsub.f32 %v754, %v1586
        %v1595 = vsub.f32 %v755, %v1587
        %v1596 = vadd.f32 %v1572, %v1588
        %v1597 = vadd.f32 %v1573, %v1589
        %v1598 = vadd.f32 %v1574, %v1590
        %v1599 = vadd.f32 %v1575, %v1591
        %v1600 = vadd.f32 %v1576, %v1592
        %v1601 = vadd.f32 %v1577, %v1593
        %v1602 = vadd.f32 %v1578, %v1594
        %v1603 = vadd.f32 %v1579, %v1595
        %v1604 = vmul.f32 %v1540, 0.99
        %v1605 = vmul.f32 %v1541, 0.99
        %v1606 = vmul.f32 %v1542, 0.99
        %v1607 = vmul.f32 %v1543, 0.99
        %v1608 = vmul.f32 %v1544, 0.99
        %v1609 = vmul.f32 %v1545, 0.99
        %v1610 = vmul.f32 %v1546, 0.99
        %v1611 = vmul.f32 %v1547, 0.99
        %v1612 = vmul.f32 %v1596, 0.002
        %v1613 = vmul.f32 %v1597, 0.002
        %v1614 = vmul.f32 %v1598, 0.002
        %v1615 = vmul.f32 %v1599, 0.002
        %v1616 = vmul.f32 %v1600, 0.002
        %v1617 = vmul.f32 %v1601, 0.002
        %v1618 = vmul.f32 %v1602, 0.002
        %v1619 = vmul.f32 %v1603, 0.002
        %v1620 = vadd.f32 %v1604, %v1612
        %v1621 = vadd.f32 %v1605, %v1613
        %v1622 = vadd.f32 %v1606, %v1614
        %v1623 = vadd.f32 %v1607, %v1615
        %v1624 = vadd.f32 %v1608, %v1616
        %v1625 = vadd.f32 %v1609, %v1617
        %v1626 = vadd.f32 %v1610, %v1618
        %v1627 = vadd.f32 %v1611, %v1619
        %vm1628 = vcmp.gt.f32.partialorder %v1596, 30.0
        %vm1629 = vcmp.gt.f32.partialorder %v1597, 30.0
        %vm1630 = vcmp.gt.f32.partialorder %v1598, 30.0
        %vm1631 = vcmp.gt.f32.partialorder %v1599, 30.0
        %vm1632 = vcmp.gt.f32.partialorder %v1600, 30.0
        %vm1633 = vcmp.gt.f32.partialorder %v1601, 30.0
        %vm1634 = vcmp.gt.f32.partialorder %v1602, 30.0
        %vm1635 = vcmp.gt.f32.partialorder %v1603, 30.0
        %v1636 = vsel %vm1628, 1.0, 0.0
        %v1637 = vsel %vm1629, 1.0, 0.0
        %v1638 = vsel %vm1630, 1.0, 0.0
        %v1639 = vsel %vm1631, 1.0, 0.0
        %v1640 = vsel %vm1632, 1.0, 0.0
        %v1641 = vsel %vm1633, 1.0, 0.0
        %v1642 = vsel %vm1634, 1.0, 0.0
        %v1643 = vsel %vm1635, 1.0, 0.0
        %v1644 = vadd.f32 %v1524, %v1636
        %v1645 = vadd.f32 %v1525, %v1637
        %v1646 = vadd.f32 %v1526, %v1638
        %v1647 = vadd.f32 %v1527, %v1639
        %v1648 = vadd.f32 %v1528, %v1640
        %v1649 = vadd.f32 %v1529, %v1641
        %v1650 = vadd.f32 %v1530, %v1642
        %v1651 = vadd.f32 %v1531, %v1643
        %v1652 = vsel %vm1628, 8.0, 0.0
        %v1653 = vsel %vm1629, 8.0, 0.0
        %v1654 = vsel %vm1630, 8.0, 0.0
        %v1655 = vsel %vm1631, 8.0, 0.0
        %v1656 = vsel %vm1632, 8.0, 0.0
        %v1657 = vsel %vm1633, 8.0, 0.0
        %v1658 = vsel %vm1634, 8.0, 0.0
        %v1659 = vsel %vm1635, 8.0, 0.0
        %v1660 = vadd.f32 %v1620, %v1652
        %v1661 = vadd.f32 %v1621, %v1653
        %v1662 = vadd.f32 %v1622, %v1654
        %v1663 = vadd.f32 %v1623, %v1655
        %v1664 = vadd.f32 %v1624, %v1656
        %v1665 = vadd.f32 %v1625, %v1657
        %v1666 = vadd.f32 %v1626, %v1658
        %v1667 = vadd.f32 %v1627, %v1659
        %v1668 = vsel %vm1628, -65.0, %v1596
        %v1669 = vsel %vm1629, -65.0, %v1597
        %v1670 = vsel %vm1630, -65.0, %v1598
        %v1671 = vsel %vm1631, -65.0, %v1599
        %v1672 = vsel %vm1632, -65.0, %v1600
        %v1673 = vsel %vm1633, -65.0, %v1601
        %v1674 = vsel %vm1634, -65.0, %v1602
        %v1675 = vsel %vm1635, -65.0, %v1603
        %v1676 = vmul.f32 %v1668, 0.02
        %v1677 = vmul.f32 %v1669, 0.02
        %v1678 = vmul.f32 %v1670, 0.02
        %v1679 = vmul.f32 %v1671, 0.02
        %v1680 = vmul.f32 %v1672, 0.02
        %v1681 = vmul.f32 %v1673, 0.02
        %v1682 = vmul.f32 %v1674, 0.02
        %v1683 = vmul.f32 %v1675, 0.02
        %v1684 = vadd.f32 %v1676, 3.5
        %v1685 = vadd.f32 %v1677, 3.5
        %v1686 = vadd.f32 %v1678, 3.5
        %v1687 = vadd.f32 %v1679, 3.5
        %v1688 = vadd.f32 %v1680, 3.5
        %v1689 = vadd.f32 %v1681, 3.5
        %v1690 = vadd.f32 %v1682, 3.5
        %v1691 = vadd.f32 %v1683, 3.5
        %v1692 = vmul.f32 %v1668, %v1684
        %v1693 = vmul.f32 %v1669, %v1685
        %v1694 = vmul.f32 %v1670, %v1686
        %v1695 = vmul.f32 %v1671, %v1687
        %v1696 = vmul.f32 %v1672, %v1688
        %v1697 = vmul.f32 %v1673, %v1689
        %v1698 = vmul.f32 %v1674, %v1690
        %v1699 = vmul.f32 %v1675, %v1691
        %v1700 = vmul.f32 %v1660, 0.5
        %v1701 = vmul.f32 %v1661, 0.5
        %v1702 = vmul.f32 %v1662, 0.5
        %v1703 = vmul.f32 %v1663, 0.5
        %v1704 = vmul.f32 %v1664, 0.5
        %v1705 = vmul.f32 %v1665, 0.5
        %v1706 = vmul.f32 %v1666, 0.5
        %v1707 = vmul.f32 %v1667, 0.5
        %v1708 = vsub.f32 %v748, %v1700
        %v1709 = vsub.f32 %v749, %v1701
        %v1710 = vsub.f32 %v750, %v1702
        %v1711 = vsub.f32 %v751, %v1703
        %v1712 = vsub.f32 %v752, %v1704
        %v1713 = vsub.f32 %v753, %v1705
        %v1714 = vsub.f32 %v754, %v1706
        %v1715 = vsub.f32 %v755, %v1707
        %v1716 = vadd.f32 %v1692, %v1708
        %v1717 = vadd.f32 %v1693, %v1709
        %v1718 = vadd.f32 %v1694, %v1710
        %v1719 = vadd.f32 %v1695, %v1711
        %v1720 = vadd.f32 %v1696, %v1712
        %v1721 = vadd.f32 %v1697, %v1713
        %v1722 = vadd.f32 %v1698, %v1714
        %v1723 = vadd.f32 %v1699, %v1715
        %v1724 = vmul.f32 %v1660, 0.99
        %v1725 = vmul.f32 %v1661, 0.99
        %v1726 = vmul.f32 %v1662, 0.99
        %v1727 = vmul.f32 %v1663, 0.99
        %v1728 = vmul.f32 %v1664, 0.99
        %v1729 = vmul.f32 %v1665, 0.99
        %v1730 = vmul.f32 %v1666, 0.99
        %v1731 = vmul.f32 %v1667, 0.99
        %v1732 = vmul.f32 %v1716, 0.002
        %v1733 = vmul.f32 %v1717, 0.002
        %v1734 = vmul.f32 %v1718, 0.002
        %v1735 = vmul.f32 %v1719, 0.002
        %v1736 = vmul.f32 %v1720, 0.002
        %v1737 = vmul.f32 %v1721, 0.002
        %v1738 = vmul.f32 %v1722, 0.002
        %v1739 = vmul.f32 %v1723, 0.002
        %v1740 = vadd.f32 %v1724, %v1732
        %v1741 = vadd.f32 %v1725, %v1733
        %v1742 = vadd.f32 %v1726, %v1734
        %v1743 = vadd.f32 %v1727, %v1735
        %v1744 = vadd.f32 %v1728, %v1736
        %v1745 = vadd.f32 %v1729, %v1737
        %v1746 = vadd.f32 %v1730, %v1738
        %v1747 = vadd.f32 %v1731, %v1739
        %vm1748 = vcmp.gt.f32.partialorder %v1716, 30.0
        %vm1749 = vcmp.gt.f32.partialorder %v1717, 30.0
        %vm1750 = vcmp.gt.f32.partialorder %v1718, 30.0
        %vm1751 = vcmp.gt.f32.partialorder %v1719, 30.0
        %vm1752 = vcmp.gt.f32.partialorder %v1720, 30.0
        %vm1753 = vcmp.gt.f32.partialorder %v1721, 30.0
        %vm1754 = vcmp.gt.f32.partialorder %v1722, 30.0
        %vm1755 = vcmp.gt.f32.partialorder %v1723, 30.0
        %v1756 = vsel %vm1748, 1.0, 0.0
        %v1757 = vsel %vm1749, 1.0, 0.0
        %v1758 = vsel %vm1750, 1.0, 0.0
        %v1759 = vsel %vm1751, 1.0, 0.0
        %v1760 = vsel %vm1752, 1.0, 0.0
        %v1761 = vsel %vm1753, 1.0, 0.0
        %v1762 = vsel %vm1754, 1.0, 0.0
        %v1763 = vsel %vm1755, 1.0, 0.0
        %v1764 = vadd.f32 %v1644, %v1756
        %v1765 = vadd.f32 %v1645, %v1757
        %v1766 = vadd.f32 %v1646, %v1758
        %v1767 = vadd.f32 %v1647, %v1759
        %v1768 = vadd.f32 %v1648, %v1760
        %v1769 = vadd.f32 %v1649, %v1761
        %v1770 = vadd.f32 %v1650, %v1762
        %v1771 = vadd.f32 %v1651, %v1763
        %v1772 = vsel %vm1748, 8.0, 0.0
        %v1773 = vsel %vm1749, 8.0, 0.0
        %v1774 = vsel %vm1750, 8.0, 0.0
        %v1775 = vsel %vm1751, 8.0, 0.0
        %v1776 = vsel %vm1752, 8.0, 0.0
        %v1777 = vsel %vm1753, 8.0, 0.0
        %v1778 = vsel %vm1754, 8.0, 0.0
        %v1779 = vsel %vm1755, 8.0, 0.0
        %v1780 = vadd.f32 %v1740, %v1772
        %v1781 = vadd.f32 %v1741, %v1773
        %v1782 = vadd.f32 %v1742, %v1774
        %v1783 = vadd.f32 %v1743, %v1775
        %v1784 = vadd.f32 %v1744, %v1776
        %v1785 = vadd.f32 %v1745, %v1777
        %v1786 = vadd.f32 %v1746, %v1778
        %v1787 = vadd.f32 %v1747, %v1779
        %v1788 = vsel %vm1748, -65.0, %v1716
        %v1789 = vsel %vm1749, -65.0, %v1717
        %v1790 = vsel %vm1750, -65.0, %v1718
        %v1791 = vsel %vm1751, -65.0, %v1719
        %v1792 = vsel %vm1752, -65.0, %v1720
        %v1793 = vsel %vm1753, -65.0, %v1721
        %v1794 = vsel %vm1754, -65.0, %v1722
        %v1795 = vsel %vm1755, -65.0, %v1723
        %v1796 = vmul.f32 %v1788, 0.02
        %v1797 = vmul.f32 %v1789, 0.02
        %v1798 = vmul.f32 %v1790, 0.02
        %v1799 = vmul.f32 %v1791, 0.02
        %v1800 = vmul.f32 %v1792, 0.02
        %v1801 = vmul.f32 %v1793, 0.02
        %v1802 = vmul.f32 %v1794, 0.02
        %v1803 = vmul.f32 %v1795, 0.02
        %v1804 = vadd.f32 %v1796, 3.5
        %v1805 = vadd.f32 %v1797, 3.5
        %v1806 = vadd.f32 %v1798, 3.5
        %v1807 = vadd.f32 %v1799, 3.5
        %v1808 = vadd.f32 %v1800, 3.5
        %v1809 = vadd.f32 %v1801, 3.5
        %v1810 = vadd.f32 %v1802, 3.5
        %v1811 = vadd.f32 %v1803, 3.5
        %v1812 = vmul.f32 %v1788, %v1804
        %v1813 = vmul.f32 %v1789, %v1805
        %v1814 = vmul.f32 %v1790, %v1806
        %v1815 = vmul.f32 %v1791, %v1807
        %v1816 = vmul.f32 %v1792, %v1808
        %v1817 = vmul.f32 %v1793, %v1809
        %v1818 = vmul.f32 %v1794, %v1810
        %v1819 = vmul.f32 %v1795, %v1811
        %v1820 = vmul.f32 %v1780, 0.5
        %v1821 = vmul.f32 %v1781, 0.5
        %v1822 = vmul.f32 %v1782, 0.5
        %v1823 = vmul.f32 %v1783, 0.5
        %v1824 = vmul.f32 %v1784, 0.5
        %v1825 = vmul.f32 %v1785, 0.5
        %v1826 = vmul.f32 %v1786, 0.5
        %v1827 = vmul.f32 %v1787, 0.5
        %v1828 = vsub.f32 %v748, %v1820
        %v1829 = vsub.f32 %v749, %v1821
        %v1830 = vsub.f32 %v750, %v1822
        %v1831 = vsub.f32 %v751, %v1823
        %v1832 = vsub.f32 %v752, %v1824
        %v1833 = vsub.f32 %v753, %v1825
        %v1834 = vsub.f32 %v754, %v1826
        %v1835 = vsub.f32 %v755, %v1827
        %v1836 = vadd.f32 %v1812, %v1828
        %v1837 = vadd.f32 %v1813, %v1829
        %v1838 = vadd.f32 %v1814, %v1830
        %v1839 = vadd.f32 %v1815, %v1831
        %v1840 = vadd.f32 %v1816, %v1832
        %v1841 = vadd.f32 %v1817, %v1833
        %v1842 = vadd.f32 %v1818, %v1834
        %v1843 = vadd.f32 %v1819, %v1835
        %v1844 = vmul.f32 %v1780, 0.99
        %v1845 = vmul.f32 %v1781, 0.99
        %v1846 = vmul.f32 %v1782, 0.99
        %v1847 = vmul.f32 %v1783, 0.99
        %v1848 = vmul.f32 %v1784, 0.99
        %v1849 = vmul.f32 %v1785, 0.99
        %v1850 = vmul.f32 %v1786, 0.99
        %v1851 = vmul.f32 %v1787, 0.99
        %v1852 = vmul.f32 %v1836, 0.002
        %v1853 = vmul.f32 %v1837, 0.002
        %v1854 = vmul.f32 %v1838, 0.002
        %v1855 = vmul.f32 %v1839, 0.002
        %v1856 = vmul.f32 %v1840, 0.002
        %v1857 = vmul.f32 %v1841, 0.002
        %v1858 = vmul.f32 %v1842, 0.002
        %v1859 = vmul.f32 %v1843, 0.002
        %v1860 = vadd.f32 %v1844, %v1852
        %v1861 = vadd.f32 %v1845, %v1853
        %v1862 = vadd.f32 %v1846, %v1854
        %v1863 = vadd.f32 %v1847, %v1855
        %v1864 = vadd.f32 %v1848, %v1856
        %v1865 = vadd.f32 %v1849, %v1857
        %v1866 = vadd.f32 %v1850, %v1858
        %v1867 = vadd.f32 %v1851, %v1859
        %vm1868 = vcmp.gt.f32.partialorder %v1836, 30.0
        %vm1869 = vcmp.gt.f32.partialorder %v1837, 30.0
        %vm1870 = vcmp.gt.f32.partialorder %v1838, 30.0
        %vm1871 = vcmp.gt.f32.partialorder %v1839, 30.0
        %vm1872 = vcmp.gt.f32.partialorder %v1840, 30.0
        %vm1873 = vcmp.gt.f32.partialorder %v1841, 30.0
        %vm1874 = vcmp.gt.f32.partialorder %v1842, 30.0
        %vm1875 = vcmp.gt.f32.partialorder %v1843, 30.0
        %v1876 = vsel %vm1868, 1.0, 0.0
        %v1877 = vsel %vm1869, 1.0, 0.0
        %v1878 = vsel %vm1870, 1.0, 0.0
        %v1879 = vsel %vm1871, 1.0, 0.0
        %v1880 = vsel %vm1872, 1.0, 0.0
        %v1881 = vsel %vm1873, 1.0, 0.0
        %v1882 = vsel %vm1874, 1.0, 0.0
        %v1883 = vsel %vm1875, 1.0, 0.0
        %v1884 = vadd.f32 %v1764, %v1876
        %v1885 = vadd.f32 %v1765, %v1877
        %v1886 = vadd.f32 %v1766, %v1878
        %v1887 = vadd.f32 %v1767, %v1879
        %v1888 = vadd.f32 %v1768, %v1880
        %v1889 = vadd.f32 %v1769, %v1881
        %v1890 = vadd.f32 %v1770, %v1882
        %v1891 = vadd.f32 %v1771, %v1883
        %v1892 = vsel %vm1868, 8.0, 0.0
        %v1893 = vsel %vm1869, 8.0, 0.0
        %v1894 = vsel %vm1870, 8.0, 0.0
        %v1895 = vsel %vm1871, 8.0, 0.0
        %v1896 = vsel %vm1872, 8.0, 0.0
        %v1897 = vsel %vm1873, 8.0, 0.0
        %v1898 = vsel %vm1874, 8.0, 0.0
        %v1899 = vsel %vm1875, 8.0, 0.0
        %v1900 = vadd.f32 %v1860, %v1892
        %v1901 = vadd.f32 %v1861, %v1893
        %v1902 = vadd.f32 %v1862, %v1894
        %v1903 = vadd.f32 %v1863, %v1895
        %v1904 = vadd.f32 %v1864, %v1896
        %v1905 = vadd.f32 %v1865, %v1897
        %v1906 = vadd.f32 %v1866, %v1898
        %v1907 = vadd.f32 %v1867, %v1899
        %v1908 = vsel %vm1868, -65.0, %v1836
        %v1909 = vsel %vm1869, -65.0, %v1837
        %v1910 = vsel %vm1870, -65.0, %v1838
        %v1911 = vsel %vm1871, -65.0, %v1839
        %v1912 = vsel %vm1872, -65.0, %v1840
        %v1913 = vsel %vm1873, -65.0, %v1841
        %v1914 = vsel %vm1874, -65.0, %v1842
        %v1915 = vsel %vm1875, -65.0, %v1843
        %v1916 = vmul.f32 %v1908, 0.02
        %v1917 = vmul.f32 %v1909, 0.02
        %v1918 = vmul.f32 %v1910, 0.02
        %v1919 = vmul.f32 %v1911, 0.02
        %v1920 = vmul.f32 %v1912, 0.02
        %v1921 = vmul.f32 %v1913, 0.02
        %v1922 = vmul.f32 %v1914, 0.02
        %v1923 = vmul.f32 %v1915, 0.02
        %v1924 = vadd.f32 %v1916, 3.5
        %v1925 = vadd.f32 %v1917, 3.5
        %v1926 = vadd.f32 %v1918, 3.5
        %v1927 = vadd.f32 %v1919, 3.5
        %v1928 = vadd.f32 %v1920, 3.5
        %v1929 = vadd.f32 %v1921, 3.5
        %v1930 = vadd.f32 %v1922, 3.5
        %v1931 = vadd.f32 %v1923, 3.5
        %v1932 = vmul.f32 %v1908, %v1924
        %v1933 = vmul.f32 %v1909, %v1925
        %v1934 = vmul.f32 %v1910, %v1926
        %v1935 = vmul.f32 %v1911, %v1927
        %v1936 = vmul.f32 %v1912, %v1928
        %v1937 = vmul.f32 %v1913, %v1929
        %v1938 = vmul.f32 %v1914, %v1930
        %v1939 = vmul.f32 %v1915, %v1931
        %v1940 = vmul.f32 %v1900, 0.5
        %v1941 = vmul.f32 %v1901, 0.5
        %v1942 = vmul.f32 %v1902, 0.5
        %v1943 = vmul.f32 %v1903, 0.5
        %v1944 = vmul.f32 %v1904, 0.5
        %v1945 = vmul.f32 %v1905, 0.5
        %v1946 = vmul.f32 %v1906, 0.5
        %v1947 = vmul.f32 %v1907, 0.5
        %v1948 = vsub.f32 %v748, %v1940
        %v1949 = vsub.f32 %v749, %v1941
        %v1950 = vsub.f32 %v750, %v1942
        %v1951 = vsub.f32 %v751, %v1943
        %v1952 = vsub.f32 %v752, %v1944
        %v1953 = vsub.f32 %v753, %v1945
        %v1954 = vsub.f32 %v754, %v1946
        %v1955 = vsub.f32 %v755, %v1947
        %v1956 = vadd.f32 %v1932, %v1948
        %v1957 = vadd.f32 %v1933, %v1949
        %v1958 = vadd.f32 %v1934, %v1950
        %v1959 = vadd.f32 %v1935, %v1951
        %v1960 = vadd.f32 %v1936, %v1952
        %v1961 = vadd.f32 %v1937, %v1953
        %v1962 = vadd.f32 %v1938, %v1954
        %v1963 = vadd.f32 %v1939, %v1955
        %v1964 = vmul.f32 %v1900, 0.99
        %v1965 = vmul.f32 %v1901, 0.99
        %v1966 = vmul.f32 %v1902, 0.99
        %v1967 = vmul.f32 %v1903, 0.99
        %v1968 = vmul.f32 %v1904, 0.99
        %v1969 = vmul.f32 %v1905, 0.99
        %v1970 = vmul.f32 %v1906, 0.99
        %v1971 = vmul.f32 %v1907, 0.99
        %v1972 = vmul.f32 %v1956, 0.002
        %v1973 = vmul.f32 %v1957, 0.002
        %v1974 = vmul.f32 %v1958, 0.002
        %v1975 = vmul.f32 %v1959, 0.002
        %v1976 = vmul.f32 %v1960, 0.002
        %v1977 = vmul.f32 %v1961, 0.002
        %v1978 = vmul.f32 %v1962, 0.002
        %v1979 = vmul.f32 %v1963, 0.002
        %v1980 = vadd.f32 %v1964, %v1972
        %v1981 = vadd.f32 %v1965, %v1973
        %v1982 = vadd.f32 %v1966, %v1974
        %v1983 = vadd.f32 %v1967, %v1975
        %v1984 = vadd.f32 %v1968, %v1976
        %v1985 = vadd.f32 %v1969, %v1977
        %v1986 = vadd.f32 %v1970, %v1978
        %v1987 = vadd.f32 %v1971, %v1979
        %vm1988 = vcmp.gt.f32.partialorder %v1956, 30.0
        %vm1989 = vcmp.gt.f32.partialorder %v1957, 30.0
        %vm1990 = vcmp.gt.f32.partialorder %v1958, 30.0
        %vm1991 = vcmp.gt.f32.partialorder %v1959, 30.0
        %vm1992 = vcmp.gt.f32.partialorder %v1960, 30.0
        %vm1993 = vcmp.gt.f32.partialorder %v1961, 30.0
        %vm1994 = vcmp.gt.f32.partialorder %v1962, 30.0
        %vm1995 = vcmp.gt.f32.partialorder %v1963, 30.0
        %v1996 = vsel %vm1988, 1.0, 0.0
        %v1997 = vsel %vm1989, 1.0, 0.0
        %v1998 = vsel %vm1990, 1.0, 0.0
        %v1999 = vsel %vm1991, 1.0, 0.0
        %v2000 = vsel %vm1992, 1.0, 0.0
        %v2001 = vsel %vm1993, 1.0, 0.0
        %v2002 = vsel %vm1994, 1.0, 0.0
        %v2003 = vsel %vm1995, 1.0, 0.0
        %v2004 = vadd.f32 %v1884, %v1996
        %v2005 = vadd.f32 %v1885, %v1997
        %v2006 = vadd.f32 %v1886, %v1998
        %v2007 = vadd.f32 %v1887, %v1999
        %v2008 = vadd.f32 %v1888, %v2000
        %v2009 = vadd.f32 %v1889, %v2001
        %v2010 = vadd.f32 %v1890, %v2002
        %v2011 = vadd.f32 %v1891, %v2003
        %v2012 = vsel %vm1988, 8.0, 0.0
        %v2013 = vsel %vm1989, 8.0, 0.0
        %v2014 = vsel %vm1990, 8.0, 0.0
        %v2015 = vsel %vm1991, 8.0, 0.0
        %v2016 = vsel %vm1992, 8.0, 0.0
        %v2017 = vsel %vm1993, 8.0, 0.0
        %v2018 = vsel %vm1994, 8.0, 0.0
        %v2019 = vsel %vm1995, 8.0, 0.0
        %v2020 = vadd.f32 %v1980, %v2012
        %v2021 = vadd.f32 %v1981, %v2013
        %v2022 = vadd.f32 %v1982, %v2014
        %v2023 = vadd.f32 %v1983, %v2015
        %v2024 = vadd.f32 %v1984, %v2016
        %v2025 = vadd.f32 %v1985, %v2017
        %v2026 = vadd.f32 %v1986, %v2018
        %v2027 = vadd.f32 %v1987, %v2019
        %v2028 = vsel %vm1988, -65.0, %v1956
        %v2029 = vsel %vm1989, -65.0, %v1957
        %v2030 = vsel %vm1990, -65.0, %v1958
        %v2031 = vsel %vm1991, -65.0, %v1959
        %v2032 = vsel %vm1992, -65.0, %v1960
        %v2033 = vsel %vm1993, -65.0, %v1961
        %v2034 = vsel %vm1994, -65.0, %v1962
        %v2035 = vsel %vm1995, -65.0, %v1963
        %v2036 = vmul.f32 %v2028, 0.02
        %v2037 = vmul.f32 %v2029, 0.02
        %v2038 = vmul.f32 %v2030, 0.02
        %v2039 = vmul.f32 %v2031, 0.02
        %v2040 = vmul.f32 %v2032, 0.02
        %v2041 = vmul.f32 %v2033, 0.02
        %v2042 = vmul.f32 %v2034, 0.02
        %v2043 = vmul.f32 %v2035, 0.02
        %v2044 = vadd.f32 %v2036, 3.5
        %v2045 = vadd.f32 %v2037, 3.5
        %v2046 = vadd.f32 %v2038, 3.5
        %v2047 = vadd.f32 %v2039, 3.5
        %v2048 = vadd.f32 %v2040, 3.5
        %v2049 = vadd.f32 %v2041, 3.5
        %v2050 = vadd.f32 %v2042, 3.5
        %v2051 = vadd.f32 %v2043, 3.5
        %v2052 = vmul.f32 %v2028, %v2044
        %v2053 = vmul.f32 %v2029, %v2045
        %v2054 = vmul.f32 %v2030, %v2046
        %v2055 = vmul.f32 %v2031, %v2047
        %v2056 = vmul.f32 %v2032, %v2048
        %v2057 = vmul.f32 %v2033, %v2049
        %v2058 = vmul.f32 %v2034, %v2050
        %v2059 = vmul.f32 %v2035, %v2051
        %v2060 = vmul.f32 %v2020, 0.5
        %v2061 = vmul.f32 %v2021, 0.5
        %v2062 = vmul.f32 %v2022, 0.5
        %v2063 = vmul.f32 %v2023, 0.5
        %v2064 = vmul.f32 %v2024, 0.5
        %v2065 = vmul.f32 %v2025, 0.5
        %v2066 = vmul.f32 %v2026, 0.5
        %v2067 = vmul.f32 %v2027, 0.5
        %v2068 = vsub.f32 %v748, %v2060
        %v2069 = vsub.f32 %v749, %v2061
        %v2070 = vsub.f32 %v750, %v2062
        %v2071 = vsub.f32 %v751, %v2063
        %v2072 = vsub.f32 %v752, %v2064
        %v2073 = vsub.f32 %v753, %v2065
        %v2074 = vsub.f32 %v754, %v2066
        %v2075 = vsub.f32 %v755, %v2067
        %v2076 = vadd.f32 %v2052, %v2068
        %v2077 = vadd.f32 %v2053, %v2069
        %v2078 = vadd.f32 %v2054, %v2070
        %v2079 = vadd.f32 %v2055, %v2071
        %v2080 = vadd.f32 %v2056, %v2072
        %v2081 = vadd.f32 %v2057, %v2073
        %v2082 = vadd.f32 %v2058, %v2074
        %v2083 = vadd.f32 %v2059, %v2075
        %v2084 = vmul.f32 %v2020, 0.99
        %v2085 = vmul.f32 %v2021, 0.99
        %v2086 = vmul.f32 %v2022, 0.99
        %v2087 = vmul.f32 %v2023, 0.99
        %v2088 = vmul.f32 %v2024, 0.99
        %v2089 = vmul.f32 %v2025, 0.99
        %v2090 = vmul.f32 %v2026, 0.99
        %v2091 = vmul.f32 %v2027, 0.99
        %v2092 = vmul.f32 %v2076, 0.002
        %v2093 = vmul.f32 %v2077, 0.002
        %v2094 = vmul.f32 %v2078, 0.002
        %v2095 = vmul.f32 %v2079, 0.002
        %v2096 = vmul.f32 %v2080, 0.002
        %v2097 = vmul.f32 %v2081, 0.002
        %v2098 = vmul.f32 %v2082, 0.002
        %v2099 = vmul.f32 %v2083, 0.002
        %v2100 = vadd.f32 %v2084, %v2092
        %v2101 = vadd.f32 %v2085, %v2093
        %v2102 = vadd.f32 %v2086, %v2094
        %v2103 = vadd.f32 %v2087, %v2095
        %v2104 = vadd.f32 %v2088, %v2096
        %v2105 = vadd.f32 %v2089, %v2097
        %v2106 = vadd.f32 %v2090, %v2098
        %v2107 = vadd.f32 %v2091, %v2099
        %vm2108 = vcmp.gt.f32.partialorder %v2076, 30.0
        %vm2109 = vcmp.gt.f32.partialorder %v2077, 30.0
        %vm2110 = vcmp.gt.f32.partialorder %v2078, 30.0
        %vm2111 = vcmp.gt.f32.partialorder %v2079, 30.0
        %vm2112 = vcmp.gt.f32.partialorder %v2080, 30.0
        %vm2113 = vcmp.gt.f32.partialorder %v2081, 30.0
        %vm2114 = vcmp.gt.f32.partialorder %v2082, 30.0
        %vm2115 = vcmp.gt.f32.partialorder %v2083, 30.0
        %v2116 = vsel %vm2108, 1.0, 0.0
        %v2117 = vsel %vm2109, 1.0, 0.0
        %v2118 = vsel %vm2110, 1.0, 0.0
        %v2119 = vsel %vm2111, 1.0, 0.0
        %v2120 = vsel %vm2112, 1.0, 0.0
        %v2121 = vsel %vm2113, 1.0, 0.0
        %v2122 = vsel %vm2114, 1.0, 0.0
        %v2123 = vsel %vm2115, 1.0, 0.0
        %v2124 = vadd.f32 %v2004, %v2116
        %v2125 = vadd.f32 %v2005, %v2117
        %v2126 = vadd.f32 %v2006, %v2118
        %v2127 = vadd.f32 %v2007, %v2119
        %v2128 = vadd.f32 %v2008, %v2120
        %v2129 = vadd.f32 %v2009, %v2121
        %v2130 = vadd.f32 %v2010, %v2122
        %v2131 = vadd.f32 %v2011, %v2123
        %v2132 = vsel %vm2108, 8.0, 0.0
        %v2133 = vsel %vm2109, 8.0, 0.0
        %v2134 = vsel %vm2110, 8.0, 0.0
        %v2135 = vsel %vm2111, 8.0, 0.0
        %v2136 = vsel %vm2112, 8.0, 0.0
        %v2137 = vsel %vm2113, 8.0, 0.0
        %v2138 = vsel %vm2114, 8.0, 0.0
        %v2139 = vsel %vm2115, 8.0, 0.0
        %v2140 = vadd.f32 %v2100, %v2132
        %v2141 = vadd.f32 %v2101, %v2133
        %v2142 = vadd.f32 %v2102, %v2134
        %v2143 = vadd.f32 %v2103, %v2135
        %v2144 = vadd.f32 %v2104, %v2136
        %v2145 = vadd.f32 %v2105, %v2137
        %v2146 = vadd.f32 %v2106, %v2138
        %v2147 = vadd.f32 %v2107, %v2139
        %v2148 = vsel %vm2108, -65.0, %v2076
        %v2149 = vsel %vm2109, -65.0, %v2077
        %v2150 = vsel %vm2110, -65.0, %v2078
        %v2151 = vsel %vm2111, -65.0, %v2079
        %v2152 = vsel %vm2112, -65.0, %v2080
        %v2153 = vsel %vm2113, -65.0, %v2081
        %v2154 = vsel %vm2114, -65.0, %v2082
        %v2155 = vsel %vm2115, -65.0, %v2083
        %v2156 = vmul.f32 %v2148, 0.02
        %v2157 = vmul.f32 %v2149, 0.02
        %v2158 = vmul.f32 %v2150, 0.02
        %v2159 = vmul.f32 %v2151, 0.02
        %v2160 = vmul.f32 %v2152, 0.02
        %v2161 = vmul.f32 %v2153, 0.02
        %v2162 = vmul.f32 %v2154, 0.02
        %v2163 = vmul.f32 %v2155, 0.02
        %v2164 = vadd.f32 %v2156, 3.5
        %v2165 = vadd.f32 %v2157, 3.5
        %v2166 = vadd.f32 %v2158, 3.5
        %v2167 = vadd.f32 %v2159, 3.5
        %v2168 = vadd.f32 %v2160, 3.5
        %v2169 = vadd.f32 %v2161, 3.5
        %v2170 = vadd.f32 %v2162, 3.5
        %v2171 = vadd.f32 %v2163, 3.5
        %v2172 = vmul.f32 %v2148, %v2164
        %v2173 = vmul.f32 %v2149, %v2165
        %v2174 = vmul.f32 %v2150, %v2166
        %v2175 = vmul.f32 %v2151, %v2167
        %v2176 = vmul.f32 %v2152, %v2168
        %v2177 = vmul.f32 %v2153, %v2169
        %v2178 = vmul.f32 %v2154, %v2170
        %v2179 = vmul.f32 %v2155, %v2171
        %v2180 = vmul.f32 %v2140, 0.5
        %v2181 = vmul.f32 %v2141, 0.5
        %v2182 = vmul.f32 %v2142, 0.5
        %v2183 = vmul.f32 %v2143, 0.5
        %v2184 = vmul.f32 %v2144, 0.5
        %v2185 = vmul.f32 %v2145, 0.5
        %v2186 = vmul.f32 %v2146, 0.5
        %v2187 = vmul.f32 %v2147, 0.5
        %v2188 = vsub.f32 %v748, %v2180
        %v2189 = vsub.f32 %v749, %v2181
        %v2190 = vsub.f32 %v750, %v2182
        %v2191 = vsub.f32 %v751, %v2183
        %v2192 = vsub.f32 %v752, %v2184
        %v2193 = vsub.f32 %v753, %v2185
        %v2194 = vsub.f32 %v754, %v2186
        %v2195 = vsub.f32 %v755, %v2187
        %v2196 = vadd.f32 %v2172, %v2188
        %v2197 = vadd.f32 %v2173, %v2189
        %v2198 = vadd.f32 %v2174, %v2190
        %v2199 = vadd.f32 %v2175, %v2191
        %v2200 = vadd.f32 %v2176, %v2192
        %v2201 = vadd.f32 %v2177, %v2193
        %v2202 = vadd.f32 %v2178, %v2194
        %v2203 = vadd.f32 %v2179, %v2195
        %v2204 = vmul.f32 %v2140, 0.99
        %v2205 = vmul.f32 %v2141, 0.99
        %v2206 = vmul.f32 %v2142, 0.99
        %v2207 = vmul.f32 %v2143, 0.99
        %v2208 = vmul.f32 %v2144, 0.99
        %v2209 = vmul.f32 %v2145, 0.99
        %v2210 = vmul.f32 %v2146, 0.99
        %v2211 = vmul.f32 %v2147, 0.99
        %v2212 = vmul.f32 %v2196, 0.002
        %v2213 = vmul.f32 %v2197, 0.002
        %v2214 = vmul.f32 %v2198, 0.002
        %v2215 = vmul.f32 %v2199, 0.002
        %v2216 = vmul.f32 %v2200, 0.002
        %v2217 = vmul.f32 %v2201, 0.002
        %v2218 = vmul.f32 %v2202, 0.002
        %v2219 = vmul.f32 %v2203, 0.002
        %v2220 = vadd.f32 %v2204, %v2212
        %v2221 = vadd.f32 %v2205, %v2213
        %v2222 = vadd.f32 %v2206, %v2214
        %v2223 = vadd.f32 %v2207, %v2215
        %v2224 = vadd.f32 %v2208, %v2216
        %v2225 = vadd.f32 %v2209, %v2217
        %v2226 = vadd.f32 %v2210, %v2218
        %v2227 = vadd.f32 %v2211, %v2219
        %vm2228 = vcmp.gt.f32.partialorder %v2196, 30.0
        %vm2229 = vcmp.gt.f32.partialorder %v2197, 30.0
        %vm2230 = vcmp.gt.f32.partialorder %v2198, 30.0
        %vm2231 = vcmp.gt.f32.partialorder %v2199, 30.0
        %vm2232 = vcmp.gt.f32.partialorder %v2200, 30.0
        %vm2233 = vcmp.gt.f32.partialorder %v2201, 30.0
        %vm2234 = vcmp.gt.f32.partialorder %v2202, 30.0
        %vm2235 = vcmp.gt.f32.partialorder %v2203, 30.0
        %v2236 = vsel %vm2228, 1.0, 0.0
        %v2237 = vsel %vm2229, 1.0, 0.0
        %v2238 = vsel %vm2230, 1.0, 0.0
        %v2239 = vsel %vm2231, 1.0, 0.0
        %v2240 = vsel %vm2232, 1.0, 0.0
        %v2241 = vsel %vm2233, 1.0, 0.0
        %v2242 = vsel %vm2234, 1.0, 0.0
        %v2243 = vsel %vm2235, 1.0, 0.0
        %v2244 = vadd.f32 %v2124, %v2236
        %v2245 = vadd.f32 %v2125, %v2237
        %v2246 = vadd.f32 %v2126, %v2238
        %v2247 = vadd.f32 %v2127, %v2239
        %v2248 = vadd.f32 %v2128, %v2240
        %v2249 = vadd.f32 %v2129, %v2241
        %v2250 = vadd.f32 %v2130, %v2242
        %v2251 = vadd.f32 %v2131, %v2243
        %v2252 = vsel %vm2228, 8.0, 0.0
        %v2253 = vsel %vm2229, 8.0, 0.0
        %v2254 = vsel %vm2230, 8.0, 0.0
        %v2255 = vsel %vm2231, 8.0, 0.0
        %v2256 = vsel %vm2232, 8.0, 0.0
        %v2257 = vsel %vm2233, 8.0, 0.0
        %v2258 = vsel %vm2234, 8.0, 0.0
        %v2259 = vsel %vm2235, 8.0, 0.0
        %v2260 = vadd.f32 %v2220, %v2252
        %v2261 = vadd.f32 %v2221, %v2253
        %v2262 = vadd.f32 %v2222, %v2254
        %v2263 = vadd.f32 %v2223, %v2255
        %v2264 = vadd.f32 %v2224, %v2256
        %v2265 = vadd.f32 %v2225, %v2257
        %v2266 = vadd.f32 %v2226, %v2258
        %v2267 = vadd.f32 %v2227, %v2259
        %v2268 = vsel %vm2228, -65.0, %v2196
        %v2269 = vsel %vm2229, -65.0, %v2197
        %v2270 = vsel %vm2230, -65.0, %v2198
        %v2271 = vsel %vm2231, -65.0, %v2199
        %v2272 = vsel %vm2232, -65.0, %v2200
        %v2273 = vsel %vm2233, -65.0, %v2201
        %v2274 = vsel %vm2234, -65.0, %v2202
        %v2275 = vsel %vm2235, -65.0, %v2203
        %v2276 = vmul.f32 %v2268, 0.02
        %v2277 = vmul.f32 %v2269, 0.02
        %v2278 = vmul.f32 %v2270, 0.02
        %v2279 = vmul.f32 %v2271, 0.02
        %v2280 = vmul.f32 %v2272, 0.02
        %v2281 = vmul.f32 %v2273, 0.02
        %v2282 = vmul.f32 %v2274, 0.02
        %v2283 = vmul.f32 %v2275, 0.02
        %v2284 = vadd.f32 %v2276, 3.5
        %v2285 = vadd.f32 %v2277, 3.5
        %v2286 = vadd.f32 %v2278, 3.5
        %v2287 = vadd.f32 %v2279, 3.5
        %v2288 = vadd.f32 %v2280, 3.5
        %v2289 = vadd.f32 %v2281, 3.5
        %v2290 = vadd.f32 %v2282, 3.5
        %v2291 = vadd.f32 %v2283, 3.5
        %v2292 = vmul.f32 %v2268, %v2284
        %v2293 = vmul.f32 %v2269, %v2285
        %v2294 = vmul.f32 %v2270, %v2286
        %v2295 = vmul.f32 %v2271, %v2287
        %v2296 = vmul.f32 %v2272, %v2288
        %v2297 = vmul.f32 %v2273, %v2289
        %v2298 = vmul.f32 %v2274, %v2290
        %v2299 = vmul.f32 %v2275, %v2291
        %v2300 = vmul.f32 %v2260, 0.5
        %v2301 = vmul.f32 %v2261, 0.5
        %v2302 = vmul.f32 %v2262, 0.5
        %v2303 = vmul.f32 %v2263, 0.5
        %v2304 = vmul.f32 %v2264, 0.5
        %v2305 = vmul.f32 %v2265, 0.5
        %v2306 = vmul.f32 %v2266, 0.5
        %v2307 = vmul.f32 %v2267, 0.5
        %v2308 = vsub.f32 %v748, %v2300
        %v2309 = vsub.f32 %v749, %v2301
        %v2310 = vsub.f32 %v750, %v2302
        %v2311 = vsub.f32 %v751, %v2303
        %v2312 = vsub.f32 %v752, %v2304
        %v2313 = vsub.f32 %v753, %v2305
        %v2314 = vsub.f32 %v754, %v2306
        %v2315 = vsub.f32 %v755, %v2307
        %v2316 = vadd.f32 %v2292, %v2308
        %v2317 = vadd.f32 %v2293, %v2309
        %v2318 = vadd.f32 %v2294, %v2310
        %v2319 = vadd.f32 %v2295, %v2311
        %v2320 = vadd.f32 %v2296, %v2312
        %v2321 = vadd.f32 %v2297, %v2313
        %v2322 = vadd.f32 %v2298, %v2314
        %v2323 = vadd.f32 %v2299, %v2315
        %v2324 = vmul.f32 %v2260, 0.99
        %v2325 = vmul.f32 %v2261, 0.99
        %v2326 = vmul.f32 %v2262, 0.99
        %v2327 = vmul.f32 %v2263, 0.99
        %v2328 = vmul.f32 %v2264, 0.99
        %v2329 = vmul.f32 %v2265, 0.99
        %v2330 = vmul.f32 %v2266, 0.99
        %v2331 = vmul.f32 %v2267, 0.99
        %v2332 = vmul.f32 %v2316, 0.002
        %v2333 = vmul.f32 %v2317, 0.002
        %v2334 = vmul.f32 %v2318, 0.002
        %v2335 = vmul.f32 %v2319, 0.002
        %v2336 = vmul.f32 %v2320, 0.002
        %v2337 = vmul.f32 %v2321, 0.002
        %v2338 = vmul.f32 %v2322, 0.002
        %v2339 = vmul.f32 %v2323, 0.002
        %v2340 = vadd.f32 %v2324, %v2332
        %v2341 = vadd.f32 %v2325, %v2333
        %v2342 = vadd.f32 %v2326, %v2334
        %v2343 = vadd.f32 %v2327, %v2335
        %v2344 = vadd.f32 %v2328, %v2336
        %v2345 = vadd.f32 %v2329, %v2337
        %v2346 = vadd.f32 %v2330, %v2338
        %v2347 = vadd.f32 %v2331, %v2339
        %vm2348 = vcmp.gt.f32.partialorder %v2316, 30.0
        %vm2349 = vcmp.gt.f32.partialorder %v2317, 30.0
        %vm2350 = vcmp.gt.f32.partialorder %v2318, 30.0
        %vm2351 = vcmp.gt.f32.partialorder %v2319, 30.0
        %vm2352 = vcmp.gt.f32.partialorder %v2320, 30.0
        %vm2353 = vcmp.gt.f32.partialorder %v2321, 30.0
        %vm2354 = vcmp.gt.f32.partialorder %v2322, 30.0
        %vm2355 = vcmp.gt.f32.partialorder %v2323, 30.0
        %v2356 = vsel %vm2348, 1.0, 0.0
        %v2357 = vsel %vm2349, 1.0, 0.0
        %v2358 = vsel %vm2350, 1.0, 0.0
        %v2359 = vsel %vm2351, 1.0, 0.0
        %v2360 = vsel %vm2352, 1.0, 0.0
        %v2361 = vsel %vm2353, 1.0, 0.0
        %v2362 = vsel %vm2354, 1.0, 0.0
        %v2363 = vsel %vm2355, 1.0, 0.0
        %v2364 = vadd.f32 %v2244, %v2356
        %v2365 = vadd.f32 %v2245, %v2357
        %v2366 = vadd.f32 %v2246, %v2358
        %v2367 = vadd.f32 %v2247, %v2359
        %v2368 = vadd.f32 %v2248, %v2360
        %v2369 = vadd.f32 %v2249, %v2361
        %v2370 = vadd.f32 %v2250, %v2362
        %v2371 = vadd.f32 %v2251, %v2363
        %v2372 = vsel %vm2348, 8.0, 0.0
        %v2373 = vsel %vm2349, 8.0, 0.0
        %v2374 = vsel %vm2350, 8.0, 0.0
        %v2375 = vsel %vm2351, 8.0, 0.0
        %v2376 = vsel %vm2352, 8.0, 0.0
        %v2377 = vsel %vm2353, 8.0, 0.0
        %v2378 = vsel %vm2354, 8.0, 0.0
        %v2379 = vsel %vm2355, 8.0, 0.0
        %v2380 = vadd.f32 %v2340, %v2372
        %v2381 = vadd.f32 %v2341, %v2373
        %v2382 = vadd.f32 %v2342, %v2374
        %v2383 = vadd.f32 %v2343, %v2375
        %v2384 = vadd.f32 %v2344, %v2376
        %v2385 = vadd.f32 %v2345, %v2377
        %v2386 = vadd.f32 %v2346, %v2378
        %v2387 = vadd.f32 %v2347, %v2379
        %v2388 = vsel %vm2348, -65.0, %v2316
        %v2389 = vsel %vm2349, -65.0, %v2317
        %v2390 = vsel %vm2350, -65.0, %v2318
        %v2391 = vsel %vm2351, -65.0, %v2319
        %v2392 = vsel %vm2352, -65.0, %v2320
        %v2393 = vsel %vm2353, -65.0, %v2321
        %v2394 = vsel %vm2354, -65.0, %v2322
        %v2395 = vsel %vm2355, -65.0, %v2323
        %v2396 = vmul.f32 %v2388, 0.02
        %v2397 = vmul.f32 %v2389, 0.02
        %v2398 = vmul.f32 %v2390, 0.02
        %v2399 = vmul.f32 %v2391, 0.02
        %v2400 = vmul.f32 %v2392, 0.02
        %v2401 = vmul.f32 %v2393, 0.02
        %v2402 = vmul.f32 %v2394, 0.02
        %v2403 = vmul.f32 %v2395, 0.02
        %v2404 = vadd.f32 %v2396, 3.5
        %v2405 = vadd.f32 %v2397, 3.5
        %v2406 = vadd.f32 %v2398, 3.5
        %v2407 = vadd.f32 %v2399, 3.5
        %v2408 = vadd.f32 %v2400, 3.5
        %v2409 = vadd.f32 %v2401, 3.5
        %v2410 = vadd.f32 %v2402, 3.5
        %v2411 = vadd.f32 %v2403, 3.5
        %v2412 = vmul.f32 %v2388, %v2404
        %v2413 = vmul.f32 %v2389, %v2405
        %v2414 = vmul.f32 %v2390, %v2406
        %v2415 = vmul.f32 %v2391, %v2407
        %v2416 = vmul.f32 %v2392, %v2408
        %v2417 = vmul.f32 %v2393, %v2409
        %v2418 = vmul.f32 %v2394, %v2410
        %v2419 = vmul.f32 %v2395, %v2411
        %v2420 = vmul.f32 %v2380, 0.5
        %v2421 = vmul.f32 %v2381, 0.5
        %v2422 = vmul.f32 %v2382, 0.5
        %v2423 = vmul.f32 %v2383, 0.5
        %v2424 = vmul.f32 %v2384, 0.5
        %v2425 = vmul.f32 %v2385, 0.5
        %v2426 = vmul.f32 %v2386, 0.5
        %v2427 = vmul.f32 %v2387, 0.5
        %v2428 = vsub.f32 %v748, %v2420
        %v2429 = vsub.f32 %v749, %v2421
        %v2430 = vsub.f32 %v750, %v2422
        %v2431 = vsub.f32 %v751, %v2423
        %v2432 = vsub.f32 %v752, %v2424
        %v2433 = vsub.f32 %v753, %v2425
        %v2434 = vsub.f32 %v754, %v2426
        %v2435 = vsub.f32 %v755, %v2427
        %v2436 = vadd.f32 %v2412, %v2428
        %v2437 = vadd.f32 %v2413, %v2429
        %v2438 = vadd.f32 %v2414, %v2430
        %v2439 = vadd.f32 %v2415, %v2431
        %v2440 = vadd.f32 %v2416, %v2432
        %v2441 = vadd.f32 %v2417, %v2433
        %v2442 = vadd.f32 %v2418, %v2434
        %v2443 = vadd.f32 %v2419, %v2435
        %v2444 = vmul.f32 %v2380, 0.99
        %v2445 = vmul.f32 %v2381, 0.99
        %v2446 = vmul.f32 %v2382, 0.99
        %v2447 = vmul.f32 %v2383, 0.99
        %v2448 = vmul.f32 %v2384, 0.99
        %v2449 = vmul.f32 %v2385, 0.99
        %v2450 = vmul.f32 %v2386, 0.99
        %v2451 = vmul.f32 %v2387, 0.99
        %v2452 = vmul.f32 %v2436, 0.002
        %v2453 = vmul.f32 %v2437, 0.002
        %v2454 = vmul.f32 %v2438, 0.002
        %v2455 = vmul.f32 %v2439, 0.002
        %v2456 = vmul.f32 %v2440, 0.002
        %v2457 = vmul.f32 %v2441, 0.002
        %v2458 = vmul.f32 %v2442, 0.002
        %v2459 = vmul.f32 %v2443, 0.002
        %v2460 = vadd.f32 %v2444, %v2452
        %v2461 = vadd.f32 %v2445, %v2453
        %v2462 = vadd.f32 %v2446, %v2454
        %v2463 = vadd.f32 %v2447, %v2455
        %v2464 = vadd.f32 %v2448, %v2456
        %v2465 = vadd.f32 %v2449, %v2457
        %v2466 = vadd.f32 %v2450, %v2458
        %v2467 = vadd.f32 %v2451, %v2459
        %vm2468 = vcmp.gt.f32.partialorder %v2436, 30.0
        %vm2469 = vcmp.gt.f32.partialorder %v2437, 30.0
        %vm2470 = vcmp.gt.f32.partialorder %v2438, 30.0
        %vm2471 = vcmp.gt.f32.partialorder %v2439, 30.0
        %vm2472 = vcmp.gt.f32.partialorder %v2440, 30.0
        %vm2473 = vcmp.gt.f32.partialorder %v2441, 30.0
        %vm2474 = vcmp.gt.f32.partialorder %v2442, 30.0
        %vm2475 = vcmp.gt.f32.partialorder %v2443, 30.0
        %v2476 = vsel %vm2468, 1.0, 0.0
        %v2477 = vsel %vm2469, 1.0, 0.0
        %v2478 = vsel %vm2470, 1.0, 0.0
        %v2479 = vsel %vm2471, 1.0, 0.0
        %v2480 = vsel %vm2472, 1.0, 0.0
        %v2481 = vsel %vm2473, 1.0, 0.0
        %v2482 = vsel %vm2474, 1.0, 0.0
        %v2483 = vsel %vm2475, 1.0, 0.0
        %v2484 = vadd.f32 %v2364, %v2476
        %v2485 = vadd.f32 %v2365, %v2477
        %v2486 = vadd.f32 %v2366, %v2478
        %v2487 = vadd.f32 %v2367, %v2479
        %v2488 = vadd.f32 %v2368, %v2480
        %v2489 = vadd.f32 %v2369, %v2481
        %v2490 = vadd.f32 %v2370, %v2482
        %v2491 = vadd.f32 %v2371, %v2483
        %v2492 = vsel %vm2468, 8.0, 0.0
        %v2493 = vsel %vm2469, 8.0, 0.0
        %v2494 = vsel %vm2470, 8.0, 0.0
        %v2495 = vsel %vm2471, 8.0, 0.0
        %v2496 = vsel %vm2472, 8.0, 0.0
        %v2497 = vsel %vm2473, 8.0, 0.0
        %v2498 = vsel %vm2474, 8.0, 0.0
        %v2499 = vsel %vm2475, 8.0, 0.0
        %v2500 = vadd.f32 %v2460, %v2492
        %v2501 = vadd.f32 %v2461, %v2493
        %v2502 = vadd.f32 %v2462, %v2494
        %v2503 = vadd.f32 %v2463, %v2495
        %v2504 = vadd.f32 %v2464, %v2496
        %v2505 = vadd.f32 %v2465, %v2497
        %v2506 = vadd.f32 %v2466, %v2498
        %v2507 = vadd.f32 %v2467, %v2499
        %v2508 = vsel %vm2468, -65.0, %v2436
        %v2509 = vsel %vm2469, -65.0, %v2437
        %v2510 = vsel %vm2470, -65.0, %v2438
        %v2511 = vsel %vm2471, -65.0, %v2439
        %v2512 = vsel %vm2472, -65.0, %v2440
        %v2513 = vsel %vm2473, -65.0, %v2441
        %v2514 = vsel %vm2474, -65.0, %v2442
        %v2515 = vsel %vm2475, -65.0, %v2443
        %v2516 = vmul.f32 %v2508, 0.02
        %v2517 = vmul.f32 %v2509, 0.02
        %v2518 = vmul.f32 %v2510, 0.02
        %v2519 = vmul.f32 %v2511, 0.02
        %v2520 = vmul.f32 %v2512, 0.02
        %v2521 = vmul.f32 %v2513, 0.02
        %v2522 = vmul.f32 %v2514, 0.02
        %v2523 = vmul.f32 %v2515, 0.02
        %v2524 = vadd.f32 %v2516, 3.5
        %v2525 = vadd.f32 %v2517, 3.5
        %v2526 = vadd.f32 %v2518, 3.5
        %v2527 = vadd.f32 %v2519, 3.5
        %v2528 = vadd.f32 %v2520, 3.5
        %v2529 = vadd.f32 %v2521, 3.5
        %v2530 = vadd.f32 %v2522, 3.5
        %v2531 = vadd.f32 %v2523, 3.5
        %v2532 = vmul.f32 %v2508, %v2524
        %v2533 = vmul.f32 %v2509, %v2525
        %v2534 = vmul.f32 %v2510, %v2526
        %v2535 = vmul.f32 %v2511, %v2527
        %v2536 = vmul.f32 %v2512, %v2528
        %v2537 = vmul.f32 %v2513, %v2529
        %v2538 = vmul.f32 %v2514, %v2530
        %v2539 = vmul.f32 %v2515, %v2531
        %v2540 = vmul.f32 %v2500, 0.5
        %v2541 = vmul.f32 %v2501, 0.5
        %v2542 = vmul.f32 %v2502, 0.5
        %v2543 = vmul.f32 %v2503, 0.5
        %v2544 = vmul.f32 %v2504, 0.5
        %v2545 = vmul.f32 %v2505, 0.5
        %v2546 = vmul.f32 %v2506, 0.5
        %v2547 = vmul.f32 %v2507, 0.5
        %v2548 = vsub.f32 %v748, %v2540
        %v2549 = vsub.f32 %v749, %v2541
        %v2550 = vsub.f32 %v750, %v2542
        %v2551 = vsub.f32 %v751, %v2543
        %v2552 = vsub.f32 %v752, %v2544
        %v2553 = vsub.f32 %v753, %v2545
        %v2554 = vsub.f32 %v754, %v2546
        %v2555 = vsub.f32 %v755, %v2547
        %v2556 = vadd.f32 %v2532, %v2548
        %v2557 = vadd.f32 %v2533, %v2549
        %v2558 = vadd.f32 %v2534, %v2550
        %v2559 = vadd.f32 %v2535, %v2551
        %v2560 = vadd.f32 %v2536, %v2552
        %v2561 = vadd.f32 %v2537, %v2553
        %v2562 = vadd.f32 %v2538, %v2554
        %v2563 = vadd.f32 %v2539, %v2555
        %v2564 = vmul.f32 %v2500, 0.99
        %v2565 = vmul.f32 %v2501, 0.99
        %v2566 = vmul.f32 %v2502, 0.99
        %v2567 = vmul.f32 %v2503, 0.99
        %v2568 = vmul.f32 %v2504, 0.99
        %v2569 = vmul.f32 %v2505, 0.99
        %v2570 = vmul.f32 %v2506, 0.99
        %v2571 = vmul.f32 %v2507, 0.99
        %v2572 = vmul.f32 %v2556, 0.002
        %v2573 = vmul.f32 %v2557, 0.002
        %v2574 = vmul.f32 %v2558, 0.002
        %v2575 = vmul.f32 %v2559, 0.002
        %v2576 = vmul.f32 %v2560, 0.002
        %v2577 = vmul.f32 %v2561, 0.002
        %v2578 = vmul.f32 %v2562, 0.002
        %v2579 = vmul.f32 %v2563, 0.002
        %v2580 = vadd.f32 %v2564, %v2572
        %v2581 = vadd.f32 %v2565, %v2573
        %v2582 = vadd.f32 %v2566, %v2574
        %v2583 = vadd.f32 %v2567, %v2575
        %v2584 = vadd.f32 %v2568, %v2576
        %v2585 = vadd.f32 %v2569, %v2577
        %v2586 = vadd.f32 %v2570, %v2578
        %v2587 = vadd.f32 %v2571, %v2579
        %vm2588 = vcmp.gt.f32.partialorder %v2556, 30.0
        %vm2589 = vcmp.gt.f32.partialorder %v2557, 30.0
        %vm2590 = vcmp.gt.f32.partialorder %v2558, 30.0
        %vm2591 = vcmp.gt.f32.partialorder %v2559, 30.0
        %vm2592 = vcmp.gt.f32.partialorder %v2560, 30.0
        %vm2593 = vcmp.gt.f32.partialorder %v2561, 30.0
        %vm2594 = vcmp.gt.f32.partialorder %v2562, 30.0
        %vm2595 = vcmp.gt.f32.partialorder %v2563, 30.0
        %v2596 = vsel %vm2588, 1.0, 0.0
        %v2597 = vsel %vm2589, 1.0, 0.0
        %v2598 = vsel %vm2590, 1.0, 0.0
        %v2599 = vsel %vm2591, 1.0, 0.0
        %v2600 = vsel %vm2592, 1.0, 0.0
        %v2601 = vsel %vm2593, 1.0, 0.0
        %v2602 = vsel %vm2594, 1.0, 0.0
        %v2603 = vsel %vm2595, 1.0, 0.0
        %v2604 = vadd.f32 %v2484, %v2596
        %v2605 = vadd.f32 %v2485, %v2597
        %v2606 = vadd.f32 %v2486, %v2598
        %v2607 = vadd.f32 %v2487, %v2599
        %v2608 = vadd.f32 %v2488, %v2600
        %v2609 = vadd.f32 %v2489, %v2601
        %v2610 = vadd.f32 %v2490, %v2602
        %v2611 = vadd.f32 %v2491, %v2603
        %v2612 = vsel %vm2588, 8.0, 0.0
        %v2613 = vsel %vm2589, 8.0, 0.0
        %v2614 = vsel %vm2590, 8.0, 0.0
        %v2615 = vsel %vm2591, 8.0, 0.0
        %v2616 = vsel %vm2592, 8.0, 0.0
        %v2617 = vsel %vm2593, 8.0, 0.0
        %v2618 = vsel %vm2594, 8.0, 0.0
        %v2619 = vsel %vm2595, 8.0, 0.0
        %v2620 = vadd.f32 %v2580, %v2612
        %v2621 = vadd.f32 %v2581, %v2613
        %v2622 = vadd.f32 %v2582, %v2614
        %v2623 = vadd.f32 %v2583, %v2615
        %v2624 = vadd.f32 %v2584, %v2616
        %v2625 = vadd.f32 %v2585, %v2617
        %v2626 = vadd.f32 %v2586, %v2618
        %v2627 = vadd.f32 %v2587, %v2619
        %v2628 = vsel %vm2588, -65.0, %v2556
        %v2629 = vsel %vm2589, -65.0, %v2557
        %v2630 = vsel %vm2590, -65.0, %v2558
        %v2631 = vsel %vm2591, -65.0, %v2559
        %v2632 = vsel %vm2592, -65.0, %v2560
        %v2633 = vsel %vm2593, -65.0, %v2561
        %v2634 = vsel %vm2594, -65.0, %v2562
        %v2635 = vsel %vm2595, -65.0, %v2563
        %v2636 = vmul.f32 %v2628, 0.02
        %v2637 = vmul.f32 %v2629, 0.02
        %v2638 = vmul.f32 %v2630, 0.02
        %v2639 = vmul.f32 %v2631, 0.02
        %v2640 = vmul.f32 %v2632, 0.02
        %v2641 = vmul.f32 %v2633, 0.02
        %v2642 = vmul.f32 %v2634, 0.02
        %v2643 = vmul.f32 %v2635, 0.02
        %v2644 = vadd.f32 %v2636, 3.5
        %v2645 = vadd.f32 %v2637, 3.5
        %v2646 = vadd.f32 %v2638, 3.5
        %v2647 = vadd.f32 %v2639, 3.5
        %v2648 = vadd.f32 %v2640, 3.5
        %v2649 = vadd.f32 %v2641, 3.5
        %v2650 = vadd.f32 %v2642, 3.5
        %v2651 = vadd.f32 %v2643, 3.5
        %v2652 = vmul.f32 %v2628, %v2644
        %v2653 = vmul.f32 %v2629, %v2645
        %v2654 = vmul.f32 %v2630, %v2646
        %v2655 = vmul.f32 %v2631, %v2647
        %v2656 = vmul.f32 %v2632, %v2648
        %v2657 = vmul.f32 %v2633, %v2649
        %v2658 = vmul.f32 %v2634, %v2650
        %v2659 = vmul.f32 %v2635, %v2651
        %v2660 = vmul.f32 %v2620, 0.5
        %v2661 = vmul.f32 %v2621, 0.5
        %v2662 = vmul.f32 %v2622, 0.5
        %v2663 = vmul.f32 %v2623, 0.5
        %v2664 = vmul.f32 %v2624, 0.5
        %v2665 = vmul.f32 %v2625, 0.5
        %v2666 = vmul.f32 %v2626, 0.5
        %v2667 = vmul.f32 %v2627, 0.5
        %v2668 = vsub.f32 %v748, %v2660
        %v2669 = vsub.f32 %v749, %v2661
        %v2670 = vsub.f32 %v750, %v2662
        %v2671 = vsub.f32 %v751, %v2663
        %v2672 = vsub.f32 %v752, %v2664
        %v2673 = vsub.f32 %v753, %v2665
        %v2674 = vsub.f32 %v754, %v2666
        %v2675 = vsub.f32 %v755, %v2667
        %v2676 = vadd.f32 %v2652, %v2668
        %v2677 = vadd.f32 %v2653, %v2669
        %v2678 = vadd.f32 %v2654, %v2670
        %v2679 = vadd.f32 %v2655, %v2671
        %v2680 = vadd.f32 %v2656, %v2672
        %v2681 = vadd.f32 %v2657, %v2673
        %v2682 = vadd.f32 %v2658, %v2674
        %v2683 = vadd.f32 %v2659, %v2675
        %v2684 = vmul.f32 %v2620, 0.99
        %v2685 = vmul.f32 %v2621, 0.99
        %v2686 = vmul.f32 %v2622, 0.99
        %v2687 = vmul.f32 %v2623, 0.99
        %v2688 = vmul.f32 %v2624, 0.99
        %v2689 = vmul.f32 %v2625, 0.99
        %v2690 = vmul.f32 %v2626, 0.99
        %v2691 = vmul.f32 %v2627, 0.99
        %v2692 = vmul.f32 %v2676, 0.002
        %v2693 = vmul.f32 %v2677, 0.002
        %v2694 = vmul.f32 %v2678, 0.002
        %v2695 = vmul.f32 %v2679, 0.002
        %v2696 = vmul.f32 %v2680, 0.002
        %v2697 = vmul.f32 %v2681, 0.002
        %v2698 = vmul.f32 %v2682, 0.002
        %v2699 = vmul.f32 %v2683, 0.002
        %v2700 = vadd.f32 %v2684, %v2692
        %v2701 = vadd.f32 %v2685, %v2693
        %v2702 = vadd.f32 %v2686, %v2694
        %v2703 = vadd.f32 %v2687, %v2695
        %v2704 = vadd.f32 %v2688, %v2696
        %v2705 = vadd.f32 %v2689, %v2697
        %v2706 = vadd.f32 %v2690, %v2698
        %v2707 = vadd.f32 %v2691, %v2699
        %vm2708 = vcmp.gt.f32.partialorder %v2676, 30.0
        %vm2709 = vcmp.gt.f32.partialorder %v2677, 30.0
        %vm2710 = vcmp.gt.f32.partialorder %v2678, 30.0
        %vm2711 = vcmp.gt.f32.partialorder %v2679, 30.0
        %vm2712 = vcmp.gt.f32.partialorder %v2680, 30.0
        %vm2713 = vcmp.gt.f32.partialorder %v2681, 30.0
        %vm2714 = vcmp.gt.f32.partialorder %v2682, 30.0
        %vm2715 = vcmp.gt.f32.partialorder %v2683, 30.0
        %v2716 = vsel %vm2708, 1.0, 0.0
        %v2717 = vsel %vm2709, 1.0, 0.0
        %v2718 = vsel %vm2710, 1.0, 0.0
        %v2719 = vsel %vm2711, 1.0, 0.0
        %v2720 = vsel %vm2712, 1.0, 0.0
        %v2721 = vsel %vm2713, 1.0, 0.0
        %v2722 = vsel %vm2714, 1.0, 0.0
        %v2723 = vsel %vm2715, 1.0, 0.0
        %v2724 = vadd.f32 %v2604, %v2716
        %v2725 = vadd.f32 %v2605, %v2717
        %v2726 = vadd.f32 %v2606, %v2718
        %v2727 = vadd.f32 %v2607, %v2719
        %v2728 = vadd.f32 %v2608, %v2720
        %v2729 = vadd.f32 %v2609, %v2721
        %v2730 = vadd.f32 %v2610, %v2722
        %v2731 = vadd.f32 %v2611, %v2723
        %v2732 = vsel %vm2708, 8.0, 0.0
        %v2733 = vsel %vm2709, 8.0, 0.0
        %v2734 = vsel %vm2710, 8.0, 0.0
        %v2735 = vsel %vm2711, 8.0, 0.0
        %v2736 = vsel %vm2712, 8.0, 0.0
        %v2737 = vsel %vm2713, 8.0, 0.0
        %v2738 = vsel %vm2714, 8.0, 0.0
        %v2739 = vsel %vm2715, 8.0, 0.0
        %v2740 = vadd.f32 %v2700, %v2732
        %v2741 = vadd.f32 %v2701, %v2733
        %v2742 = vadd.f32 %v2702, %v2734
        %v2743 = vadd.f32 %v2703, %v2735
        %v2744 = vadd.f32 %v2704, %v2736
        %v2745 = vadd.f32 %v2705, %v2737
        %v2746 = vadd.f32 %v2706, %v2738
        %v2747 = vadd.f32 %v2707, %v2739
        %v2748 = vsel %vm2708, -65.0, %v2676
        %v2749 = vsel %vm2709, -65.0, %v2677
        %v2750 = vsel %vm2710, -65.0, %v2678
        %v2751 = vsel %vm2711, -65.0, %v2679
        %v2752 = vsel %vm2712, -65.0, %v2680
        %v2753 = vsel %vm2713, -65.0, %v2681
        %v2754 = vsel %vm2714, -65.0, %v2682
        %v2755 = vsel %vm2715, -65.0, %v2683
        %v2756 = vmul.f32 %v2748, 0.02
        %v2757 = vmul.f32 %v2749, 0.02
        %v2758 = vmul.f32 %v2750, 0.02
        %v2759 = vmul.f32 %v2751, 0.02
        %v2760 = vmul.f32 %v2752, 0.02
        %v2761 = vmul.f32 %v2753, 0.02
        %v2762 = vmul.f32 %v2754, 0.02
        %v2763 = vmul.f32 %v2755, 0.02
        %v2764 = vadd.f32 %v2756, 3.5
        %v2765 = vadd.f32 %v2757, 3.5
        %v2766 = vadd.f32 %v2758, 3.5
        %v2767 = vadd.f32 %v2759, 3.5
        %v2768 = vadd.f32 %v2760, 3.5
        %v2769 = vadd.f32 %v2761, 3.5
        %v2770 = vadd.f32 %v2762, 3.5
        %v2771 = vadd.f32 %v2763, 3.5
        %v2772 = vmul.f32 %v2748, %v2764
        %v2773 = vmul.f32 %v2749, %v2765
        %v2774 = vmul.f32 %v2750, %v2766
        %v2775 = vmul.f32 %v2751, %v2767
        %v2776 = vmul.f32 %v2752, %v2768
        %v2777 = vmul.f32 %v2753, %v2769
        %v2778 = vmul.f32 %v2754, %v2770
        %v2779 = vmul.f32 %v2755, %v2771
        %v2780 = vmul.f32 %v2740, 0.5
        %v2781 = vmul.f32 %v2741, 0.5
        %v2782 = vmul.f32 %v2742, 0.5
        %v2783 = vmul.f32 %v2743, 0.5
        %v2784 = vmul.f32 %v2744, 0.5
        %v2785 = vmul.f32 %v2745, 0.5
        %v2786 = vmul.f32 %v2746, 0.5
        %v2787 = vmul.f32 %v2747, 0.5
        %v2788 = vsub.f32 %v748, %v2780
        %v2789 = vsub.f32 %v749, %v2781
        %v2790 = vsub.f32 %v750, %v2782
        %v2791 = vsub.f32 %v751, %v2783
        %v2792 = vsub.f32 %v752, %v2784
        %v2793 = vsub.f32 %v753, %v2785
        %v2794 = vsub.f32 %v754, %v2786
        %v2795 = vsub.f32 %v755, %v2787
        %v2796 = vadd.f32 %v2772, %v2788
        %v2797 = vadd.f32 %v2773, %v2789
        %v2798 = vadd.f32 %v2774, %v2790
        %v2799 = vadd.f32 %v2775, %v2791
        %v2800 = vadd.f32 %v2776, %v2792
        %v2801 = vadd.f32 %v2777, %v2793
        %v2802 = vadd.f32 %v2778, %v2794
        %v2803 = vadd.f32 %v2779, %v2795
        %v2804 = vmul.f32 %v2740, 0.99
        %v2805 = vmul.f32 %v2741, 0.99
        %v2806 = vmul.f32 %v2742, 0.99
        %v2807 = vmul.f32 %v2743, 0.99
        %v2808 = vmul.f32 %v2744, 0.99
        %v2809 = vmul.f32 %v2745, 0.99
        %v2810 = vmul.f32 %v2746, 0.99
        %v2811 = vmul.f32 %v2747, 0.99
        %v2812 = vmul.f32 %v2796, 0.002
        %v2813 = vmul.f32 %v2797, 0.002
        %v2814 = vmul.f32 %v2798, 0.002
        %v2815 = vmul.f32 %v2799, 0.002
        %v2816 = vmul.f32 %v2800, 0.002
        %v2817 = vmul.f32 %v2801, 0.002
        %v2818 = vmul.f32 %v2802, 0.002
        %v2819 = vmul.f32 %v2803, 0.002
        %v2820 = vadd.f32 %v2804, %v2812
        %v2821 = vadd.f32 %v2805, %v2813
        %v2822 = vadd.f32 %v2806, %v2814
        %v2823 = vadd.f32 %v2807, %v2815
        %v2824 = vadd.f32 %v2808, %v2816
        %v2825 = vadd.f32 %v2809, %v2817
        %v2826 = vadd.f32 %v2810, %v2818
        %v2827 = vadd.f32 %v2811, %v2819
        %vm2828 = vcmp.gt.f32.partialorder %v2796, 30.0
        %vm2829 = vcmp.gt.f32.partialorder %v2797, 30.0
        %vm2830 = vcmp.gt.f32.partialorder %v2798, 30.0
        %vm2831 = vcmp.gt.f32.partialorder %v2799, 30.0
        %vm2832 = vcmp.gt.f32.partialorder %v2800, 30.0
        %vm2833 = vcmp.gt.f32.partialorder %v2801, 30.0
        %vm2834 = vcmp.gt.f32.partialorder %v2802, 30.0
        %vm2835 = vcmp.gt.f32.partialorder %v2803, 30.0
        %v2836 = vsel %vm2828, 1.0, 0.0
        %v2837 = vsel %vm2829, 1.0, 0.0
        %v2838 = vsel %vm2830, 1.0, 0.0
        %v2839 = vsel %vm2831, 1.0, 0.0
        %v2840 = vsel %vm2832, 1.0, 0.0
        %v2841 = vsel %vm2833, 1.0, 0.0
        %v2842 = vsel %vm2834, 1.0, 0.0
        %v2843 = vsel %vm2835, 1.0, 0.0
        %v2844 = vadd.f32 %v2724, %v2836
        %v2845 = vadd.f32 %v2725, %v2837
        %v2846 = vadd.f32 %v2726, %v2838
        %v2847 = vadd.f32 %v2727, %v2839
        %v2848 = vadd.f32 %v2728, %v2840
        %v2849 = vadd.f32 %v2729, %v2841
        %v2850 = vadd.f32 %v2730, %v2842
        %v2851 = vadd.f32 %v2731, %v2843
        %v2852 = vsel %vm2828, 8.0, 0.0
        %v2853 = vsel %vm2829, 8.0, 0.0
        %v2854 = vsel %vm2830, 8.0, 0.0
        %v2855 = vsel %vm2831, 8.0, 0.0
        %v2856 = vsel %vm2832, 8.0, 0.0
        %v2857 = vsel %vm2833, 8.0, 0.0
        %v2858 = vsel %vm2834, 8.0, 0.0
        %v2859 = vsel %vm2835, 8.0, 0.0
        %v2860 = vadd.f32 %v2820, %v2852
        %v2861 = vadd.f32 %v2821, %v2853
        %v2862 = vadd.f32 %v2822, %v2854
        %v2863 = vadd.f32 %v2823, %v2855
        %v2864 = vadd.f32 %v2824, %v2856
        %v2865 = vadd.f32 %v2825, %v2857
        %v2866 = vadd.f32 %v2826, %v2858
        %v2867 = vadd.f32 %v2827, %v2859
        %v2868 = vsel %vm2828, -65.0, %v2796
        %v2869 = vsel %vm2829, -65.0, %v2797
        %v2870 = vsel %vm2830, -65.0, %v2798
        %v2871 = vsel %vm2831, -65.0, %v2799
        %v2872 = vsel %vm2832, -65.0, %v2800
        %v2873 = vsel %vm2833, -65.0, %v2801
        %v2874 = vsel %vm2834, -65.0, %v2802
        %v2875 = vsel %vm2835, -65.0, %v2803
        %v2876 = vmul.f32 %v2868, 0.02
        %v2877 = vmul.f32 %v2869, 0.02
        %v2878 = vmul.f32 %v2870, 0.02
        %v2879 = vmul.f32 %v2871, 0.02
        %v2880 = vmul.f32 %v2872, 0.02
        %v2881 = vmul.f32 %v2873, 0.02
        %v2882 = vmul.f32 %v2874, 0.02
        %v2883 = vmul.f32 %v2875, 0.02
        %v2884 = vadd.f32 %v2876, 3.5
        %v2885 = vadd.f32 %v2877, 3.5
        %v2886 = vadd.f32 %v2878, 3.5
        %v2887 = vadd.f32 %v2879, 3.5
        %v2888 = vadd.f32 %v2880, 3.5
        %v2889 = vadd.f32 %v2881, 3.5
        %v2890 = vadd.f32 %v2882, 3.5
        %v2891 = vadd.f32 %v2883, 3.5
        %v2892 = vmul.f32 %v2868, %v2884
        %v2893 = vmul.f32 %v2869, %v2885
        %v2894 = vmul.f32 %v2870, %v2886
        %v2895 = vmul.f32 %v2871, %v2887
        %v2896 = vmul.f32 %v2872, %v2888
        %v2897 = vmul.f32 %v2873, %v2889
        %v2898 = vmul.f32 %v2874, %v2890
        %v2899 = vmul.f32 %v2875, %v2891
        %v2900 = vmul.f32 %v2860, 0.5
        %v2901 = vmul.f32 %v2861, 0.5
        %v2902 = vmul.f32 %v2862, 0.5
        %v2903 = vmul.f32 %v2863, 0.5
        %v2904 = vmul.f32 %v2864, 0.5
        %v2905 = vmul.f32 %v2865, 0.5
        %v2906 = vmul.f32 %v2866, 0.5
        %v2907 = vmul.f32 %v2867, 0.5
        %v2908 = vsub.f32 %v748, %v2900
        %v2909 = vsub.f32 %v749, %v2901
        %v2910 = vsub.f32 %v750, %v2902
        %v2911 = vsub.f32 %v751, %v2903
        %v2912 = vsub.f32 %v752, %v2904
        %v2913 = vsub.f32 %v753, %v2905
        %v2914 = vsub.f32 %v754, %v2906
        %v2915 = vsub.f32 %v755, %v2907
        %v2916 = vadd.f32 %v2892, %v2908
        %v2917 = vadd.f32 %v2893, %v2909
        %v2918 = vadd.f32 %v2894, %v2910
        %v2919 = vadd.f32 %v2895, %v2911
        %v2920 = vadd.f32 %v2896, %v2912
        %v2921 = vadd.f32 %v2897, %v2913
        %v2922 = vadd.f32 %v2898, %v2914
        %v2923 = vadd.f32 %v2899, %v2915
        %v2924 = vmul.f32 %v2860, 0.99
        %v2925 = vmul.f32 %v2861, 0.99
        %v2926 = vmul.f32 %v2862, 0.99
        %v2927 = vmul.f32 %v2863, 0.99
        %v2928 = vmul.f32 %v2864, 0.99
        %v2929 = vmul.f32 %v2865, 0.99
        %v2930 = vmul.f32 %v2866, 0.99
        %v2931 = vmul.f32 %v2867, 0.99
        %v2932 = vmul.f32 %v2916, 0.002
        %v2933 = vmul.f32 %v2917, 0.002
        %v2934 = vmul.f32 %v2918, 0.002
        %v2935 = vmul.f32 %v2919, 0.002
        %v2936 = vmul.f32 %v2920, 0.002
        %v2937 = vmul.f32 %v2921, 0.002
        %v2938 = vmul.f32 %v2922, 0.002
        %v2939 = vmul.f32 %v2923, 0.002
        %v2940 = vadd.f32 %v2924, %v2932
        %v2941 = vadd.f32 %v2925, %v2933
        %v2942 = vadd.f32 %v2926, %v2934
        %v2943 = vadd.f32 %v2927, %v2935
        %v2944 = vadd.f32 %v2928, %v2936
        %v2945 = vadd.f32 %v2929, %v2937
        %v2946 = vadd.f32 %v2930, %v2938
        %v2947 = vadd.f32 %v2931, %v2939
        %vm2948 = vcmp.gt.f32.partialorder %v2916, 30.0
        %vm2949 = vcmp.gt.f32.partialorder %v2917, 30.0
        %vm2950 = vcmp.gt.f32.partialorder %v2918, 30.0
        %vm2951 = vcmp.gt.f32.partialorder %v2919, 30.0
        %vm2952 = vcmp.gt.f32.partialorder %v2920, 30.0
        %vm2953 = vcmp.gt.f32.partialorder %v2921, 30.0
        %vm2954 = vcmp.gt.f32.partialorder %v2922, 30.0
        %vm2955 = vcmp.gt.f32.partialorder %v2923, 30.0
        %v2956 = vsel %vm2948, 1.0, 0.0
        %v2957 = vsel %vm2949, 1.0, 0.0
        %v2958 = vsel %vm2950, 1.0, 0.0
        %v2959 = vsel %vm2951, 1.0, 0.0
        %v2960 = vsel %vm2952, 1.0, 0.0
        %v2961 = vsel %vm2953, 1.0, 0.0
        %v2962 = vsel %vm2954, 1.0, 0.0
        %v2963 = vsel %vm2955, 1.0, 0.0
        %v2964 = vadd.f32 %v2844, %v2956
        %v2965 = vadd.f32 %v2845, %v2957
        %v2966 = vadd.f32 %v2846, %v2958
        %v2967 = vadd.f32 %v2847, %v2959
        %v2968 = vadd.f32 %v2848, %v2960
        %v2969 = vadd.f32 %v2849, %v2961
        %v2970 = vadd.f32 %v2850, %v2962
        %v2971 = vadd.f32 %v2851, %v2963
        %v2972 = vsel %vm2948, 8.0, 0.0
        %v2973 = vsel %vm2949, 8.0, 0.0
        %v2974 = vsel %vm2950, 8.0, 0.0
        %v2975 = vsel %vm2951, 8.0, 0.0
        %v2976 = vsel %vm2952, 8.0, 0.0
        %v2977 = vsel %vm2953, 8.0, 0.0
        %v2978 = vsel %vm2954, 8.0, 0.0
        %v2979 = vsel %vm2955, 8.0, 0.0
        %v2980 = vadd.f32 %v2940, %v2972
        %v2981 = vadd.f32 %v2941, %v2973
        %v2982 = vadd.f32 %v2942, %v2974
        %v2983 = vadd.f32 %v2943, %v2975
        %v2984 = vadd.f32 %v2944, %v2976
        %v2985 = vadd.f32 %v2945, %v2977
        %v2986 = vadd.f32 %v2946, %v2978
        %v2987 = vadd.f32 %v2947, %v2979
        %v2988 = vsel %vm2948, -65.0, %v2916
        %v2989 = vsel %vm2949, -65.0, %v2917
        %v2990 = vsel %vm2950, -65.0, %v2918
        %v2991 = vsel %vm2951, -65.0, %v2919
        %v2992 = vsel %vm2952, -65.0, %v2920
        %v2993 = vsel %vm2953, -65.0, %v2921
        %v2994 = vsel %vm2954, -65.0, %v2922
        %v2995 = vsel %vm2955, -65.0, %v2923
        %v2996 = vmul.f32 %v2988, 0.02
        %v2997 = vmul.f32 %v2989, 0.02
        %v2998 = vmul.f32 %v2990, 0.02
        %v2999 = vmul.f32 %v2991, 0.02
        %v3000 = vmul.f32 %v2992, 0.02
        %v3001 = vmul.f32 %v2993, 0.02
        %v3002 = vmul.f32 %v2994, 0.02
        %v3003 = vmul.f32 %v2995, 0.02
        %v3004 = vadd.f32 %v2996, 3.5
        %v3005 = vadd.f32 %v2997, 3.5
        %v3006 = vadd.f32 %v2998, 3.5
        %v3007 = vadd.f32 %v2999, 3.5
        %v3008 = vadd.f32 %v3000, 3.5
        %v3009 = vadd.f32 %v3001, 3.5
        %v3010 = vadd.f32 %v3002, 3.5
        %v3011 = vadd.f32 %v3003, 3.5
        %v3012 = vmul.f32 %v2988, %v3004
        %v3013 = vmul.f32 %v2989, %v3005
        %v3014 = vmul.f32 %v2990, %v3006
        %v3015 = vmul.f32 %v2991, %v3007
        %v3016 = vmul.f32 %v2992, %v3008
        %v3017 = vmul.f32 %v2993, %v3009
        %v3018 = vmul.f32 %v2994, %v3010
        %v3019 = vmul.f32 %v2995, %v3011
        %v3020 = vmul.f32 %v2980, 0.5
        %v3021 = vmul.f32 %v2981, 0.5
        %v3022 = vmul.f32 %v2982, 0.5
        %v3023 = vmul.f32 %v2983, 0.5
        %v3024 = vmul.f32 %v2984, 0.5
        %v3025 = vmul.f32 %v2985, 0.5
        %v3026 = vmul.f32 %v2986, 0.5
        %v3027 = vmul.f32 %v2987, 0.5
        %v3028 = vsub.f32 %v748, %v3020
        %v3029 = vsub.f32 %v749, %v3021
        %v3030 = vsub.f32 %v750, %v3022
        %v3031 = vsub.f32 %v751, %v3023
        %v3032 = vsub.f32 %v752, %v3024
        %v3033 = vsub.f32 %v753, %v3025
        %v3034 = vsub.f32 %v754, %v3026
        %v3035 = vsub.f32 %v755, %v3027
        %v3036 = vadd.f32 %v3012, %v3028
        %v3037 = vadd.f32 %v3013, %v3029
        %v3038 = vadd.f32 %v3014, %v3030
        %v3039 = vadd.f32 %v3015, %v3031
        %v3040 = vadd.f32 %v3016, %v3032
        %v3041 = vadd.f32 %v3017, %v3033
        %v3042 = vadd.f32 %v3018, %v3034
        %v3043 = vadd.f32 %v3019, %v3035
        %vm3044 = vcmp.gt.f32.partialorder %v3036, 30.0
        %vm3045 = vcmp.gt.f32.partialorder %v3037, 30.0
        %vm3046 = vcmp.gt.f32.partialorder %v3038, 30.0
        %vm3047 = vcmp.gt.f32.partialorder %v3039, 30.0
        %vm3048 = vcmp.gt.f32.partialorder %v3040, 30.0
        %vm3049 = vcmp.gt.f32.partialorder %v3041, 30.0
        %vm3050 = vcmp.gt.f32.partialorder %v3042, 30.0
        %vm3051 = vcmp.gt.f32.partialorder %v3043, 30.0
        %v3052 = vsel %vm3044, 1.0, 0.0
        %v3053 = vsel %vm3045, 1.0, 0.0
        %v3054 = vsel %vm3046, 1.0, 0.0
        %v3055 = vsel %vm3047, 1.0, 0.0
        %v3056 = vsel %vm3048, 1.0, 0.0
        %v3057 = vsel %vm3049, 1.0, 0.0
        %v3058 = vsel %vm3050, 1.0, 0.0
        %v3059 = vsel %vm3051, 1.0, 0.0
        %v3060 = vadd.f32 %v2964, %v3052
        %v3061 = vadd.f32 %v2965, %v3053
        %v3062 = vadd.f32 %v2966, %v3054
        %v3063 = vadd.f32 %v2967, %v3055
        %v3064 = vadd.f32 %v2968, %v3056
        %v3065 = vadd.f32 %v2969, %v3057
        %v3066 = vadd.f32 %v2970, %v3058
        %v3067 = vadd.f32 %v2971, %v3059
        %v3068 = vmul.f32 %v3060, 0.05
        %v3069 = vmul.f32 %v3061, 0.05
        %v3070 = vmul.f32 %v3062, 0.05
        %v3071 = vmul.f32 %v3063, 0.05
        %v3072 = vmul.f32 %v3064, 0.05
        %v3073 = vmul.f32 %v3065, 0.05
        %v3074 = vmul.f32 %v3066, 0.05
        %v3075 = vmul.f32 %v3067, 0.05
        %3076 = vst [vmem:[%s462] sm:$0xff] %v3068
        %3077 = vst [vmem:[%s462 + $0x8] sm:$0xff] %v3069
        %3078 = vst [vmem:[%s462 + $0x10] sm:$0xff] %v3070
        %3079 = vst [vmem:[%s462 + $0x18] sm:$0xff] %v3071
        %3080 = vst [vmem:[%s462 + $0x20] sm:$0xff] %v3072
        %3081 = vst [vmem:[%s462 + $0x28] sm:$0xff] %v3073
        %3082 = vst [vmem:[%s462 + $0x30] sm:$0xff] %v3074
        %3083 = vst [vmem:[%s462 + $0x38] sm:$0xff] %v3075
        %v3084 = vld [vmem:[%s469] sm:$0xff]
        %v3085 = vld [vmem:[%s469 + $0x8] sm:$0xff]
        %v3086 = vld [vmem:[%s469 + $0x10] sm:$0xff]
        %v3087 = vld [vmem:[%s469 + $0x18] sm:$0xff]
        %v3088 = vld [vmem:[%s469 + $0x20] sm:$0xff]
        %v3089 = vld [vmem:[%s469 + $0x28] sm:$0xff]
        %v3090 = vld [vmem:[%s469 + $0x30] sm:$0xff]
        %v3091 = vld [vmem:[%s469 + $0x38] sm:$0xff]
        %vm3092 = vcmp.ge.f32.partialorder %v3084, 0.5
        %vm3093 = vcmp.ge.f32.partialorder %v3085, 0.5
        %vm3094 = vcmp.ge.f32.partialorder %v3086, 0.5
        %vm3095 = vcmp.ge.f32.partialorder %v3087, 0.5
        %vm3096 = vcmp.ge.f32.partialorder %v3088, 0.5
        %vm3097 = vcmp.ge.f32.partialorder %v3089, 0.5
        %vm3098 = vcmp.ge.f32.partialorder %v3090, 0.5
        %vm3099 = vcmp.ge.f32.partialorder %v3091, 0.5
        %v3100 = vsel %vm3092, 1.0, 0.0
        %v3101 = vsel %vm3093, 1.0, 0.0
        %v3102 = vsel %vm3094, 1.0, 0.0
        %v3103 = vsel %vm3095, 1.0, 0.0
        %v3104 = vsel %vm3096, 1.0, 0.0
        %v3105 = vsel %vm3097, 1.0, 0.0
        %v3106 = vsel %vm3098, 1.0, 0.0
        %v3107 = vsel %vm3099, 1.0, 0.0
        %v3108 = vadd.f32 %v3100, %v3101
        %3109 = vadd.xlane.f32.xlu0 %v3108
        %v3110 = vpop.xlane.xlu0 %3109
        %v3111 = vadd.f32 %v3102, %v3103
        %3112 = vadd.xlane.f32.xlu0 %v3111
        %v3113 = vpop.xlane.xlu0 %3112
        %v3114 = vadd.f32 %v3104, %v3105
        %3115 = vadd.xlane.f32.xlu0 %v3114
        %v3116 = vpop.xlane.xlu0 %3115
        %v3117 = vadd.f32 %v3106, %v3107
        %3118 = vadd.xlane.f32.xlu0 %v3117
        %v3119 = vpop.xlane.xlu0 %3118
        %vm3120 = vcmp.gt.f32.partialorder %v3110, 0.0
        %vm3121 = vcmp.gt.f32.partialorder %v3113, 0.0
        %vm3122 = vcmp.gt.f32.partialorder %v3116, 0.0
        %vm3123 = vcmp.gt.f32.partialorder %v3119, 0.0
        %v3124 = vsel %vm3120, 1.0, 0.0
        %v3125 = vsel %vm3121, 1.0, 0.0
        %v3126 = vsel %vm3122, 1.0, 0.0
        %v3127 = vsel %vm3123, 1.0, 0.0
        %v3128 = vld [vmem:[%s494] sm:$0xff]
        %v3129 = vld [vmem:[%s494 + $0x8] sm:$0xff]
        %v3130 = vld [vmem:[%s494 + $0x10] sm:$0xff]
        %v3131 = vld [vmem:[%s494 + $0x18] sm:$0xff]
        %v3132 = vadd.f32 %v3128, %v3124
        %v3133 = vadd.f32 %v3129, %v3125
        %v3134 = vadd.f32 %v3130, %v3126
        %v3135 = vadd.f32 %v3131, %v3127
        %vm3136 = vcmask 7168
        %3137 = vst.msk [vmem:[%s511] sm:$0xff] %vm3136, %v3132
        %3138 = vst.msk [vmem:[%s511 + $0x8] sm:$0xff] %vm3136, %v3133
        %3139 = vst.msk [vmem:[%s511 + $0x10] sm:$0xff] %vm3136, %v3134
        %3140 = vst.msk [vmem:[%s511 + $0x18] sm:$0xff] %vm3136, %v3135
        %v3141 = vld [vmem:[%s412] sm:$0xff]
        %v3142 = vld [vmem:[%s412 + $0x8] sm:$0xff]
        %v3143 = vld [vmem:[%s412 + $0x10] sm:$0xff]
        %v3144 = vld [vmem:[%s412 + $0x18] sm:$0xff]
        %v3145 = vld [vmem:[%s412 + $0x20] sm:$0xff]
        %v3146 = vld [vmem:[%s412 + $0x28] sm:$0xff]
        %v3147 = vld [vmem:[%s412 + $0x30] sm:$0xff]
        %v3148 = vld [vmem:[%s412 + $0x38] sm:$0xff]
        %v3149 = vsub.f32 1.0, %v3100
        %v3150 = vsub.f32 1.0, %v3101
        %v3151 = vsub.f32 1.0, %v3102
        %v3152 = vsub.f32 1.0, %v3103
        %v3153 = vsub.f32 1.0, %v3104
        %v3154 = vsub.f32 1.0, %v3105
        %v3155 = vsub.f32 1.0, %v3106
        %v3156 = vsub.f32 1.0, %v3107
        %v3157 = vmul.f32 %v3149, 1.5707964
        %v3158 = vmul.f32 %v3150, 1.5707964
        %v3159 = vmul.f32 %v3151, 1.5707964
        %v3160 = vmul.f32 %v3152, 1.5707964
        %v3161 = vmul.f32 %v3153, 1.5707964
        %v3162 = vmul.f32 %v3154, 1.5707964
        %v3163 = vmul.f32 %v3155, 1.5707964
        %v3164 = vmul.f32 %v3156, 1.5707964
        %v3165 = vmul.f32 %v3132, 1.442695
        %v3166 = vpow.pop %v3165
        %v3167 = vmul.f32 %v3133, 1.442695
        %v3168 = vpow.pop %v3167
        %v3169 = vmul.f32 %v3134, 1.442695
        %v3170 = vpow.pop %v3169
        %v3171 = vmul.f32 %v3135, 1.442695
        %v3172 = vpow.pop %v3171
        %v3173 = vmul.f32 %v3157, 2.0
        %v3174 = vmul.f32 %v3158, 2.0
        %v3175 = vmul.f32 %v3159, 2.0
        %v3176 = vmul.f32 %v3160, 2.0
        %v3177 = vmul.f32 %v3161, 2.0
        %v3178 = vmul.f32 %v3162, 2.0
        %v3179 = vmul.f32 %v3163, 2.0
        %v3180 = vmul.f32 %v3164, 2.0
        %3182 = vset.pattern.permute.xlu0 0
        %3183 = vperm.xlu0 %3182, %v3166
        %v3184 = vpop.permute.xlu0 %3183
        %3187 = vset.pattern.permute.xlu0 0
        %3188 = vperm.xlu0 %3187, %v3168
        %v3189 = vpop.permute.xlu0 %3188
        %3192 = vset.pattern.permute.xlu0 0
        %3193 = vperm.xlu0 %3192, %v3170
        %v3194 = vpop.permute.xlu0 %3193
        %3197 = vset.pattern.permute.xlu0 0
        %3198 = vperm.xlu0 %3197, %v3172
        %v3199 = vpop.permute.xlu0 %3198
        %v3201 = vmul.f32 %v3173, %v3184
        %v3202 = vmul.f32 %v3174, %v3184
        %v3203 = vmul.f32 %v3175, %v3189
        %v3204 = vmul.f32 %v3176, %v3189
        %v3205 = vmul.f32 %v3177, %v3194
        %v3206 = vmul.f32 %v3178, %v3194
        %v3207 = vmul.f32 %v3179, %v3199
        %v3208 = vmul.f32 %v3180, %v3199
        %v3209 = vsub.f32 %v3141, %v3201
        %v3210 = vsub.f32 %v3142, %v3202
        %v3211 = vsub.f32 %v3143, %v3203
        %v3212 = vsub.f32 %v3144, %v3204
        %v3213 = vsub.f32 %v3145, %v3205
        %v3214 = vsub.f32 %v3146, %v3206
        %v3215 = vsub.f32 %v3147, %v3207
        %v3216 = vsub.f32 %v3148, %v3208
        %v3217 = vsub.f32 %v3209, 1.0
        %v3218 = vsub.f32 %v3210, 1.0
        %v3219 = vsub.f32 %v3211, 1.0
        %v3220 = vsub.f32 %v3212, 1.0
        %v3221 = vsub.f32 %v3213, 1.0
        %v3222 = vsub.f32 %v3214, 1.0
        %v3223 = vsub.f32 %v3215, 1.0
        %v3224 = vsub.f32 %v3216, 1.0
        %v3225 = vtanh.pop %v3217
        %v3226 = vtanh.pop %v3218
        %v3227 = vtanh.pop %v3219
        %v3228 = vtanh.pop %v3220
        %v3229 = vtanh.pop %v3221
        %v3230 = vtanh.pop %v3222
        %v3231 = vtanh.pop %v3223
        %v3232 = vtanh.pop %v3224
        %v3233 = vadd.f32 %v3225, 1.0
        %v3234 = vadd.f32 %v3226, 1.0
        %v3235 = vadd.f32 %v3227, 1.0
        %v3236 = vadd.f32 %v3228, 1.0
        %v3237 = vadd.f32 %v3229, 1.0
        %v3238 = vadd.f32 %v3230, 1.0
        %v3239 = vadd.f32 %v3231, 1.0
        %v3240 = vadd.f32 %v3232, 1.0
        %vm3241 = vcmp.gt.f32.partialorder %v3124, 0.5
        %vm3242 = vcmp.gt.f32.partialorder %v3125, 0.5
        %vm3243 = vcmp.gt.f32.partialorder %v3126, 0.5
        %vm3244 = vcmp.gt.f32.partialorder %v3127, 0.5
        %v3245 = vsel %vm3241, %v3233, %v3141
        %v3246 = vsel %vm3241, %v3234, %v3142
        %v3247 = vsel %vm3242, %v3235, %v3143
        %v3248 = vsel %vm3242, %v3236, %v3144
        %v3249 = vsel %vm3243, %v3237, %v3145
        %v3250 = vsel %vm3243, %v3238, %v3146
        %v3251 = vsel %vm3244, %v3239, %v3147
        %v3252 = vsel %vm3244, %v3240, %v3148
        %3253 = vst [vmem:[%s483] sm:$0xff] %v3245
        %3254 = vst [vmem:[%s483 + $0x8] sm:$0xff] %v3246
        %3255 = vst [vmem:[%s483 + $0x10] sm:$0xff] %v3247
        %3256 = vst [vmem:[%s483 + $0x18] sm:$0xff] %v3248
        %3257 = vst [vmem:[%s483 + $0x20] sm:$0xff] %v3249
        %3258 = vst [vmem:[%s483 + $0x28] sm:$0xff] %v3250
        %3259 = vst [vmem:[%s483 + $0x30] sm:$0xff] %v3251
        %3260 = vst [vmem:[%s483 + $0x38] sm:$0xff] %v3252
        %s3261 = sand.u32 %s190, 1
        %s3262 = scalar_lea.sflag [#allocation4], %s3261
        %s3263 = sand.u32 %s190, 1
        %s3264 = smul.addr %s3263, 64
        %s3265 = scalar_lea.vmem [#allocation8], %s3264
        %s3266 = sand.u32 %s31, 1
        %s3267 = scalar_lea.sflag [#allocation10], %s3266
        %s3268 = sand.u32 %s216, 1
        %s3269 = smul.addr %s3268, 64
        %s3270 = scalar_lea.vmem [#allocation9], %s3269
        %s3271 = smul.u32 4, %s31
        %p3272 = scmp.lt.s32.totalorder %s3271, 7
        %s3273 = scalar_select %p3272, %s3271, 7
        %s3274 = smul.addr %s3273, 8
        %s3275 = scalar_lea.vmem %s8, %s3274
        %s3276 = sand.u32 %s31, 1
        %s3277 = scalar_lea.sflag [#allocation10], %s3276
        %s3278 = sand.u32 %s268, 1
        %s3279 = smul.addr %s3278, 64
        %s3280 = scalar_lea.vmem [#allocation11], %s3279
        // Predicated region
        $region57: #{tpu_custom_call.1} parent=43 // pred_check
          %p3281 = pneg %p200
        $region58: #{tpu_custom_call.1} parent=43 // pred_check_branch
          %3283 = sbr.rel (%p3281) target = $region60
        $region59: #{tpu_custom_call.1} parent=43 // pred_region
          %s3284 = smul.u32 4, %s31
          %3286 = vsyncadd %s3262, 0
          %s3287 = smul.addr %s3284, 2
          %s3288 = smul.addr %s3287, 8
          %s3289 = scalar_lea.hbm %s6, %s3288
          %s3290 = sshll.u32 %s3265, 4
          %s3291 = int_to_ptr.vmem [resolvable:$true] %s3290
          %s3292 = sshll.u32 %s3289, 4
          %s3293 = int_to_ptr.hbm [resolvable:$true] %s3292
          %3298 = dma.vmem_to_hbm [thread:$0]  %s3291, 1024, %s3293, %s3262, 256, 256, 16
        $region60: #{tpu_custom_call.1} parent=43 // pred_fallthru
          _
        // Predicated region
        $region61: #{tpu_custom_call.1} parent=43 // pred_check
          %p3299 = pneg %p226
        $region62: #{tpu_custom_call.1} parent=43 // pred_check_branch
          %3301 = sbr.rel (%p3299) target = $region64
        $region63: #{tpu_custom_call.1} parent=43 // pred_region
          %s3302 = smul.u32 4, %s31
          %3304 = vsyncadd %s3267, 0
          %s3305 = smul.addr %s3302, 2
          %s3306 = smul.addr %s3305, 8
          %s3307 = scalar_lea.hbm %s7, %s3306
          %s3308 = sshll.u32 %s3270, 4
          %s3309 = int_to_ptr.vmem [resolvable:$true] %s3308
          %s3310 = sshll.u32 %s3307, 4
          %s3311 = int_to_ptr.hbm [resolvable:$true] %s3310
          %3316 = dma.vmem_to_hbm [thread:$0]  %s3309, 1024, %s3311, %s3267, 256, 256, 16
        $region64: #{tpu_custom_call.1} parent=43 // pred_fallthru
          _
        // Predicated region
        $region65: #{tpu_custom_call.1} parent=43 // pred_check
          %p3317 = pneg %p252
        $region66: #{tpu_custom_call.1} parent=43 // pred_check_branch
          %3319 = sbr.rel (%p3317) target = $region68
        $region67: #{tpu_custom_call.1} parent=43 // pred_region
          %s3320 = smul.u32 4, %s31
        $region68: #{tpu_custom_call.1} parent=43 // pred_fallthru
          _
        // Predicated region
        $region69: #{tpu_custom_call.1} parent=43 // pred_check
          %p3321 = pneg %p278
        $region70: #{tpu_custom_call.1} parent=43 // pred_check_branch
          %3323 = sbr.rel (%p3321) target = $region72
        $region71: #{tpu_custom_call.1} parent=43 // pred_region
          %s3324 = smul.u32 4, %s31
          %3326 = vsyncadd %s3277, 0
          %s3327 = smul.addr %s3324, 2
          %s3328 = smul.addr %s3327, 8
          %s3329 = scalar_lea.hbm %s9, %s3328
          %s3330 = sshll.u32 %s3280, 4
          %s3331 = int_to_ptr.vmem [resolvable:$true] %s3330
          %s3332 = sshll.u32 %s3329, 4
          %s3333 = int_to_ptr.hbm [resolvable:$true] %s3332
          %3338 = dma.vmem_to_hbm [thread:$0]  %s3331, 1024, %s3333, %s3277, 256, 256, 16
        $region72: #{tpu_custom_call.1} parent=43 // pred_fallthru
          _
      $region44: #{tpu_custom_call.1} parent=5 // pred_fallthru
        _
      %p3339 = scmp.le.s32.totalorder 2, %s26
      // Predicated region
      $region73: #{tpu_custom_call.1} parent=5 // pred_check
        %p3340 = pneg %p3339
      $region74: #{tpu_custom_call.1} parent=5 // pred_check_branch
        %3342 = sbr.rel (%p3340) target = $region76
      $region75: #{tpu_custom_call.1} parent=5 // pred_region
        %s3343 = ssub.s32 %s26, 2
        // Predicated region
        $region77: #{tpu_custom_call.1} parent=75 // pred_check
          %p3344 = pneg %p206
        $region78: #{tpu_custom_call.1} parent=75 // pred_check_branch
          %3346 = sbr.rel (%p3344) target = $region80
        $region79: #{tpu_custom_call.1} parent=75 // pred_region
          %s3347 = sand.u32 %s191, 1
          %s3348 = scalar_lea.sflag [#allocation4], %s3347
          %s3349 = sand.u32 %s191, 1
          %s3350 = smul.addr %s3349, 64
          %s3351 = scalar_lea.vmem [#allocation8], %s3350
          %3353 = dma.done %s3348, 1024
        $region80: #{tpu_custom_call.1} parent=75 // pred_fallthru
          _
        // Predicated region
        $region81: #{tpu_custom_call.1} parent=75 // pred_check
          %p3354 = pneg %p232
        $region82: #{tpu_custom_call.1} parent=75 // pred_check_branch
          %3356 = sbr.rel (%p3354) target = $region84
        $region83: #{tpu_custom_call.1} parent=75 // pred_region
          %s3357 = sand.u32 %s32, 1
          %s3358 = scalar_lea.sflag [#allocation10], %s3357
          %s3359 = sand.u32 %s217, 1
          %s3360 = smul.addr %s3359, 64
          %s3361 = scalar_lea.vmem [#allocation9], %s3360
          %3363 = dma.done %s3358, 1024
        $region84: #{tpu_custom_call.1} parent=75 // pred_fallthru
          _
        // Predicated region
        $region85: #{tpu_custom_call.1} parent=75 // pred_check
          %p3364 = pneg %p258
        $region86: #{tpu_custom_call.1} parent=75 // pred_check_branch
          %3366 = sbr.rel (%p3364) target = $region88
        $region87: #{tpu_custom_call.1} parent=75 // pred_region
          %s3367 = smul.u32 4, %s32
          %p3368 = scmp.lt.s32.totalorder %s3367, 7
          %s3369 = scalar_select %p3368, %s3367, 7
          %s3370 = smul.addr %s3369, 8
          %s3371 = scalar_lea.vmem %s8, %s3370
        $region88: #{tpu_custom_call.1} parent=75 // pred_fallthru
          _
        // Predicated region
        $region89: #{tpu_custom_call.1} parent=75 // pred_check
          %p3372 = pneg %p284
        $region90: #{tpu_custom_call.1} parent=75 // pred_check_branch
          %3374 = sbr.rel (%p3372) target = $region92
        $region91: #{tpu_custom_call.1} parent=75 // pred_region
          %s3375 = sand.u32 %s32, 1
          %s3376 = scalar_lea.sflag [#allocation10], %s3375
          %s3377 = sand.u32 %s269, 1
          %s3378 = smul.addr %s3377, 64
          %s3379 = scalar_lea.vmem [#allocation11], %s3378
          %3381 = dma.done %s3376, 1024
        $region92: #{tpu_custom_call.1} parent=75 // pred_fallthru
          _
      $region76: #{tpu_custom_call.1} parent=5 // pred_fallthru
        _
    $region6: #{tpu_custom_call.1} parent=1 // loop_footer
      %s30 = sadd.s32 1, %s26
    $region7: #{tpu_custom_call.1} parent=1 // loop_footer_branch
      %25 = sbr.rel target = $region3
    $region8: #{tpu_custom_call.1} parent=1 // loop_exit
      _
    %3382 = vsyncpa [#allocation3], 1
    %s3383 = scalar_lea.sflag [#allocation3], 1
    %3384 = vsyncpa %s3383, 1
    %3385 = vsyncpa [#allocation6], 1
    %3386 = vsyncpa [#allocation4], 1
    %s3387 = scalar_lea.sflag [#allocation4], 1
    %3388 = vsyncpa %s3387, 1
    %3389 = vsyncpa [#allocation10], 1
    %s3390 = scalar_lea.sflag [#allocation10], 1
    %3391 = vsyncpa %s3390, 1

</llo_original>
